<compile_context>
chip_gen: v6e
topology: v6e:2x2x1
jax: 0.10.0
libtpu: 0.0.40
codegen_flags: <defaults>
</compile_context>

<pallas_src>
import functools

import numpy as np
import jax
import jax.numpy as jnp
from jax.experimental import pallas as pl
from jax.experimental.pallas import tpu as pltpu  # noqa: F401  (TPU backend)

# ----------------------------- config ---------------------------------------
D = 32          # embed_dim
H_LSTM = 16     # LSTM hidden size
LAYERS = 2      # LSTM layers, bidirectional
FEW = 3
NUM_SN = 3
NUM_Q = 4
NUM_N = 4
N_NEIGH = 8
NUM_SYMBOLS = 20
BATCH = 2
MARGIN = 1.0
BETA = 0.1      # TODO(synk): meta-gradient step (rel - beta * rel.grad) needs torch autograd state; skipped.


# ----------------------------- Pallas kernels --------------------------------
def neighbor_encoder_kernel(rel_ids_ref, ent_ids_ref, self_ids_ref, sym_ref,
                            gcn_wT_ref, gcn_bias_ref, attn_w_ref, attn_bias_ref,
                            gate_w_ref, gate_bias_ref, out_ref, *, n_neigh):
    # rel_ids/ent_ids: (K*N, 1) int32, self_ids: (K, 1) int32, sym: (V, D)
    # K = batch * few * 2 encoder instances packed on the sublane axis (no grid).
    kn = rel_ids_ref.shape[0]
    k = self_ids_ref.shape[0]
    v, d = sym_ref.shape
    sym = sym_ref[...]

    # embedding gathers done in-kernel via one-hot @ table (table resident in VMEM)
    iota_v = jax.lax.broadcasted_iota(jnp.int32, (kn, v), 1)
    rel_e = jnp.dot((rel_ids_ref[...] == iota_v).astype(jnp.float32), sym,
                    preferred_element_type=jnp.float32)           # (K*N, D)
    ent_e = jnp.dot((ent_ids_ref[...] == iota_v).astype(jnp.float32), sym,
                    preferred_element_type=jnp.float32)           # (K*N, D)
    iota_k = jax.lax.broadcasted_iota(jnp.int32, (k, v), 1)
    self_e = jnp.dot((self_ids_ref[...] == iota_k).astype(jnp.float32), sym,
                     preferred_element_type=jnp.float32)          # (K, D)

    # fused gcn linear: gcn_w(concat(rel, ent)) + gcn_w.bias + gcn_b, then leaky_relu(0.01)
    concat_e = jnp.concatenate([rel_e, ent_e], axis=-1)           # (K*N, 2D)
    out = jnp.dot(concat_e, gcn_wT_ref[...], preferred_element_type=jnp.float32)
    out = out + gcn_bias_ref[...]
    out = jnp.where(out >= 0.0, out, 0.01 * out)

    # attention over the N neighbors of each encoder instance (VPU mul + lane reduce,
    # no 1-column MXU matmul); softmax over axis=1 (neighbors)
    out3 = out.reshape(k, n_neigh, d)                             # sublane split, lanes kept
    logits = jnp.sum(out3 * attn_w_ref[...], axis=-1, keepdims=True) + attn_bias_ref[...]
    logits = logits - jnp.max(logits, axis=1, keepdims=True)
    e = jnp.exp(logits)
    attn = e / jnp.sum(e, axis=1, keepdims=True)                  # (K, N, 1)
    out_attn = jnp.sum(out3 * attn, axis=1)                       # (K, D) == bmm(out^T, attn)

    gate = jax.nn.sigmoid(jnp.sum(out_attn * gate_w_ref[...], axis=-1, keepdims=True)
                          + gate_bias_ref[...])                   # (K, 1)
    out_ref[...] = out_attn * gate + self_e * (1.0 - gate)


def relation_learner_kernel(x_ref,
                            wih0f_ref, whh0f_ref, b0f_ref,
                            wih0b_ref, whh0b_ref, b0b_ref,
                            wih1f_ref, whh1f_ref, b1f_ref,
                            wih1b_ref, whh1b_ref, b1b_ref,
                            sel_ref, out_w0T_ref, out_w1T_ref, out_b_ref,
                            pull_w_ref, pull_b_ref,
                            rel_ref, relp_ref, *, seq, batch):
    # x: (seq*batch, 2D) time-major.  Whole BiLSTM (2 layers x 2 dirs x seq steps),
    # LSTM_attn attention, out Linear and RelationPull epilogue in ONE launch.
    h_dim = whh0f_ref.shape[0]

    def run_dir(x_sb, wih_ref, whh_ref, b_ref, reverse):
        # input projection hoisted out of the recurrence: one (S*B, In) @ Wih matmul
        xproj = jnp.dot(x_sb, wih_ref[...], preferred_element_type=jnp.float32) + b_ref[...]
        whh = whh_ref[...]
        h = jnp.zeros((batch, h_dim), jnp.float32)
        c = jnp.zeros((batch, h_dim), jnp.float32)
        hs = [None] * seq
        order = range(seq - 1, -1, -1) if reverse else range(seq)
        for t in order:                                   # statically unrolled (seq=3)
            g = xproj[t * batch:(t + 1) * batch, :] + jnp.dot(
                h, whh, preferred_element_type=jnp.float32)
            i_g = jax.nn.sigmoid(g[:, 0:h_dim])
            f_g = jax.nn.sigmoid(g[:, h_dim:2 * h_dim])
            c_g = jnp.tanh(g[:, 2 * h_dim:3 * h_dim])
            o_g = jax.nn.sigmoid(g[:, 3 * h_dim:4 * h_dim])
            c = f_g * c + i_g * c_g
            h = o_g * jnp.tanh(c)
            hs[t] = h
        return hs, h

    x = x_ref[...]
    hs_f0, hf0 = run_dir(x, wih0f_ref, whh0f_ref, b0f_ref, False)
    hs_b0, hb0 = run_dir(x, wih0b_ref, whh0b_ref, b0b_ref, True)
    l1_in = jnp.concatenate(
        [jnp.concatenate([hs_f0[t], hs_b0[t]], axis=1) for t in range(seq)], axis=0)
    hs_f1, hf1 = run_dir(l1_in, wih1f_ref, whh1f_ref, b1f_ref, False)
    hs_b1, hb1 = run_dir(l1_in, wih1b_ref, whh1b_ref, b1b_ref, True)

    # faithful to torch: hidden = h_n.view(-1, 2H, layers)  (raw row-major view of (2L,B,H)).
    # Row b of hcat = the 64 consecutive floats that view assigns to batch-slot b.
    finals = [hf0, hb0, hf1, hb1]                          # torch h_n order
    flat = jnp.concatenate([f[bb:bb + 1, :] for f in finals for bb in range(batch)],
                           axis=1)                         # (1, 2L*B*H)
    width = 2 * h_dim * LAYERS
    hcat = jnp.concatenate([flat[:, b * width:(b + 1) * width] for b in range(batch)],
                           axis=0)                         # (B, 2H*L)
    # hw[:, j*2H + i] == hidden[:, i, j]  (sel is a constant permutation matrix)
    hw = jnp.dot(hcat, sel_ref[...], preferred_element_type=jnp.float32)

    rel_rows, relp_rows = [], []
    for b in range(batch):
        lo = jnp.concatenate(
            [jnp.concatenate([hs_f1[t][b:b + 1, :], hs_b1[t][b:b + 1, :]], axis=1)
             for t in range(seq)], axis=0)                 # lstm_output[b]: (S, 2H)
        a_cols = []
        for j in range(LAYERS):
            wj = hw[b:b + 1, j * 2 * h_dim:(j + 1) * 2 * h_dim]          # hidden[b,:,j]
            a_cols.append(jnp.sum(lo * wj, axis=-1, keepdims=True))      # (S, 1)
        attn = jnp.concatenate(a_cols, axis=1)                           # (S, L)
        attn = attn - jnp.max(attn, axis=0, keepdims=True)               # softmax over seq
        e = jnp.exp(attn)
        soft = e / jnp.sum(e, axis=0, keepdims=True)
        ctx0 = jnp.sum(lo * soft[:, 0:1], axis=0, keepdims=True)         # context[:, :, 0]^T
        ctx1 = jnp.sum(lo * soft[:, 1:2], axis=0, keepdims=True)         # context[:, :, 1]^T
        o = (jnp.dot(ctx0, out_w0T_ref[...], preferred_element_type=jnp.float32)
             + jnp.dot(ctx1, out_w1T_ref[...], preferred_element_type=jnp.float32)
             + out_b_ref[...])                                            # out Linear: (1, D)
        rel_rows.append(o)
        # RelationPull epilogue: 1x1 depthwise conv, weight fixed to 1.0 -> x*w + b
        relp_rows.append(o * pull_w_ref[...] + pull_b_ref[...])
    rel_ref[...] = jnp.concatenate(rel_rows, axis=0)        # (B, D)  -> rel (used for rel_q)
    relp_ref[...] = jnp.concatenate(relp_rows, axis=0)      # (B, D)  -> rel_ (used for rel_s)


def scoring_kernel(e1_ref, e2_ref, rel_ref, relp_ref, norm_ref, score_ref,
                   *, n_sup, n_que, batch):
    # e1/e2: (B*(n_sup+n_que), D); rel/relp/norm: (B, D); score: (B*(n_sup+n_que), 1)
    # rows per batch: [support pos, support neg] (use pulled rel), [query pos, query neg] (use rel)
    npairs = n_sup + n_que
    d = e1_ref.shape[-1]
    for b in range(batch):
        e1 = e1_ref[pl.ds(b * npairs, npairs), :]
        e2 = e2_ref[pl.ds(b * npairs, npairs), :]
        nrm = norm_ref[pl.ds(b, 1), :]                               # (1, D)
        r = jnp.concatenate(
            [jnp.broadcast_to(relp_ref[pl.ds(b, 1), :], (n_sup, d)),
             jnp.broadcast_to(rel_ref[pl.ds(b, 1), :], (n_que, d))], axis=0)
        h = e1 - jnp.sum(e1 * nrm, axis=-1, keepdims=True) * nrm     # hyperplane projection
        t = e2 - jnp.sum(e2 * nrm, axis=-1, keepdims=True) * nrm
        diff = h + r - t
        score_ref[pl.ds(b * npairs, npairs), :] = -jnp.sqrt(
            jnp.sum(diff * diff, axis=-1, keepdims=True))


# ----------------------------- forward wrapper -------------------------------
def metar_forward(params, task, norm_vector, support_meta):
    support, support_negative, query, negative = task    # already-embedded (as self.embedding would give)
    b_sz, few = support.shape[0], support.shape[1]
    num_sn, num_q, num_n = support_negative.shape[1], query.shape[1], negative.shape[1]
    d = support.shape[-1]

    # --- fused neighbor encoders: all few pairs x {left, right} x batch in one launch ----
    # TODO(synk): nn.Dropout(0.5) on symbol embeddings omitted (eval-mode identity; training RNG not reproduced).
    conns = jnp.stack(
        [jnp.stack([support_meta[i][0], support_meta[i][2]], axis=1) for i in range(few)],
        axis=1)                                           # (B, few, 2, N, 3); degrees unused (as in torch)
    k = b_sz * few * 2
    n_neigh = conns.shape[3]
    conns = conns.reshape(k, n_neigh, 3)                  # row k = (b*few + i)*2 + side
    rel_ids = conns[:, :, 1].reshape(k * n_neigh, 1)
    ent_ids = conns[:, :, 2].reshape(k * n_neigh, 1)
    self_ids = conns[:, 0, 0].reshape(k, 1)

    nb = pl.pallas_call(
        functools.partial(neighbor_encoder_kernel, n_neigh=n_neigh),
        out_shape=jax.ShapeDtypeStruct((k, d), jnp.float32),
    )(rel_ids, ent_ids, self_ids, params["symbol_emb"],
      params["gcn_wT"], params["gcn_bias"], params["attn_w"], params["attn_bias"],
      params["gate_w"], params["gate_bias"])

    # --- fused relation learner: BiLSTM + attention + out linear + pull ------------------
    support_few = nb.reshape(b_sz, few, 2 * d)            # concat(left, right) per support pair
    x_tm = jnp.transpose(support_few, (1, 0, 2)).reshape(few * b_sz, 2 * d)   # time-major
    (w0f, u0f, bb0f), (w0b, u0b, bb0b), (w1f, u1f, bb1f), (w1b, u1b, bb1b) = params["lstm"]
    rel, rel_pulled = pl.pallas_call(
        functools.partial(relation_learner_kernel, seq=few, batch=b_sz),
        out_shape=(jax.ShapeDtypeStruct((b_sz, d), jnp.float32),
                   jax.ShapeDtypeStruct((b_sz, d), jnp.float32)),
    )(x_tm, w0f, u0f, bb0f, w0b, u0b, bb0b, w1f, u1f, bb1f, w1b, u1b, bb1b,
      params["attn_sel"], params["out_w0T"], params["out_w1T"], params["out_b"],
      params["pull_w"], params["pull_b"])
    # TODO(synk): the 10-step inner Adam loop of pull() (handsim dicts, torch autograd, optimizer
    # state) is not a kernel; only the RelationPull forward pass (weight==1) is applied.

    # --- fused scoring: support rows use pulled rel, query rows use rel ------------------
    # TODO(synk): rel_q = rel - beta * rel.grad needs torch autograd state from the support
    # margin loss; ablation path used instead (rel_q = rel, norm_q = norm_vector).
    all_pairs = jnp.concatenate([support, support_negative, query, negative], axis=1)
    npairs = few + num_sn + num_q + num_n
    e1 = all_pairs[:, :, 0, :].reshape(b_sz * npairs, d)
    e2 = all_pairs[:, :, 1, :].reshape(b_sz * npairs, d)
    norm = norm_vector[:, 0, 0, :]                        # (B, D)
    scores = pl.pallas_call(
        functools.partial(scoring_kernel, n_sup=few + num_sn, n_que=num_q + num_n, batch=b_sz),
        out_shape=jax.ShapeDtypeStruct((b_sz * npairs, 1), jnp.float32),
    )(e1, e2, rel, rel_pulled, norm)
    scores = scores.reshape(b_sz, npairs)
    p_score = scores[:, few + num_sn: few + num_sn + num_q]
    n_score = scores[:, few + num_sn + num_q:]
    return p_score, n_score


# ----------------------------- deterministic params --------------------------
def init_params(key):
    ks = iter(jax.random.split(key, 24))
    p = {}
    sym = 0.1 * jax.random.normal(next(ks), (NUM_SYMBOLS + 1, D), jnp.float32)
    p["symbol_emb"] = sym.at[NUM_SYMBOLS].set(0.0)               # padding_idx row
    p["gcn_wT"] = 0.1 * jax.random.normal(next(ks), (2 * D, D), jnp.float32)   # Linear(2D, D).weight.T
    p["gcn_bias"] = 0.01 * jax.random.normal(next(ks), (1, D), jnp.float32)    # linear bias + gcn_b (=0)
    p["attn_w"] = 0.1 * jax.random.normal(next(ks), (1, D), jnp.float32)       # Linear(D, 1).weight
    p["attn_bias"] = 0.01 * jax.random.normal(next(ks), (1, 1), jnp.float32)
    p["gate_w"] = 0.1 * jax.random.normal(next(ks), (1, D), jnp.float32)
    p["gate_bias"] = 0.01 * jax.random.normal(next(ks), (1, 1), jnp.float32)   # linear bias + gate_b
    # bidirectional 2-layer LSTM, order (l0 fwd, l0 bwd, l1 fwd, l1 bwd); weights pre-transposed
    # to (In, 4H) / (H, 4H); b = b_ih + b_hh combined; gate order i, f, g, o as in torch.
    lstm = []
    for layer in range(LAYERS):
        in_dim = 2 * D if layer == 0 else 2 * H_LSTM
        for _direction in range(2):
            wih = 0.1 * jax.random.normal(next(ks), (in_dim, 4 * H_LSTM), jnp.float32)
            whh = 0.1 * jax.random.normal(next(ks), (H_LSTM, 4 * H_LSTM), jnp.float32)
            b = 0.01 * jax.random.normal(next(ks), (1, 4 * H_LSTM), jnp.float32)
            lstm.append((wih, whh, b))
    p["lstm"] = tuple(lstm)
    out_w_T = 0.1 * jax.random.normal(next(ks), (2 * H_LSTM * LAYERS, D), jnp.float32)  # out Linear weight.T
    p["out_w0T"] = out_w_T[0::2, :]     # rows for context[:, :, 0] (flat index 2i+0)
    p["out_w1T"] = out_w_T[1::2, :]     # rows for context[:, :, 1] (flat index 2i+1)
    p["out_b"] = 0.01 * jax.random.normal(next(ks), (1, D), jnp.float32)
    # constant permutation: maps the raw h_n view (flat index i*L + j) onto column j*2H + i
    sel = np.zeros((2 * H_LSTM * LAYERS, 2 * H_LSTM * LAYERS), np.float32)
    for j in range(LAYERS):
        for i in range(2 * H_LSTM):
            sel[i * LAYERS + j, j * 2 * H_LSTM + i] = 1.0
    p["attn_sel"] = jnp.asarray(sel)
    p["pull_w"] = jnp.ones((1, 1), jnp.float32)           # Conv2d(1,1,1x1) weight fixed to ones
    p["pull_b"] = jnp.full((1, 1), 0.05, jnp.float32)     # Conv2d bias (deterministic scalar)
    return p


# ----------------------------- demo ------------------------------------------
if __name__ == "__main__":
    root = jax.random.PRNGKey(0)
    kp, k1, k2, k3, k4, k5, k6 = jax.random.split(root, 7)
    params = init_params(kp)

    support = 0.5 * jax.random.normal(k1, (BATCH, FEW, 2, D), jnp.float32)
    support_negative = 0.5 * jax.random.normal(k2, (BATCH, NUM_SN, 2, D), jnp.float32)
    query = 0.5 * jax.random.normal(k3, (BATCH, NUM_Q, 2, D), jnp.float32)
    negative = 0.5 * jax.random.normal(k4, (BATCH, NUM_N, 2, D), jnp.float32)
    norm_vector = 0.1 * jax.random.normal(k5, (BATCH, 1, 1, D), jnp.float32)

    # support_meta: FEW tuples of (left_conn, left_deg, right_conn, right_deg)
    meta_keys = jax.random.split(k6, FEW * 2)
    support_meta = []
    for i in range(FEW):
        lc = jax.random.randint(meta_keys[2 * i], (BATCH, N_NEIGH, 3), 0, NUM_SYMBOLS, jnp.int32)
        rc = jax.random.randint(meta_keys[2 * i + 1], (BATCH, N_NEIGH, 3), 0, NUM_SYMBOLS, jnp.int32)
        deg = jnp.full((BATCH,), N_NEIGH, jnp.int32)
        support_meta.append((lc, deg, rc, deg))

    task = (support, support_negative, query, negative)
    fwd = jax.jit(metar_forward)
    p_score, n_score = fwd(params, task, norm_vector, support_meta)
    jax.block_until_ready((p_score, n_score))
    assert p_score.shape == (BATCH, NUM_Q) and n_score.shape == (BATCH, NUM_N)
    print("KERNEL_OK")
</pallas_src>

<mosaic_0001>
module attributes {stable_mosaic.version = 11 : i64} {
  func.func @neighbor_encoder_kernel(%arg0: memref<96x1xi32, #tpu.memory_space<vmem>>, %arg1: memref<96x1xi32, #tpu.memory_space<vmem>>, %arg2: memref<12x1xi32, #tpu.memory_space<vmem>>, %arg3: memref<21x32xf32, #tpu.memory_space<vmem>>, %arg4: memref<64x32xf32, #tpu.memory_space<vmem>>, %arg5: memref<1x32xf32, #tpu.memory_space<vmem>>, %arg6: memref<1x32xf32, #tpu.memory_space<vmem>>, %arg7: memref<1x1xf32, #tpu.memory_space<vmem>>, %arg8: memref<1x32xf32, #tpu.memory_space<vmem>>, %arg9: memref<1x1xf32, #tpu.memory_space<vmem>>, %arg10: memref<12x32xf32, #tpu.memory_space<vmem>>) attributes {dimension_semantics = [], scalar_prefetch = 0 : i64, scratch_operands = 0 : i64, tpu.core_type = #tpu.core_type<tc>} {
    %c0 = arith.constant 0 : index
    %c0_0 = arith.constant 0 : index
    %0 = vector.load %arg3[%c0, %c0_0] : memref<21x32xf32, #tpu.memory_space<vmem>>, vector<21x32xf32>
    %1 = tpu.iota {dimensions = array<i32: 1>} : vector<96x21xi32>
    %c0_1 = arith.constant 0 : index
    %c0_2 = arith.constant 0 : index
    %2 = vector.load %arg0[%c0_1, %c0_2] : memref<96x1xi32, #tpu.memory_space<vmem>>, vector<96x1xi32>
    %3 = vector.broadcast %2 : vector<96x1xi32> to vector<96x21xi32>
    %4 = arith.cmpi eq, %3, %1 : vector<96x21xi32>
    %5 = arith.extui %4 : vector<96x21xi1> to vector<96x21xi32>
    %6 = arith.sitofp %5 : vector<96x21xi32> to vector<96x21xf32>
    %cst = arith.constant dense<0.000000e+00> : vector<96x32xf32>
    %7 = tpu.matmul %6, %0, %cst {dimension_numbers = #tpu.dot_dimension_numbers<[1], [0], [0], [1], [0, 0, 1, 1], [], []>} : vector<96x21xf32>, vector<21x32xf32>, vector<96x32xf32> -> vector<96x32xf32>
    %c0_3 = arith.constant 0 : index
    %c0_4 = arith.constant 0 : index
    %8 = vector.load %arg1[%c0_3, %c0_4] : memref<96x1xi32, #tpu.memory_space<vmem>>, vector<96x1xi32>
    %9 = vector.broadcast %8 : vector<96x1xi32> to vector<96x21xi32>
    %10 = arith.cmpi eq, %9, %1 : vector<96x21xi32>
    %11 = arith.extui %10 : vector<96x21xi1> to vector<96x21xi32>
    %12 = arith.sitofp %11 : vector<96x21xi32> to vector<96x21xf32>
    %cst_5 = arith.constant dense<0.000000e+00> : vector<96x32xf32>
    %13 = tpu.matmul %12, %0, %cst_5 {dimension_numbers = #tpu.dot_dimension_numbers<[1], [0], [0], [1], [0, 0, 1, 1], [], []>} : vector<96x21xf32>, vector<21x32xf32>, vector<96x32xf32> -> vector<96x32xf32>
    %14 = tpu.iota {dimensions = array<i32: 1>} : vector<12x21xi32>
    %c0_6 = arith.constant 0 : index
    %c0_7 = arith.constant 0 : index
    %15 = vector.load %arg2[%c0_6, %c0_7] : memref<12x1xi32, #tpu.memory_space<vmem>>, vector<12x1xi32>
    %16 = vector.broadcast %15 : vector<12x1xi32> to vector<12x21xi32>
    %17 = arith.cmpi eq, %16, %14 : vector<12x21xi32>
    %18 = arith.extui %17 : vector<12x21xi1> to vector<12x21xi32>
    %19 = arith.sitofp %18 : vector<12x21xi32> to vector<12x21xf32>
    %cst_8 = arith.constant dense<0.000000e+00> : vector<12x32xf32>
    %20 = tpu.matmul %19, %0, %cst_8 {dimension_numbers = #tpu.dot_dimension_numbers<[1], [0], [0], [1], [0, 0, 1, 1], [], []>} : vector<12x21xf32>, vector<21x32xf32>, vector<12x32xf32> -> vector<12x32xf32>
    %21 = tpu.concatenate %7, %13 in 1 : vector<96x32xf32>, vector<96x32xf32> -> vector<96x64xf32>
    %c0_9 = arith.constant 0 : index
    %c0_10 = arith.constant 0 : index
    %22 = vector.load %arg4[%c0_9, %c0_10] : memref<64x32xf32, #tpu.memory_space<vmem>>, vector<64x32xf32>
    %cst_11 = arith.constant dense<0.000000e+00> : vector<96x32xf32>
    %23 = tpu.matmul %21, %22, %cst_11 {dimension_numbers = #tpu.dot_dimension_numbers<[1], [0], [0], [1], [0, 0, 1, 1], [], []>} : vector<96x64xf32>, vector<64x32xf32>, vector<96x32xf32> -> vector<96x32xf32>
    %c0_12 = arith.constant 0 : index
    %c0_13 = arith.constant 0 : index
    %24 = vector.load %arg5[%c0_12, %c0_13] : memref<1x32xf32, #tpu.memory_space<vmem>>, vector<1x32xf32>
    %25 = vector.broadcast %24 : vector<1x32xf32> to vector<96x32xf32>
    %26 = arith.addf %23, %25 : vector<96x32xf32>
    %cst_14 = arith.constant 0.000000e+00 : f32
    %27 = vector.broadcast %cst_14 : f32 to vector<96x32xf32>
    %28 = arith.cmpf oge, %26, %27 : vector<96x32xf32>
    %cst_15 = arith.constant 0.00999999977 : f32
    %29 = vector.broadcast %cst_15 : f32 to vector<96x32xf32>
    %30 = arith.mulf %29, %26 : vector<96x32xf32>
    %31 = arith.select %28, %26, %30 : vector<96x32xi1>, vector<96x32xf32>
    %32 = vector.shape_cast %31 : vector<96x32xf32> to vector<12x8x32xf32>
    %c0_16 = arith.constant 0 : index
    %c0_17 = arith.constant 0 : index
    %33 = vector.load %arg6[%c0_16, %c0_17] : memref<1x32xf32, #tpu.memory_space<vmem>>, vector<1x32xf32>
    %34 = vector.shape_cast %33 : vector<1x32xf32> to vector<1x1x32xf32>
    %35 = vector.broadcast %34 : vector<1x1x32xf32> to vector<12x8x32xf32>
    %36 = arith.mulf %32, %35 : vector<12x8x32xf32>
    %cst_18 = arith.constant dense<0.000000e+00> : vector<12x8xf32>
    %37 = vector.multi_reduction <add>, %36, %cst_18 [2] : vector<12x8x32xf32> to vector<12x8xf32>
    %38 = vector.shape_cast %37 : vector<12x8xf32> to vector<12x8x1xf32>
    %c0_19 = arith.constant 0 : index
    %c0_20 = arith.constant 0 : index
    %39 = vector.load %arg7[%c0_19, %c0_20] : memref<1x1xf32, #tpu.memory_space<vmem>>, vector<1x1xf32>
    %40 = vector.shape_cast %39 : vector<1x1xf32> to vector<1x1x1xf32>
    %41 = vector.broadcast %40 : vector<1x1x1xf32> to vector<12x8x1xf32>
    %42 = arith.addf %38, %41 : vector<12x8x1xf32>
    %cst_21 = arith.constant dense<0xFF800000> : vector<12x1xf32>
    %43 = vector.multi_reduction <maximumf>, %42, %cst_21 [1] : vector<12x8x1xf32> to vector<12x1xf32>
    %44 = vector.shape_cast %43 : vector<12x1xf32> to vector<12x1x1xf32>
    %45 = vector.broadcast %44 : vector<12x1x1xf32> to vector<12x8x1xf32>
    %46 = arith.subf %42, %45 : vector<12x8x1xf32>
    %47 = math.exp %46 : vector<12x8x1xf32>
    %cst_22 = arith.constant dense<0.000000e+00> : vector<12x1xf32>
    %48 = vector.multi_reduction <add>, %47, %cst_22 [1] : vector<12x8x1xf32> to vector<12x1xf32>
    %49 = vector.shape_cast %48 : vector<12x1xf32> to vector<12x1x1xf32>
    %50 = vector.broadcast %49 : vector<12x1x1xf32> to vector<12x8x1xf32>
    %51 = arith.divf %47, %50 : vector<12x8x1xf32>
    %52 = vector.broadcast %51 : vector<12x8x1xf32> to vector<12x8x32xf32>
    %53 = arith.mulf %32, %52 : vector<12x8x32xf32>
    %cst_23 = arith.constant dense<0.000000e+00> : vector<12x32xf32>
    %54 = vector.multi_reduction <add>, %53, %cst_23 [1] : vector<12x8x32xf32> to vector<12x32xf32>
    %c0_24 = arith.constant 0 : index
    %c0_25 = arith.constant 0 : index
    %55 = vector.load %arg8[%c0_24, %c0_25] : memref<1x32xf32, #tpu.memory_space<vmem>>, vector<1x32xf32>
    %56 = vector.broadcast %55 : vector<1x32xf32> to vector<12x32xf32>
    %57 = arith.mulf %54, %56 : vector<12x32xf32>
    %cst_26 = arith.constant dense<0.000000e+00> : vector<12xf32>
    %58 = vector.multi_reduction <add>, %57, %cst_26 [1] : vector<12x32xf32> to vector<12xf32>
    %59 = vector.shape_cast %58 : vector<12xf32> to vector<12x1xf32>
    %c0_27 = arith.constant 0 : index
    %c0_28 = arith.constant 0 : index
    %60 = vector.load %arg9[%c0_27, %c0_28] : memref<1x1xf32, #tpu.memory_space<vmem>>, vector<1x1xf32>
    %61 = vector.broadcast %60 : vector<1x1xf32> to vector<12x1xf32>
    %62 = arith.addf %59, %61 : vector<12x1xf32>
    %63 = arith.negf %62 : vector<12x1xf32>
    %64 = math.exp %63 : vector<12x1xf32>
    %cst_29 = arith.constant 1.000000e+00 : f32
    %65 = vector.broadcast %cst_29 : f32 to vector<12x1xf32>
    %66 = arith.addf %65, %64 : vector<12x1xf32>
    %67 = arith.divf %65, %66 : vector<12x1xf32>
    %68 = vector.broadcast %67 : vector<12x1xf32> to vector<12x32xf32>
    %69 = arith.mulf %54, %68 : vector<12x32xf32>
    %cst_30 = arith.constant 1.000000e+00 : f32
    %70 = vector.broadcast %cst_30 : f32 to vector<12x1xf32>
    %71 = arith.subf %70, %67 : vector<12x1xf32>
    %72 = vector.broadcast %71 : vector<12x1xf32> to vector<12x32xf32>
    %73 = arith.mulf %20, %72 : vector<12x32xf32>
    %74 = arith.addf %69, %73 : vector<12x32xf32>
    %c0_31 = arith.constant 0 : index
    %c0_32 = arith.constant 0 : index
    %75 = vector.load %arg10[%c0_31, %c0_32] : memref<12x32xf32, #tpu.memory_space<vmem>>, vector<12x32xf32>
    tpu.vector_store %arg10[%c0_31, %c0_32], %74 {strides = array<i32>} : memref<12x32xf32, #tpu.memory_space<vmem>>, vector<12x32xf32>,
    return
  }
}

module attributes {stable_mosaic.version = 11 : i64} {
  func.func @relation_learner_kernel(%arg0: memref<6x64xf32, #tpu.memory_space<vmem>>, %arg1: memref<64x64xf32, #tpu.memory_space<vmem>>, %arg2: memref<16x64xf32, #tpu.memory_space<vmem>>, %arg3: memref<1x64xf32, #tpu.memory_space<vmem>>, %arg4: memref<64x64xf32, #tpu.memory_space<vmem>>, %arg5: memref<16x64xf32, #tpu.memory_space<vmem>>, %arg6: memref<1x64xf32, #tpu.memory_space<vmem>>, %arg7: memref<32x64xf32, #tpu.memory_space<vmem>>, %arg8: memref<16x64xf32, #tpu.memory_space<vmem>>, %arg9: memref<1x64xf32, #tpu.memory_space<vmem>>, %arg10: memref<32x64xf32, #tpu.memory_space<vmem>>, %arg11: memref<16x64xf32, #tpu.memory_space<vmem>>, %arg12: memref<1x64xf32, #tpu.memory_space<vmem>>, %arg13: memref<64x64xf32, #tpu.memory_space<vmem>>, %arg14: memref<32x32xf32, #tpu.memory_space<vmem>>, %arg15: memref<32x32xf32, #tpu.memory_space<vmem>>, %arg16: memref<1x32xf32, #tpu.memory_space<vmem>>, %arg17: memref<1x1xf32, #tpu.memory_space<vmem>>, %arg18: memref<1x1xf32, #tpu.memory_space<vmem>>, %arg19: memref<2x32xf32, #tpu.memory_space<vmem>>, %arg20: memref<2x32xf32, #tpu.memory_space<vmem>>) attributes {dimension_semantics = [], scalar_prefetch = 0 : i64, scratch_operands = 0 : i64, tpu.core_type = #tpu.core_type<tc>} {
    %c0 = arith.constant 0 : index
    %c0_0 = arith.constant 0 : index
    %0 = vector.load %arg0[%c0, %c0_0] : memref<6x64xf32, #tpu.memory_space<vmem>>, vector<6x64xf32>
    %c0_1 = arith.constant 0 : index
    %c0_2 = arith.constant 0 : index
    %1 = vector.load %arg1[%c0_1, %c0_2] : memref<64x64xf32, #tpu.memory_space<vmem>>, vector<64x64xf32>
    %cst = arith.constant dense<0.000000e+00> : vector<6x64xf32>
    %2 = tpu.matmul %0, %1, %cst {dimension_numbers = #tpu.dot_dimension_numbers<[1], [0], [0], [1], [0, 0, 1, 1], [], []>} : vector<6x64xf32>, vector<64x64xf32>, vector<6x64xf32> -> vector<6x64xf32>
    %c0_3 = arith.constant 0 : index
    %c0_4 = arith.constant 0 : index
    %3 = vector.load %arg3[%c0_3, %c0_4] : memref<1x64xf32, #tpu.memory_space<vmem>>, vector<1x64xf32>
    %4 = vector.broadcast %3 : vector<1x64xf32> to vector<6x64xf32>
    %5 = arith.addf %2, %4 : vector<6x64xf32>
    %c0_5 = arith.constant 0 : index
    %c0_6 = arith.constant 0 : index
    %6 = vector.load %arg2[%c0_5, %c0_6] : memref<16x64xf32, #tpu.memory_space<vmem>>, vector<16x64xf32>
    %cst_7 = arith.constant 0.000000e+00 : f32
    %7 = vector.broadcast %cst_7 : f32 to vector<2x16xf32>
    %cst_8 = arith.constant 0.000000e+00 : f32
    %8 = vector.broadcast %cst_8 : f32 to vector<2x16xf32>
    %9 = vector.extract_strided_slice %5 {offsets = [0, 0], sizes = [2, 64], strides = [1, 1]} : vector<6x64xf32> to vector<2x64xf32>
    %cst_9 = arith.constant dense<0.000000e+00> : vector<2x64xf32>
    %10 = tpu.matmul %7, %6, %cst_9 {dimension_numbers = #tpu.dot_dimension_numbers<[1], [0], [0], [1], [0, 0, 1, 1], [], []>} : vector<2x16xf32>, vector<16x64xf32>, vector<2x64xf32> -> vector<2x64xf32>
    %11 = arith.addf %9, %10 : vector<2x64xf32>
    %12 = vector.extract_strided_slice %11 {offsets = [0, 0], sizes = [2, 16], strides = [1, 1]} : vector<2x64xf32> to vector<2x16xf32>
    %13 = arith.negf %12 : vector<2x16xf32>
    %14 = math.exp %13 : vector<2x16xf32>
    %cst_10 = arith.constant 1.000000e+00 : f32
    %15 = vector.broadcast %cst_10 : f32 to vector<2x16xf32>
    %16 = arith.addf %15, %14 : vector<2x16xf32>
    %17 = arith.divf %15, %16 : vector<2x16xf32>
    %18 = vector.extract_strided_slice %11 {offsets = [0, 16], sizes = [2, 16], strides = [1, 1]} : vector<2x64xf32> to vector<2x16xf32>
    %19 = arith.negf %18 : vector<2x16xf32>
    %20 = math.exp %19 : vector<2x16xf32>
    %cst_11 = arith.constant 1.000000e+00 : f32
    %21 = vector.broadcast %cst_11 : f32 to vector<2x16xf32>
    %22 = arith.addf %21, %20 : vector<2x16xf32>
    %23 = arith.divf %21, %22 : vector<2x16xf32>
    %24 = vector.extract_strided_slice %11 {offsets = [0, 32], sizes = [2, 16], strides = [1, 1]} : vector<2x64xf32> to vector<2x16xf32>
    %25 = math.tanh %24 : vector<2x16xf32>
    %26 = vector.extract_strided_slice %11 {offsets = [0, 48], sizes = [2, 16], strides = [1, 1]} : vector<2x64xf32> to vector<2x16xf32>
    %27 = arith.negf %26 : vector<2x16xf32>
    %28 = math.exp %27 : vector<2x16xf32>
    %cst_12 = arith.constant 1.000000e+00 : f32
    %29 = vector.broadcast %cst_12 : f32 to vector<2x16xf32>
    %30 = arith.addf %29, %28 : vector<2x16xf32>
    %31 = arith.divf %29, %30 : vector<2x16xf32>
    %32 = arith.mulf %23, %8 : vector<2x16xf32>
    %33 = arith.mulf %17, %25 : vector<2x16xf32>
    %34 = arith.addf %32, %33 : vector<2x16xf32>
    %35 = math.tanh %34 : vector<2x16xf32>
    %36 = arith.mulf %31, %35 : vector<2x16xf32>
    %37 = vector.extract_strided_slice %5 {offsets = [2, 0], sizes = [2, 64], strides = [1, 1]} : vector<6x64xf32> to vector<2x64xf32>
    %cst_13 = arith.constant dense<0.000000e+00> : vector<2x64xf32>
    %38 = tpu.matmul %36, %6, %cst_13 {dimension_numbers = #tpu.dot_dimension_numbers<[1], [0], [0], [1], [0, 0, 1, 1], [], []>} : vector<2x16xf32>, vector<16x64xf32>, vector<2x64xf32> -> vector<2x64xf32>
    %39 = arith.addf %37, %38 : vector<2x64xf32>
    %40 = vector.extract_strided_slice %39 {offsets = [0, 0], sizes = [2, 16], strides = [1, 1]} : vector<2x64xf32> to vector<2x16xf32>
    %41 = arith.negf %40 : vector<2x16xf32>
    %42 = math.exp %41 : vector<2x16xf32>
    %cst_14 = arith.constant 1.000000e+00 : f32
    %43 = vector.broadcast %cst_14 : f32 to vector<2x16xf32>
    %44 = arith.addf %43, %42 : vector<2x16xf32>
    %45 = arith.divf %43, %44 : vector<2x16xf32>
    %46 = vector.extract_strided_slice %39 {offsets = [0, 16], sizes = [2, 16], strides = [1, 1]} : vector<2x64xf32> to vector<2x16xf32>
    %47 = arith.negf %46 : vector<2x16xf32>
    %48 = math.exp %47 : vector<2x16xf32>
    %cst_15 = arith.constant 1.000000e+00 : f32
    %49 = vector.broadcast %cst_15 : f32 to vector<2x16xf32>
    %50 = arith.addf %49, %48 : vector<2x16xf32>
    %51 = arith.divf %49, %50 : vector<2x16xf32>
    %52 = vector.extract_strided_slice %39 {offsets = [0, 32], sizes = [2, 16], strides = [1, 1]} : vector<2x64xf32> to vector<2x16xf32>
    %53 = math.tanh %52 : vector<2x16xf32>
    %54 = vector.extract_strided_slice %39 {offsets = [0, 48], sizes = [2, 16], strides = [1, 1]} : vector<2x64xf32> to vector<2x16xf32>
    %55 = arith.negf %54 : vector<2x16xf32>
    %56 = math.exp %55 : vector<2x16xf32>
    %cst_16 = arith.constant 1.000000e+00 : f32
    %57 = vector.broadcast %cst_16 : f32 to vector<2x16xf32>
    %58 = arith.addf %57, %56 : vector<2x16xf32>
    %59 = arith.divf %57, %58 : vector<2x16xf32>
    %60 = arith.mulf %51, %34 : vector<2x16xf32>
    %61 = arith.mulf %45, %53 : vector<2x16xf32>
    %62 = arith.addf %60, %61 : vector<2x16xf32>
    %63 = math.tanh %62 : vector<2x16xf32>
    %64 = arith.mulf %59, %63 : vector<2x16xf32>
    %65 = vector.extract_strided_slice %5 {offsets = [4, 0], sizes = [2, 64], strides = [1, 1]} : vector<6x64xf32> to vector<2x64xf32>
    %cst_17 = arith.constant dense<0.000000e+00> : vector<2x64xf32>
    %66 = tpu.matmul %64, %6, %cst_17 {dimension_numbers = #tpu.dot_dimension_numbers<[1], [0], [0], [1], [0, 0, 1, 1], [], []>} : vector<2x16xf32>, vector<16x64xf32>, vector<2x64xf32> -> vector<2x64xf32>
    %67 = arith.addf %65, %66 : vector<2x64xf32>
    %68 = vector.extract_strided_slice %67 {offsets = [0, 0], sizes = [2, 16], strides = [1, 1]} : vector<2x64xf32> to vector<2x16xf32>
    %69 = arith.negf %68 : vector<2x16xf32>
    %70 = math.exp %69 : vector<2x16xf32>
    %cst_18 = arith.constant 1.000000e+00 : f32
    %71 = vector.broadcast %cst_18 : f32 to vector<2x16xf32>
    %72 = arith.addf %71, %70 : vector<2x16xf32>
    %73 = arith.divf %71, %72 : vector<2x16xf32>
    %74 = vector.extract_strided_slice %67 {offsets = [0, 16], sizes = [2, 16], strides = [1, 1]} : vector<2x64xf32> to vector<2x16xf32>
    %75 = arith.negf %74 : vector<2x16xf32>
    %76 = math.exp %75 : vector<2x16xf32>
    %cst_19 = arith.constant 1.000000e+00 : f32
    %77 = vector.broadcast %cst_19 : f32 to vector<2x16xf32>
    %78 = arith.addf %77, %76 : vector<2x16xf32>
    %79 = arith.divf %77, %78 : vector<2x16xf32>
    %80 = vector.extract_strided_slice %67 {offsets = [0, 32], sizes = [2, 16], strides = [1, 1]} : vector<2x64xf32> to vector<2x16xf32>
    %81 = math.tanh %80 : vector<2x16xf32>
    %82 = vector.extract_strided_slice %67 {offsets = [0, 48], sizes = [2, 16], strides = [1, 1]} : vector<2x64xf32> to vector<2x16xf32>
    %83 = arith.negf %82 : vector<2x16xf32>
    %84 = math.exp %83 : vector<2x16xf32>
    %cst_20 = arith.constant 1.000000e+00 : f32
    %85 = vector.broadcast %cst_20 : f32 to vector<2x16xf32>
    %86 = arith.addf %85, %84 : vector<2x16xf32>
    %87 = arith.divf %85, %86 : vector<2x16xf32>
    %88 = arith.mulf %79, %62 : vector<2x16xf32>
    %89 = arith.mulf %73, %81 : vector<2x16xf32>
    %90 = arith.addf %88, %89 : vector<2x16xf32>
    %91 = math.tanh %90 : vector<2x16xf32>
    %92 = arith.mulf %87, %91 : vector<2x16xf32>
    %c0_21 = arith.constant 0 : index
    %c0_22 = arith.constant 0 : index
    %93 = vector.load %arg4[%c0_21, %c0_22] : memref<64x64xf32, #tpu.memory_space<vmem>>, vector<64x64xf32>
    %cst_23 = arith.constant dense<0.000000e+00> : vector<6x64xf32>
    %94 = tpu.matmul %0, %93, %cst_23 {dimension_numbers = #tpu.dot_dimension_numbers<[1], [0], [0], [1], [0, 0, 1, 1], [], []>} : vector<6x64xf32>, vector<64x64xf32>, vector<6x64xf32> -> vector<6x64xf32>
    %c0_24 = arith.constant 0 : index
    %c0_25 = arith.constant 0 : index
    %95 = vector.load %arg6[%c0_24, %c0_25] : memref<1x64xf32, #tpu.memory_space<vmem>>, vector<1x64xf32>
    %96 = vector.broadcast %95 : vector<1x64xf32> to vector<6x64xf32>
    %97 = arith.addf %94, %96 : vector<6x64xf32>
    %c0_26 = arith.constant 0 : index
    %c0_27 = arith.constant 0 : index
    %98 = vector.load %arg5[%c0_26, %c0_27] : memref<16x64xf32, #tpu.memory_space<vmem>>, vector<16x64xf32>
    %cst_28 = arith.constant 0.000000e+00 : f32
    %99 = vector.broadcast %cst_28 : f32 to vector<2x16xf32>
    %cst_29 = arith.constant 0.000000e+00 : f32
    %100 = vector.broadcast %cst_29 : f32 to vector<2x16xf32>
    %101 = vector.extract_strided_slice %97 {offsets = [4, 0], sizes = [2, 64], strides = [1, 1]} : vector<6x64xf32> to vector<2x64xf32>
    %cst_30 = arith.constant dense<0.000000e+00> : vector<2x64xf32>
    %102 = tpu.matmul %99, %98, %cst_30 {dimension_numbers = #tpu.dot_dimension_numbers<[1], [0], [0], [1], [0, 0, 1, 1], [], []>} : vector<2x16xf32>, vector<16x64xf32>, vector<2x64xf32> -> vector<2x64xf32>
    %103 = arith.addf %101, %102 : vector<2x64xf32>
    %104 = vector.extract_strided_slice %103 {offsets = [0, 0], sizes = [2, 16], strides = [1, 1]} : vector<2x64xf32> to vector<2x16xf32>
    %105 = arith.negf %104 : vector<2x16xf32>
    %106 = math.exp %105 : vector<2x16xf32>
    %cst_31 = arith.constant 1.000000e+00 : f32
    %107 = vector.broadcast %cst_31 : f32 to vector<2x16xf32>
    %108 = arith.addf %107, %106 : vector<2x16xf32>
    %109 = arith.divf %107, %108 : vector<2x16xf32>
    %110 = vector.extract_strided_slice %103 {offsets = [0, 16], sizes = [2, 16], strides = [1, 1]} : vector<2x64xf32> to vector<2x16xf32>
    %111 = arith.negf %110 : vector<2x16xf32>
    %112 = math.exp %111 : vector<2x16xf32>
    %cst_32 = arith.constant 1.000000e+00 : f32
    %113 = vector.broadcast %cst_32 : f32 to vector<2x16xf32>
    %114 = arith.addf %113, %112 : vector<2x16xf32>
    %115 = arith.divf %113, %114 : vector<2x16xf32>
    %116 = vector.extract_strided_slice %103 {offsets = [0, 32], sizes = [2, 16], strides = [1, 1]} : vector<2x64xf32> to vector<2x16xf32>
    %117 = math.tanh %116 : vector<2x16xf32>
    %118 = vector.extract_strided_slice %103 {offsets = [0, 48], sizes = [2, 16], strides = [1, 1]} : vector<2x64xf32> to vector<2x16xf32>
    %119 = arith.negf %118 : vector<2x16xf32>
    %120 = math.exp %119 : vector<2x16xf32>
    %cst_33 = arith.constant 1.000000e+00 : f32
    %121 = vector.broadcast %cst_33 : f32 to vector<2x16xf32>
    %122 = arith.addf %121, %120 : vector<2x16xf32>
    %123 = arith.divf %121, %122 : vector<2x16xf32>
    %124 = arith.mulf %115, %100 : vector<2x16xf32>
    %125 = arith.mulf %109, %117 : vector<2x16xf32>
    %126 = arith.addf %124, %125 : vector<2x16xf32>
    %127 = math.tanh %126 : vector<2x16xf32>
    %128 = arith.mulf %123, %127 : vector<2x16xf32>
    %129 = vector.extract_strided_slice %97 {offsets = [2, 0], sizes = [2, 64], strides = [1, 1]} : vector<6x64xf32> to vector<2x64xf32>
    %cst_34 = arith.constant dense<0.000000e+00> : vector<2x64xf32>
    %130 = tpu.matmul %128, %98, %cst_34 {dimension_numbers = #tpu.dot_dimension_numbers<[1], [0], [0], [1], [0, 0, 1, 1], [], []>} : vector<2x16xf32>, vector<16x64xf32>, vector<2x64xf32> -> vector<2x64xf32>
    %131 = arith.addf %129, %130 : vector<2x64xf32>
    %132 = vector.extract_strided_slice %131 {offsets = [0, 0], sizes = [2, 16], strides = [1, 1]} : vector<2x64xf32> to vector<2x16xf32>
    %133 = arith.negf %132 : vector<2x16xf32>
    %134 = math.exp %133 : vector<2x16xf32>
    %cst_35 = arith.constant 1.000000e+00 : f32
    %135 = vector.broadcast %cst_35 : f32 to vector<2x16xf32>
    %136 = arith.addf %135, %134 : vector<2x16xf32>
    %137 = arith.divf %135, %136 : vector<2x16xf32>
    %138 = vector.extract_strided_slice %131 {offsets = [0, 16], sizes = [2, 16], strides = [1, 1]} : vector<2x64xf32> to vector<2x16xf32>
    %139 = arith.negf %138 : vector<2x16xf32>
    %140 = math.exp %139 : vector<2x16xf32>
    %cst_36 = arith.constant 1.000000e+00 : f32
    %141 = vector.broadcast %cst_36 : f32 to vector<2x16xf32>
    %142 = arith.addf %141, %140 : vector<2x16xf32>
    %143 = arith.divf %141, %142 : vector<2x16xf32>
    %144 = vector.extract_strided_slice %131 {offsets = [0, 32], sizes = [2, 16], strides = [1, 1]} : vector<2x64xf32> to vector<2x16xf32>
    %145 = math.tanh %144 : vector<2x16xf32>
    %146 = vector.extract_strided_slice %131 {offsets = [0, 48], sizes = [2, 16], strides = [1, 1]} : vector<2x64xf32> to vector<2x16xf32>
    %147 = arith.negf %146 : vector<2x16xf32>
    %148 = math.exp %147 : vector<2x16xf32>
    %cst_37 = arith.constant 1.000000e+00 : f32
    %149 = vector.broadcast %cst_37 : f32 to vector<2x16xf32>
    %150 = arith.addf %149, %148 : vector<2x16xf32>
    %151 = arith.divf %149, %150 : vector<2x16xf32>
    %152 = arith.mulf %143, %126 : vector<2x16xf32>
    %153 = arith.mulf %137, %145 : vector<2x16xf32>
    %154 = arith.addf %152, %153 : vector<2x16xf32>
    %155 = math.tanh %154 : vector<2x16xf32>
    %156 = arith.mulf %151, %155 : vector<2x16xf32>
    %157 = vector.extract_strided_slice %97 {offsets = [0, 0], sizes = [2, 64], strides = [1, 1]} : vector<6x64xf32> to vector<2x64xf32>
    %cst_38 = arith.constant dense<0.000000e+00> : vector<2x64xf32>
    %158 = tpu.matmul %156, %98, %cst_38 {dimension_numbers = #tpu.dot_dimension_numbers<[1], [0], [0], [1], [0, 0, 1, 1], [], []>} : vector<2x16xf32>, vector<16x64xf32>, vector<2x64xf32> -> vector<2x64xf32>
    %159 = arith.addf %157, %158 : vector<2x64xf32>
    %160 = vector.extract_strided_slice %159 {offsets = [0, 0], sizes = [2, 16], strides = [1, 1]} : vector<2x64xf32> to vector<2x16xf32>
    %161 = arith.negf %160 : vector<2x16xf32>
    %162 = math.exp %161 : vector<2x16xf32>
    %cst_39 = arith.constant 1.000000e+00 : f32
    %163 = vector.broadcast %cst_39 : f32 to vector<2x16xf32>
    %164 = arith.addf %163, %162 : vector<2x16xf32>
    %165 = arith.divf %163, %164 : vector<2x16xf32>
    %166 = vector.extract_strided_slice %159 {offsets = [0, 16], sizes = [2, 16], strides = [1, 1]} : vector<2x64xf32> to vector<2x16xf32>
    %167 = arith.negf %166 : vector<2x16xf32>
    %168 = math.exp %167 : vector<2x16xf32>
    %cst_40 = arith.constant 1.000000e+00 : f32
    %169 = vector.broadcast %cst_40 : f32 to vector<2x16xf32>
    %170 = arith.addf %169, %168 : vector<2x16xf32>
    %171 = arith.divf %169, %170 : vector<2x16xf32>
    %172 = vector.extract_strided_slice %159 {offsets = [0, 32], sizes = [2, 16], strides = [1, 1]} : vector<2x64xf32> to vector<2x16xf32>
    %173 = math.tanh %172 : vector<2x16xf32>
    %174 = vector.extract_strided_slice %159 {offsets = [0, 48], sizes = [2, 16], strides = [1, 1]} : vector<2x64xf32> to vector<2x16xf32>
    %175 = arith.negf %174 : vector<2x16xf32>
    %176 = math.exp %175 : vector<2x16xf32>
    %cst_41 = arith.constant 1.000000e+00 : f32
    %177 = vector.broadcast %cst_41 : f32 to vector<2x16xf32>
    %178 = arith.addf %177, %176 : vector<2x16xf32>
    %179 = arith.divf %177, %178 : vector<2x16xf32>
    %180 = arith.mulf %171, %154 : vector<2x16xf32>
    %181 = arith.mulf %165, %173 : vector<2x16xf32>
    %182 = arith.addf %180, %181 : vector<2x16xf32>
    %183 = math.tanh %182 : vector<2x16xf32>
    %184 = arith.mulf %179, %183 : vector<2x16xf32>
    %185 = tpu.concatenate %36, %184 in 1 : vector<2x16xf32>, vector<2x16xf32> -> vector<2x32xf32>
    %186 = tpu.concatenate %64, %156 in 1 : vector<2x16xf32>, vector<2x16xf32> -> vector<2x32xf32>
    %187 = tpu.concatenate %92, %128 in 1 : vector<2x16xf32>, vector<2x16xf32> -> vector<2x32xf32>
    %188 = tpu.concatenate %185, %186, %187 in 0 : vector<2x32xf32>, vector<2x32xf32>, vector<2x32xf32> -> vector<6x32xf32>
    %c0_42 = arith.constant 0 : index
    %c0_43 = arith.constant 0 : index
    %189 = vector.load %arg7[%c0_42, %c0_43] : memref<32x64xf32, #tpu.memory_space<vmem>>, vector<32x64xf32>
    %cst_44 = arith.constant dense<0.000000e+00> : vector<6x64xf32>
    %190 = tpu.matmul %188, %189, %cst_44 {dimension_numbers = #tpu.dot_dimension_numbers<[1], [0], [0], [1], [0, 0, 1, 1], [], []>} : vector<6x32xf32>, vector<32x64xf32>, vector<6x64xf32> -> vector<6x64xf32>
    %c0_45 = arith.constant 0 : index
    %c0_46 = arith.constant 0 : index
    %191 = vector.load %arg9[%c0_45, %c0_46] : memref<1x64xf32, #tpu.memory_space<vmem>>, vector<1x64xf32>
    %192 = vector.broadcast %191 : vector<1x64xf32> to vector<6x64xf32>
    %193 = arith.addf %190, %192 : vector<6x64xf32>
    %c0_47 = arith.constant 0 : index
    %c0_48 = arith.constant 0 : index
    %194 = vector.load %arg8[%c0_47, %c0_48] : memref<16x64xf32, #tpu.memory_space<vmem>>, vector<16x64xf32>
    %cst_49 = arith.constant 0.000000e+00 : f32
    %195 = vector.broadcast %cst_49 : f32 to vector<2x16xf32>
    %cst_50 = arith.constant 0.000000e+00 : f32
    %196 = vector.broadcast %cst_50 : f32 to vector<2x16xf32>
    %197 = vector.extract_strided_slice %193 {offsets = [0, 0], sizes = [2, 64], strides = [1, 1]} : vector<6x64xf32> to vector<2x64xf32>
    %cst_51 = arith.constant dense<0.000000e+00> : vector<2x64xf32>
    %198 = tpu.matmul %195, %194, %cst_51 {dimension_numbers = #tpu.dot_dimension_numbers<[1], [0], [0], [1], [0, 0, 1, 1], [], []>} : vector<2x16xf32>, vector<16x64xf32>, vector<2x64xf32> -> vector<2x64xf32>
    %199 = arith.addf %197, %198 : vector<2x64xf32>
    %200 = vector.extract_strided_slice %199 {offsets = [0, 0], sizes = [2, 16], strides = [1, 1]} : vector<2x64xf32> to vector<2x16xf32>
    %201 = arith.negf %200 : vector<2x16xf32>
    %202 = math.exp %201 : vector<2x16xf32>
    %cst_52 = arith.constant 1.000000e+00 : f32
    %203 = vector.broadcast %cst_52 : f32 to vector<2x16xf32>
    %204 = arith.addf %203, %202 : vector<2x16xf32>
    %205 = arith.divf %203, %204 : vector<2x16xf32>
    %206 = vector.extract_strided_slice %199 {offsets = [0, 16], sizes = [2, 16], strides = [1, 1]} : vector<2x64xf32> to vector<2x16xf32>
    %207 = arith.negf %206 : vector<2x16xf32>
    %208 = math.exp %207 : vector<2x16xf32>
    %cst_53 = arith.constant 1.000000e+00 : f32
    %209 = vector.broadcast %cst_53 : f32 to vector<2x16xf32>
    %210 = arith.addf %209, %208 : vector<2x16xf32>
    %211 = arith.divf %209, %210 : vector<2x16xf32>
    %212 = vector.extract_strided_slice %199 {offsets = [0, 32], sizes = [2, 16], strides = [1, 1]} : vector<2x64xf32> to vector<2x16xf32>
    %213 = math.tanh %212 : vector<2x16xf32>
    %214 = vector.extract_strided_slice %199 {offsets = [0, 48], sizes = [2, 16], strides = [1, 1]} : vector<2x64xf32> to vector<2x16xf32>
    %215 = arith.negf %214 : vector<2x16xf32>
    %216 = math.exp %215 : vector<2x16xf32>
    %cst_54 = arith.constant 1.000000e+00 : f32
    %217 = vector.broadcast %cst_54 : f32 to vector<2x16xf32>
    %218 = arith.addf %217, %216 : vector<2x16xf32>
    %219 = arith.divf %217, %218 : vector<2x16xf32>
    %220 = arith.mulf %211, %196 : vector<2x16xf32>
    %221 = arith.mulf %205, %213 : vector<2x16xf32>
    %222 = arith.addf %220, %221 : vector<2x16xf32>
    %223 = math.tanh %222 : vector<2x16xf32>
    %224 = arith.mulf %219, %223 : vector<2x16xf32>
    %225 = vector.extract_strided_slice %193 {offsets = [2, 0], sizes = [2, 64], strides = [1, 1]} : vector<6x64xf32> to vector<2x64xf32>
    %cst_55 = arith.constant dense<0.000000e+00> : vector<2x64xf32>
    %226 = tpu.matmul %224, %194, %cst_55 {dimension_numbers = #tpu.dot_dimension_numbers<[1], [0], [0], [1], [0, 0, 1, 1], [], []>} : vector<2x16xf32>, vector<16x64xf32>, vector<2x64xf32> -> vector<2x64xf32>
    %227 = arith.addf %225, %226 : vector<2x64xf32>
    %228 = vector.extract_strided_slice %227 {offsets = [0, 0], sizes = [2, 16], strides = [1, 1]} : vector<2x64xf32> to vector<2x16xf32>
    %229 = arith.negf %228 : vector<2x16xf32>
    %230 = math.exp %229 : vector<2x16xf32>
    %cst_56 = arith.constant 1.000000e+00 : f32
    %231 = vector.broadcast %cst_56 : f32 to vector<2x16xf32>
    %232 = arith.addf %231, %230 : vector<2x16xf32>
    %233 = arith.divf %231, %232 : vector<2x16xf32>
    %234 = vector.extract_strided_slice %227 {offsets = [0, 16], sizes = [2, 16], strides = [1, 1]} : vector<2x64xf32> to vector<2x16xf32>
    %235 = arith.negf %234 : vector<2x16xf32>
    %236 = math.exp %235 : vector<2x16xf32>
    %cst_57 = arith.constant 1.000000e+00 : f32
    %237 = vector.broadcast %cst_57 : f32 to vector<2x16xf32>
    %238 = arith.addf %237, %236 : vector<2x16xf32>
    %239 = arith.divf %237, %238 : vector<2x16xf32>
    %240 = vector.extract_strided_slice %227 {offsets = [0, 32], sizes = [2, 16], strides = [1, 1]} : vector<2x64xf32> to vector<2x16xf32>
    %241 = math.tanh %240 : vector<2x16xf32>
    %242 = vector.extract_strided_slice %227 {offsets = [0, 48], sizes = [2, 16], strides = [1, 1]} : vector<2x64xf32> to vector<2x16xf32>
    %243 = arith.negf %242 : vector<2x16xf32>
    %244 = math.exp %243 : vector<2x16xf32>
    %cst_58 = arith.constant 1.000000e+00 : f32
    %245 = vector.broadcast %cst_58 : f32 to vector<2x16xf32>
    %246 = arith.addf %245, %244 : vector<2x16xf32>
    %247 = arith.divf %245, %246 : vector<2x16xf32>
    %248 = arith.mulf %239, %222 : vector<2x16xf32>
    %249 = arith.mulf %233, %241 : vector<2x16xf32>
    %250 = arith.addf %248, %249 : vector<2x16xf32>
    %251 = math.tanh %250 : vector<2x16xf32>
    %252 = arith.mulf %247, %251 : vector<2x16xf32>
    %253 = vector.extract_strided_slice %193 {offsets = [4, 0], sizes = [2, 64], strides = [1, 1]} : vector<6x64xf32> to vector<2x64xf32>
    %cst_59 = arith.constant dense<0.000000e+00> : vector<2x64xf32>
    %254 = tpu.matmul %252, %194, %cst_59 {dimension_numbers = #tpu.dot_dimension_numbers<[1], [0], [0], [1], [0, 0, 1, 1], [], []>} : vector<2x16xf32>, vector<16x64xf32>, vector<2x64xf32> -> vector<2x64xf32>
    %255 = arith.addf %253, %254 : vector<2x64xf32>
    %256 = vector.extract_strided_slice %255 {offsets = [0, 0], sizes = [2, 16], strides = [1, 1]} : vector<2x64xf32> to vector<2x16xf32>
    %257 = arith.negf %256 : vector<2x16xf32>
    %258 = math.exp %257 : vector<2x16xf32>
    %cst_60 = arith.constant 1.000000e+00 : f32
    %259 = vector.broadcast %cst_60 : f32 to vector<2x16xf32>
    %260 = arith.addf %259, %258 : vector<2x16xf32>
    %261 = arith.divf %259, %260 : vector<2x16xf32>
    %262 = vector.extract_strided_slice %255 {offsets = [0, 16], sizes = [2, 16], strides = [1, 1]} : vector<2x64xf32> to vector<2x16xf32>
    %263 = arith.negf %262 : vector<2x16xf32>
    %264 = math.exp %263 : vector<2x16xf32>
    %cst_61 = arith.constant 1.000000e+00 : f32
    %265 = vector.broadcast %cst_61 : f32 to vector<2x16xf32>
    %266 = arith.addf %265, %264 : vector<2x16xf32>
    %267 = arith.divf %265, %266 : vector<2x16xf32>
    %268 = vector.extract_strided_slice %255 {offsets = [0, 32], sizes = [2, 16], strides = [1, 1]} : vector<2x64xf32> to vector<2x16xf32>
    %269 = math.tanh %268 : vector<2x16xf32>
    %270 = vector.extract_strided_slice %255 {offsets = [0, 48], sizes = [2, 16], strides = [1, 1]} : vector<2x64xf32> to vector<2x16xf32>
    %271 = arith.negf %270 : vector<2x16xf32>
    %272 = math.exp %271 : vector<2x16xf32>
    %cst_62 = arith.constant 1.000000e+00 : f32
    %273 = vector.broadcast %cst_62 : f32 to vector<2x16xf32>
    %274 = arith.addf %273, %272 : vector<2x16xf32>
    %275 = arith.divf %273, %274 : vector<2x16xf32>
    %276 = arith.mulf %267, %250 : vector<2x16xf32>
    %277 = arith.mulf %261, %269 : vector<2x16xf32>
    %278 = arith.addf %276, %277 : vector<2x16xf32>
    %279 = math.tanh %278 : vector<2x16xf32>
    %280 = arith.mulf %275, %279 : vector<2x16xf32>
    %c0_63 = arith.constant 0 : index
    %c0_64 = arith.constant 0 : index
    %281 = vector.load %arg10[%c0_63, %c0_64] : memref<32x64xf32, #tpu.memory_space<vmem>>, vector<32x64xf32>
    %cst_65 = arith.constant dense<0.000000e+00> : vector<6x64xf32>
    %282 = tpu.matmul %188, %281, %cst_65 {dimension_numbers = #tpu.dot_dimension_numbers<[1], [0], [0], [1], [0, 0, 1, 1], [], []>} : vector<6x32xf32>, vector<32x64xf32>, vector<6x64xf32> -> vector<6x64xf32>
    %c0_66 = arith.constant 0 : index
    %c0_67 = arith.constant 0 : index
    %283 = vector.load %arg12[%c0_66, %c0_67] : memref<1x64xf32, #tpu.memory_space<vmem>>, vector<1x64xf32>
    %284 = vector.broadcast %283 : vector<1x64xf32> to vector<6x64xf32>
    %285 = arith.addf %282, %284 : vector<6x64xf32>
    %c0_68 = arith.constant 0 : index
    %c0_69 = arith.constant 0 : index
    %286 = vector.load %arg11[%c0_68, %c0_69] : memref<16x64xf32, #tpu.memory_space<vmem>>, vector<16x64xf32>
    %cst_70 = arith.constant 0.000000e+00 : f32
    %287 = vector.broadcast %cst_70 : f32 to vector<2x16xf32>
    %cst_71 = arith.constant 0.000000e+00 : f32
    %288 = vector.broadcast %cst_71 : f32 to vector<2x16xf32>
    %289 = vector.extract_strided_slice %285 {offsets = [4, 0], sizes = [2, 64], strides = [1, 1]} : vector<6x64xf32> to vector<2x64xf32>
    %cst_72 = arith.constant dense<0.000000e+00> : vector<2x64xf32>
    %290 = tpu.matmul %287, %286, %cst_72 {dimension_numbers = #tpu.dot_dimension_numbers<[1], [0], [0], [1], [0, 0, 1, 1], [], []>} : vector<2x16xf32>, vector<16x64xf32>, vector<2x64xf32> -> vector<2x64xf32>
    %291 = arith.addf %289, %290 : vector<2x64xf32>
    %292 = vector.extract_strided_slice %291 {offsets = [0, 0], sizes = [2, 16], strides = [1, 1]} : vector<2x64xf32> to vector<2x16xf32>
    %293 = arith.negf %292 : vector<2x16xf32>
    %294 = math.exp %293 : vector<2x16xf32>
    %cst_73 = arith.constant 1.000000e+00 : f32
    %295 = vector.broadcast %cst_73 : f32 to vector<2x16xf32>
    %296 = arith.addf %295, %294 : vector<2x16xf32>
    %297 = arith.divf %295, %296 : vector<2x16xf32>
    %298 = vector.extract_strided_slice %291 {offsets = [0, 16], sizes = [2, 16], strides = [1, 1]} : vector<2x64xf32> to vector<2x16xf32>
    %299 = arith.negf %298 : vector<2x16xf32>
    %300 = math.exp %299 : vector<2x16xf32>
    %cst_74 = arith.constant 1.000000e+00 : f32
    %301 = vector.broadcast %cst_74 : f32 to vector<2x16xf32>
    %302 = arith.addf %301, %300 : vector<2x16xf32>
    %303 = arith.divf %301, %302 : vector<2x16xf32>
    %304 = vector.extract_strided_slice %291 {offsets = [0, 32], sizes = [2, 16], strides = [1, 1]} : vector<2x64xf32> to vector<2x16xf32>
    %305 = math.tanh %304 : vector<2x16xf32>
    %306 = vector.extract_strided_slice %291 {offsets = [0, 48], sizes = [2, 16], strides = [1, 1]} : vector<2x64xf32> to vector<2x16xf32>
    %307 = arith.negf %306 : vector<2x16xf32>
    %308 = math.exp %307 : vector<2x16xf32>
    %cst_75 = arith.constant 1.000000e+00 : f32
    %309 = vector.broadcast %cst_75 : f32 to vector<2x16xf32>
    %310 = arith.addf %309, %308 : vector<2x16xf32>
    %311 = arith.divf %309, %310 : vector<2x16xf32>
    %312 = arith.mulf %303, %288 : vector<2x16xf32>
    %313 = arith.mulf %297, %305 : vector<2x16xf32>
    %314 = arith.addf %312, %313 : vector<2x16xf32>
    %315 = math.tanh %314 : vector<2x16xf32>
    %316 = arith.mulf %311, %315 : vector<2x16xf32>
    %317 = vector.extract_strided_slice %285 {offsets = [2, 0], sizes = [2, 64], strides = [1, 1]} : vector<6x64xf32> to vector<2x64xf32>
    %cst_76 = arith.constant dense<0.000000e+00> : vector<2x64xf32>
    %318 = tpu.matmul %316, %286, %cst_76 {dimension_numbers = #tpu.dot_dimension_numbers<[1], [0], [0], [1], [0, 0, 1, 1], [], []>} : vector<2x16xf32>, vector<16x64xf32>, vector<2x64xf32> -> vector<2x64xf32>
    %319 = arith.addf %317, %318 : vector<2x64xf32>
    %320 = vector.extract_strided_slice %319 {offsets = [0, 0], sizes = [2, 16], strides = [1, 1]} : vector<2x64xf32> to vector<2x16xf32>
    %321 = arith.negf %320 : vector<2x16xf32>
    %322 = math.exp %321 : vector<2x16xf32>
    %cst_77 = arith.constant 1.000000e+00 : f32
    %323 = vector.broadcast %cst_77 : f32 to vector<2x16xf32>
    %324 = arith.addf %323, %322 : vector<2x16xf32>
    %325 = arith.divf %323, %324 : vector<2x16xf32>
    %326 = vector.extract_strided_slice %319 {offsets = [0, 16], sizes = [2, 16], strides = [1, 1]} : vector<2x64xf32> to vector<2x16xf32>
    %327 = arith.negf %326 : vector<2x16xf32>
    %328 = math.exp %327 : vector<2x16xf32>
    %cst_78 = arith.constant 1.000000e+00 : f32
    %329 = vector.broadcast %cst_78 : f32 to vector<2x16xf32>
    %330 = arith.addf %329, %328 : vector<2x16xf32>
    %331 = arith.divf %329, %330 : vector<2x16xf32>
    %332 = vector.extract_strided_slice %319 {offsets = [0, 32], sizes = [2, 16], strides = [1, 1]} : vector<2x64xf32> to vector<2x16xf32>
    %333 = math.tanh %332 : vector<2x16xf32>
    %334 = vector.extract_strided_slice %319 {offsets = [0, 48], sizes = [2, 16], strides = [1, 1]} : vector<2x64xf32> to vector<2x16xf32>
    %335 = arith.negf %334 : vector<2x16xf32>
    %336 = math.exp %335 : vector<2x16xf32>
    %cst_79 = arith.constant 1.000000e+00 : f32
    %337 = vector.broadcast %cst_79 : f32 to vector<2x16xf32>
    %338 = arith.addf %337, %336 : vector<2x16xf32>
    %339 = arith.divf %337, %338 : vector<2x16xf32>
    %340 = arith.mulf %331, %314 : vector<2x16xf32>
    %341 = arith.mulf %325, %333 : vector<2x16xf32>
    %342 = arith.addf %340, %341 : vector<2x16xf32>
    %343 = math.tanh %342 : vector<2x16xf32>
    %344 = arith.mulf %339, %343 : vector<2x16xf32>
    %345 = vector.extract_strided_slice %285 {offsets = [0, 0], sizes = [2, 64], strides = [1, 1]} : vector<6x64xf32> to vector<2x64xf32>
    %cst_80 = arith.constant dense<0.000000e+00> : vector<2x64xf32>
    %346 = tpu.matmul %344, %286, %cst_80 {dimension_numbers = #tpu.dot_dimension_numbers<[1], [0], [0], [1], [0, 0, 1, 1], [], []>} : vector<2x16xf32>, vector<16x64xf32>, vector<2x64xf32> -> vector<2x64xf32>
    %347 = arith.addf %345, %346 : vector<2x64xf32>
    %348 = vector.extract_strided_slice %347 {offsets = [0, 0], sizes = [2, 16], strides = [1, 1]} : vector<2x64xf32> to vector<2x16xf32>
    %349 = arith.negf %348 : vector<2x16xf32>
    %350 = math.exp %349 : vector<2x16xf32>
    %cst_81 = arith.constant 1.000000e+00 : f32
    %351 = vector.broadcast %cst_81 : f32 to vector<2x16xf32>
    %352 = arith.addf %351, %350 : vector<2x16xf32>
    %353 = arith.divf %351, %352 : vector<2x16xf32>
    %354 = vector.extract_strided_slice %347 {offsets = [0, 16], sizes = [2, 16], strides = [1, 1]} : vector<2x64xf32> to vector<2x16xf32>
    %355 = arith.negf %354 : vector<2x16xf32>
    %356 = math.exp %355 : vector<2x16xf32>
    %cst_82 = arith.constant 1.000000e+00 : f32
    %357 = vector.broadcast %cst_82 : f32 to vector<2x16xf32>
    %358 = arith.addf %357, %356 : vector<2x16xf32>
    %359 = arith.divf %357, %358 : vector<2x16xf32>
    %360 = vector.extract_strided_slice %347 {offsets = [0, 32], sizes = [2, 16], strides = [1, 1]} : vector<2x64xf32> to vector<2x16xf32>
    %361 = math.tanh %360 : vector<2x16xf32>
    %362 = vector.extract_strided_slice %347 {offsets = [0, 48], sizes = [2, 16], strides = [1, 1]} : vector<2x64xf32> to vector<2x16xf32>
    %363 = arith.negf %362 : vector<2x16xf32>
    %364 = math.exp %363 : vector<2x16xf32>
    %cst_83 = arith.constant 1.000000e+00 : f32
    %365 = vector.broadcast %cst_83 : f32 to vector<2x16xf32>
    %366 = arith.addf %365, %364 : vector<2x16xf32>
    %367 = arith.divf %365, %366 : vector<2x16xf32>
    %368 = arith.mulf %359, %342 : vector<2x16xf32>
    %369 = arith.mulf %353, %361 : vector<2x16xf32>
    %370 = arith.addf %368, %369 : vector<2x16xf32>
    %371 = math.tanh %370 : vector<2x16xf32>
    %372 = arith.mulf %367, %371 : vector<2x16xf32>
    %373 = vector.extract_strided_slice %92 {offsets = [0, 0], sizes = [1, 16], strides = [1, 1]} : vector<2x16xf32> to vector<1x16xf32>
    %374 = vector.extract_strided_slice %92 {offsets = [1, 0], sizes = [1, 16], strides = [1, 1]} : vector<2x16xf32> to vector<1x16xf32>
    %375 = vector.extract_strided_slice %184 {offsets = [0, 0], sizes = [1, 16], strides = [1, 1]} : vector<2x16xf32> to vector<1x16xf32>
    %376 = vector.extract_strided_slice %184 {offsets = [1, 0], sizes = [1, 16], strides = [1, 1]} : vector<2x16xf32> to vector<1x16xf32>
    %377 = vector.extract_strided_slice %280 {offsets = [0, 0], sizes = [1, 16], strides = [1, 1]} : vector<2x16xf32> to vector<1x16xf32>
    %378 = vector.extract_strided_slice %280 {offsets = [1, 0], sizes = [1, 16], strides = [1, 1]} : vector<2x16xf32> to vector<1x16xf32>
    %379 = vector.extract_strided_slice %372 {offsets = [0, 0], sizes = [1, 16], strides = [1, 1]} : vector<2x16xf32> to vector<1x16xf32>
    %380 = vector.extract_strided_slice %372 {offsets = [1, 0], sizes = [1, 16], strides = [1, 1]} : vector<2x16xf32> to vector<1x16xf32>
    %381 = tpu.concatenate %373, %374, %375, %376, %377, %378, %379, %380 in 1 : vector<1x16xf32>, vector<1x16xf32>, vector<1x16xf32>, vector<1x16xf32>, vector<1x16xf32>, vector<1x16xf32>, vector<1x16xf32>, vector<1x16xf32> -> vector<1x128xf32>
    %382 = vector.extract_strided_slice %381 {offsets = [0, 0], sizes = [1, 64], strides = [1, 1]} : vector<1x128xf32> to vector<1x64xf32>
    %383 = vector.extract_strided_slice %381 {offsets = [0, 64], sizes = [1, 64], strides = [1, 1]} : vector<1x128xf32> to vector<1x64xf32>
    %384 = tpu.concatenate %382, %383 in 0 : vector<1x64xf32>, vector<1x64xf32> -> vector<2x64xf32>
    %c0_84 = arith.constant 0 : index
    %c0_85 = arith.constant 0 : index
    %385 = vector.load %arg13[%c0_84, %c0_85] : memref<64x64xf32, #tpu.memory_space<vmem>>, vector<64x64xf32>
    %cst_86 = arith.constant dense<0.000000e+00> : vector<2x64xf32>
    %386 = tpu.matmul %384, %385, %cst_86 {dimension_numbers = #tpu.dot_dimension_numbers<[1], [0], [0], [1], [0, 0, 1, 1], [], []>} : vector<2x64xf32>, vector<64x64xf32>, vector<2x64xf32> -> vector<2x64xf32>
    %387 = vector.extract_strided_slice %224 {offsets = [0, 0], sizes = [1, 16], strides = [1, 1]} : vector<2x16xf32> to vector<1x16xf32>
    %388 = vector.extract_strided_slice %372 {offsets = [0, 0], sizes = [1, 16], strides = [1, 1]} : vector<2x16xf32> to vector<1x16xf32>
    %389 = tpu.concatenate %387, %388 in 1 : vector<1x16xf32>, vector<1x16xf32> -> vector<1x32xf32>
    %390 = vector.extract_strided_slice %252 {offsets = [0, 0], sizes = [1, 16], strides = [1, 1]} : vector<2x16xf32> to vector<1x16xf32>
    %391 = vector.extract_strided_slice %344 {offsets = [0, 0], sizes = [1, 16], strides = [1, 1]} : vector<2x16xf32> to vector<1x16xf32>
    %392 = tpu.concatenate %390, %391 in 1 : vector<1x16xf32>, vector<1x16xf32> -> vector<1x32xf32>
    %393 = vector.extract_strided_slice %280 {offsets = [0, 0], sizes = [1, 16], strides = [1, 1]} : vector<2x16xf32> to vector<1x16xf32>
    %394 = vector.extract_strided_slice %316 {offsets = [0, 0], sizes = [1, 16], strides = [1, 1]} : vector<2x16xf32> to vector<1x16xf32>
    %395 = tpu.concatenate %393, %394 in 1 : vector<1x16xf32>, vector<1x16xf32> -> vector<1x32xf32>
    %396 = tpu.concatenate %389, %392, %395 in 0 : vector<1x32xf32>, vector<1x32xf32>, vector<1x32xf32> -> vector<3x32xf32>
    %397 = vector.extract_strided_slice %386 {offsets = [0, 0], sizes = [1, 32], strides = [1, 1]} : vector<2x64xf32> to vector<1x32xf32>
    %398 = vector.broadcast %397 : vector<1x32xf32> to vector<3x32xf32>
    %399 = arith.mulf %396, %398 : vector<3x32xf32>
    %cst_87 = arith.constant dense<0.000000e+00> : vector<3xf32>
    %400 = vector.multi_reduction <add>, %399, %cst_87 [1] : vector<3x32xf32> to vector<3xf32>
    %401 = vector.shape_cast %400 : vector<3xf32> to vector<3x1xf32>
    %402 = vector.extract_strided_slice %386 {offsets = [0, 32], sizes = [1, 32], strides = [1, 1]} : vector<2x64xf32> to vector<1x32xf32>
    %403 = vector.broadcast %402 : vector<1x32xf32> to vector<3x32xf32>
    %404 = arith.mulf %396, %403 : vector<3x32xf32>
    %cst_88 = arith.constant dense<0.000000e+00> : vector<3xf32>
    %405 = vector.multi_reduction <add>, %404, %cst_88 [1] : vector<3x32xf32> to vector<3xf32>
    %406 = vector.shape_cast %405 : vector<3xf32> to vector<3x1xf32>
    %407 = tpu.concatenate %401, %406 in 1 : vector<3x1xf32>, vector<3x1xf32> -> vector<3x2xf32>
    %cst_89 = arith.constant dense<0xFF800000> : vector<2xf32>
    %408 = vector.multi_reduction <maximumf>, %407, %cst_89 [0] : vector<3x2xf32> to vector<2xf32>
    %409 = vector.shape_cast %408 : vector<2xf32> to vector<1x2xf32>
    %410 = vector.broadcast %409 : vector<1x2xf32> to vector<3x2xf32>
    %411 = arith.subf %407, %410 : vector<3x2xf32>
    %412 = math.exp %411 : vector<3x2xf32>
    %cst_90 = arith.constant dense<0.000000e+00> : vector<2xf32>
    %413 = vector.multi_reduction <add>, %412, %cst_90 [0] : vector<3x2xf32> to vector<2xf32>
    %414 = vector.shape_cast %413 : vector<2xf32> to vector<1x2xf32>
    %415 = vector.broadcast %414 : vector<1x2xf32> to vector<3x2xf32>
    %416 = arith.divf %412, %415 : vector<3x2xf32>
    %417 = vector.extract_strided_slice %416 {offsets = [0, 0], sizes = [3, 1], strides = [1, 1]} : vector<3x2xf32> to vector<3x1xf32>
    %418 = vector.broadcast %417 : vector<3x1xf32> to vector<3x32xf32>
    %419 = arith.mulf %396, %418 : vector<3x32xf32>
    %cst_91 = arith.constant dense<0.000000e+00> : vector<32xf32>
    %420 = vector.multi_reduction <add>, %419, %cst_91 [0] : vector<3x32xf32> to vector<32xf32>
    %421 = vector.shape_cast %420 : vector<32xf32> to vector<1x32xf32>
    %422 = vector.extract_strided_slice %416 {offsets = [0, 1], sizes = [3, 1], strides = [1, 1]} : vector<3x2xf32> to vector<3x1xf32>
    %423 = vector.broadcast %422 : vector<3x1xf32> to vector<3x32xf32>
    %424 = arith.mulf %396, %423 : vector<3x32xf32>
    %cst_92 = arith.constant dense<0.000000e+00> : vector<32xf32>
    %425 = vector.multi_reduction <add>, %424, %cst_92 [0] : vector<3x32xf32> to vector<32xf32>
    %426 = vector.shape_cast %425 : vector<32xf32> to vector<1x32xf32>
    %c0_93 = arith.constant 0 : index
    %c0_94 = arith.constant 0 : index
    %427 = vector.load %arg14[%c0_93, %c0_94] : memref<32x32xf32, #tpu.memory_space<vmem>>, vector<32x32xf32>
    %cst_95 = arith.constant dense<0.000000e+00> : vector<1x32xf32>
    %428 = tpu.matmul %421, %427, %cst_95 {dimension_numbers = #tpu.dot_dimension_numbers<[1], [0], [0], [1], [0, 0, 1, 1], [], []>} : vector<1x32xf32>, vector<32x32xf32>, vector<1x32xf32> -> vector<1x32xf32>
    %c0_96 = arith.constant 0 : index
    %c0_97 = arith.constant 0 : index
    %429 = vector.load %arg15[%c0_96, %c0_97] : memref<32x32xf32, #tpu.memory_space<vmem>>, vector<32x32xf32>
    %cst_98 = arith.constant dense<0.000000e+00> : vector<1x32xf32>
    %430 = tpu.matmul %426, %429, %cst_98 {dimension_numbers = #tpu.dot_dimension_numbers<[1], [0], [0], [1], [0, 0, 1, 1], [], []>} : vector<1x32xf32>, vector<32x32xf32>, vector<1x32xf32> -> vector<1x32xf32>
    %431 = arith.addf %428, %430 : vector<1x32xf32>
    %c0_99 = arith.constant 0 : index
    %c0_100 = arith.constant 0 : index
    %432 = vector.load %arg16[%c0_99, %c0_100] : memref<1x32xf32, #tpu.memory_space<vmem>>, vector<1x32xf32>
    %433 = arith.addf %431, %432 : vector<1x32xf32>
    %c0_101 = arith.constant 0 : index
    %c0_102 = arith.constant 0 : index
    %434 = vector.load %arg17[%c0_101, %c0_102] : memref<1x1xf32, #tpu.memory_space<vmem>>, vector<1x1xf32>
    %435 = vector.broadcast %434 : vector<1x1xf32> to vector<1x32xf32>
    %436 = arith.mulf %433, %435 : vector<1x32xf32>
    %c0_103 = arith.constant 0 : index
    %c0_104 = arith.constant 0 : index
    %437 = vector.load %arg18[%c0_103, %c0_104] : memref<1x1xf32, #tpu.memory_space<vmem>>, vector<1x1xf32>
    %438 = vector.broadcast %437 : vector<1x1xf32> to vector<1x32xf32>
    %439 = arith.addf %436, %438 : vector<1x32xf32>
    %440 = vector.extract_strided_slice %224 {offsets = [1, 0], sizes = [1, 16], strides = [1, 1]} : vector<2x16xf32> to vector<1x16xf32>
    %441 = vector.extract_strided_slice %372 {offsets = [1, 0], sizes = [1, 16], strides = [1, 1]} : vector<2x16xf32> to vector<1x16xf32>
    %442 = tpu.concatenate %440, %441 in 1 : vector<1x16xf32>, vector<1x16xf32> -> vector<1x32xf32>
    %443 = vector.extract_strided_slice %252 {offsets = [1, 0], sizes = [1, 16], strides = [1, 1]} : vector<2x16xf32> to vector<1x16xf32>
    %444 = vector.extract_strided_slice %344 {offsets = [1, 0], sizes = [1, 16], strides = [1, 1]} : vector<2x16xf32> to vector<1x16xf32>
    %445 = tpu.concatenate %443, %444 in 1 : vector<1x16xf32>, vector<1x16xf32> -> vector<1x32xf32>
    %446 = vector.extract_strided_slice %280 {offsets = [1, 0], sizes = [1, 16], strides = [1, 1]} : vector<2x16xf32> to vector<1x16xf32>
    %447 = vector.extract_strided_slice %316 {offsets = [1, 0], sizes = [1, 16], strides = [1, 1]} : vector<2x16xf32> to vector<1x16xf32>
    %448 = tpu.concatenate %446, %447 in 1 : vector<1x16xf32>, vector<1x16xf32> -> vector<1x32xf32>
    %449 = tpu.concatenate %442, %445, %448 in 0 : vector<1x32xf32>, vector<1x32xf32>, vector<1x32xf32> -> vector<3x32xf32>
    %450 = vector.extract_strided_slice %386 {offsets = [1, 0], sizes = [1, 32], strides = [1, 1]} : vector<2x64xf32> to vector<1x32xf32>
    %451 = vector.broadcast %450 : vector<1x32xf32> to vector<3x32xf32>
    %452 = arith.mulf %449, %451 : vector<3x32xf32>
    %cst_105 = arith.constant dense<0.000000e+00> : vector<3xf32>
    %453 = vector.multi_reduction <add>, %452, %cst_105 [1] : vector<3x32xf32> to vector<3xf32>
    %454 = vector.shape_cast %453 : vector<3xf32> to vector<3x1xf32>
    %455 = vector.extract_strided_slice %386 {offsets = [1, 32], sizes = [1, 32], strides = [1, 1]} : vector<2x64xf32> to vector<1x32xf32>
    %456 = vector.broadcast %455 : vector<1x32xf32> to vector<3x32xf32>
    %457 = arith.mulf %449, %456 : vector<3x32xf32>
    %cst_106 = arith.constant dense<0.000000e+00> : vector<3xf32>
    %458 = vector.multi_reduction <add>, %457, %cst_106 [1] : vector<3x32xf32> to vector<3xf32>
    %459 = vector.shape_cast %458 : vector<3xf32> to vector<3x1xf32>
    %460 = tpu.concatenate %454, %459 in 1 : vector<3x1xf32>, vector<3x1xf32> -> vector<3x2xf32>
    %cst_107 = arith.constant dense<0xFF800000> : vector<2xf32>
    %461 = vector.multi_reduction <maximumf>, %460, %cst_107 [0] : vector<3x2xf32> to vector<2xf32>
    %462 = vector.shape_cast %461 : vector<2xf32> to vector<1x2xf32>
    %463 = vector.broadcast %462 : vector<1x2xf32> to vector<3x2xf32>
    %464 = arith.subf %460, %463 : vector<3x2xf32>
    %465 = math.exp %464 : vector<3x2xf32>
    %cst_108 = arith.constant dense<0.000000e+00> : vector<2xf32>
    %466 = vector.multi_reduction <add>, %465, %cst_108 [0] : vector<3x2xf32> to vector<2xf32>
    %467 = vector.shape_cast %466 : vector<2xf32> to vector<1x2xf32>
    %468 = vector.broadcast %467 : vector<1x2xf32> to vector<3x2xf32>
    %469 = arith.divf %465, %468 : vector<3x2xf32>
    %470 = vector.extract_strided_slice %469 {offsets = [0, 0], sizes = [3, 1], strides = [1, 1]} : vector<3x2xf32> to vector<3x1xf32>
    %471 = vector.broadcast %470 : vector<3x1xf32> to vector<3x32xf32>
    %472 = arith.mulf %449, %471 : vector<3x32xf32>
    %cst_109 = arith.constant dense<0.000000e+00> : vector<32xf32>
    %473 = vector.multi_reduction <add>, %472, %cst_109 [0] : vector<3x32xf32> to vector<32xf32>
    %474 = vector.shape_cast %473 : vector<32xf32> to vector<1x32xf32>
    %475 = vector.extract_strided_slice %469 {offsets = [0, 1], sizes = [3, 1], strides = [1, 1]} : vector<3x2xf32> to vector<3x1xf32>
    %476 = vector.broadcast %475 : vector<3x1xf32> to vector<3x32xf32>
    %477 = arith.mulf %449, %476 : vector<3x32xf32>
    %cst_110 = arith.constant dense<0.000000e+00> : vector<32xf32>
    %478 = vector.multi_reduction <add>, %477, %cst_110 [0] : vector<3x32xf32> to vector<32xf32>
    %479 = vector.shape_cast %478 : vector<32xf32> to vector<1x32xf32>
    %c0_111 = arith.constant 0 : index
    %c0_112 = arith.constant 0 : index
    %480 = vector.load %arg14[%c0_111, %c0_112] : memref<32x32xf32, #tpu.memory_space<vmem>>, vector<32x32xf32>
    %cst_113 = arith.constant dense<0.000000e+00> : vector<1x32xf32>
    %481 = tpu.matmul %474, %480, %cst_113 {dimension_numbers = #tpu.dot_dimension_numbers<[1], [0], [0], [1], [0, 0, 1, 1], [], []>} : vector<1x32xf32>, vector<32x32xf32>, vector<1x32xf32> -> vector<1x32xf32>
    %c0_114 = arith.constant 0 : index
    %c0_115 = arith.constant 0 : index
    %482 = vector.load %arg15[%c0_114, %c0_115] : memref<32x32xf32, #tpu.memory_space<vmem>>, vector<32x32xf32>
    %cst_116 = arith.constant dense<0.000000e+00> : vector<1x32xf32>
    %483 = tpu.matmul %479, %482, %cst_116 {dimension_numbers = #tpu.dot_dimension_numbers<[1], [0], [0], [1], [0, 0, 1, 1], [], []>} : vector<1x32xf32>, vector<32x32xf32>, vector<1x32xf32> -> vector<1x32xf32>
    %484 = arith.addf %481, %483 : vector<1x32xf32>
    %c0_117 = arith.constant 0 : index
    %c0_118 = arith.constant 0 : index
    %485 = vector.load %arg16[%c0_117, %c0_118] : memref<1x32xf32, #tpu.memory_space<vmem>>, vector<1x32xf32>
    %486 = arith.addf %484, %485 : vector<1x32xf32>
    %c0_119 = arith.constant 0 : index
    %c0_120 = arith.constant 0 : index
    %487 = vector.load %arg17[%c0_119, %c0_120] : memref<1x1xf32, #tpu.memory_space<vmem>>, vector<1x1xf32>
    %488 = vector.broadcast %487 : vector<1x1xf32> to vector<1x32xf32>
    %489 = arith.mulf %486, %488 : vector<1x32xf32>
    %c0_121 = arith.constant 0 : index
    %c0_122 = arith.constant 0 : index
    %490 = vector.load %arg18[%c0_121, %c0_122] : memref<1x1xf32, #tpu.memory_space<vmem>>, vector<1x1xf32>
    %491 = vector.broadcast %490 : vector<1x1xf32> to vector<1x32xf32>
    %492 = arith.addf %489, %491 : vector<1x32xf32>
    %493 = tpu.concatenate %433, %486 in 0 : vector<1x32xf32>, vector<1x32xf32> -> vector<2x32xf32>
    %c0_123 = arith.constant 0 : index
    %c0_124 = arith.constant 0 : index
    %494 = vector.load %arg19[%c0_123, %c0_124] : memref<2x32xf32, #tpu.memory_space<vmem>>, vector<2x32xf32>
    tpu.vector_store %arg19[%c0_123, %c0_124], %493 {strides = array<i32>} : memref<2x32xf32, #tpu.memory_space<vmem>>, vector<2x32xf32>,
    %495 = tpu.concatenate %439, %492 in 0 : vector<1x32xf32>, vector<1x32xf32> -> vector<2x32xf32>
    %c0_125 = arith.constant 0 : index
    %c0_126 = arith.constant 0 : index
    %496 = vector.load %arg20[%c0_125, %c0_126] : memref<2x32xf32, #tpu.memory_space<vmem>>, vector<2x32xf32>
    tpu.vector_store %arg20[%c0_125, %c0_126], %495 {strides = array<i32>} : memref<2x32xf32, #tpu.memory_space<vmem>>, vector<2x32xf32>,
    return
  }
}

module attributes {stable_mosaic.version = 11 : i64} {
  func.func @scoring_kernel(%arg0: memref<28x32xf32, #tpu.memory_space<vmem>>, %arg1: memref<28x32xf32, #tpu.memory_space<vmem>>, %arg2: memref<2x32xf32, #tpu.memory_space<vmem>>, %arg3: memref<2x32xf32, #tpu.memory_space<vmem>>, %arg4: memref<2x32xf32, #tpu.memory_space<vmem>>, %arg5: memref<28x1xf32, #tpu.memory_space<vmem>>) attributes {dimension_semantics = [], scalar_prefetch = 0 : i64, scratch_operands = 0 : i64, tpu.core_type = #tpu.core_type<tc>} {
    %c0 = arith.constant 0 : index
    %c0_0 = arith.constant 0 : index
    %0 = vector.load %arg0[%c0, %c0_0] : memref<28x32xf32, #tpu.memory_space<vmem>>, vector<14x32xf32>
    %c0_1 = arith.constant 0 : index
    %c0_2 = arith.constant 0 : index
    %1 = vector.load %arg1[%c0_1, %c0_2] : memref<28x32xf32, #tpu.memory_space<vmem>>, vector<14x32xf32>
    %c0_3 = arith.constant 0 : index
    %c0_4 = arith.constant 0 : index
    %2 = vector.load %arg4[%c0_3, %c0_4] : memref<2x32xf32, #tpu.memory_space<vmem>>, vector<1x32xf32>
    %c0_5 = arith.constant 0 : index
    %c0_6 = arith.constant 0 : index
    %3 = vector.load %arg3[%c0_5, %c0_6] : memref<2x32xf32, #tpu.memory_space<vmem>>, vector<1x32xf32>
    %4 = vector.shape_cast %3 : vector<1x32xf32> to vector<1x32xf32>
    %5 = vector.broadcast %4 : vector<1x32xf32> to vector<6x32xf32>
    %c0_7 = arith.constant 0 : index
    %c0_8 = arith.constant 0 : index
    %6 = vector.load %arg2[%c0_7, %c0_8] : memref<2x32xf32, #tpu.memory_space<vmem>>, vector<1x32xf32>
    %7 = vector.shape_cast %6 : vector<1x32xf32> to vector<1x32xf32>
    %8 = vector.broadcast %7 : vector<1x32xf32> to vector<8x32xf32>
    %9 = tpu.concatenate %5, %8 in 0 : vector<6x32xf32>, vector<8x32xf32> -> vector<14x32xf32>
    %10 = vector.broadcast %2 : vector<1x32xf32> to vector<14x32xf32>
    %11 = arith.mulf %0, %10 : vector<14x32xf32>
    %cst = arith.constant dense<0.000000e+00> : vector<14xf32>
    %12 = vector.multi_reduction <add>, %11, %cst [1] : vector<14x32xf32> to vector<14xf32>
    %13 = vector.shape_cast %12 : vector<14xf32> to vector<14x1xf32>
    %14 = vector.broadcast %13 : vector<14x1xf32> to vector<14x32xf32>
    %15 = vector.broadcast %2 : vector<1x32xf32> to vector<14x32xf32>
    %16 = arith.mulf %14, %15 : vector<14x32xf32>
    %17 = arith.subf %0, %16 : vector<14x32xf32>
    %18 = vector.broadcast %2 : vector<1x32xf32> to vector<14x32xf32>
    %19 = arith.mulf %1, %18 : vector<14x32xf32>
    %cst_9 = arith.constant dense<0.000000e+00> : vector<14xf32>
    %20 = vector.multi_reduction <add>, %19, %cst_9 [1] : vector<14x32xf32> to vector<14xf32>
    %21 = vector.shape_cast %20 : vector<14xf32> to vector<14x1xf32>
    %22 = vector.broadcast %21 : vector<14x1xf32> to vector<14x32xf32>
    %23 = vector.broadcast %2 : vector<1x32xf32> to vector<14x32xf32>
    %24 = arith.mulf %22, %23 : vector<14x32xf32>
    %25 = arith.subf %1, %24 : vector<14x32xf32>
    %26 = arith.addf %17, %9 : vector<14x32xf32>
    %27 = arith.subf %26, %25 : vector<14x32xf32>
    %28 = arith.mulf %27, %27 : vector<14x32xf32>
    %cst_10 = arith.constant dense<0.000000e+00> : vector<14xf32>
    %29 = vector.multi_reduction <add>, %28, %cst_10 [1] : vector<14x32xf32> to vector<14xf32>
    %30 = vector.shape_cast %29 : vector<14xf32> to vector<14x1xf32>
    %31 = math.sqrt %30 : vector<14x1xf32>
    %cst_11 = arith.constant 0.000000e+00 : f32
    %32 = vector.broadcast %cst_11 : f32 to vector<14x1xf32>
    %33 = arith.subf %32, %31 : vector<14x1xf32>
    %c0_12 = arith.constant 0 : index
    %c0_13 = arith.constant 0 : index
    %34 = vector.load %arg5[%c0_12, %c0_13] : memref<28x1xf32, #tpu.memory_space<vmem>>, vector<14x1xf32>
    tpu.vector_store %arg5[%c0_12, %c0_13], %33 {strides = array<i32>} : memref<28x1xf32, #tpu.memory_space<vmem>>, vector<14x1xf32>,
    %c14 = arith.constant 14 : index
    %c0_14 = arith.constant 0 : index
    %35 = vector.load %arg0[%c14, %c0_14] : memref<28x32xf32, #tpu.memory_space<vmem>>, vector<14x32xf32>
    %c14_15 = arith.constant 14 : index
    %c0_16 = arith.constant 0 : index
    %36 = vector.load %arg1[%c14_15, %c0_16] : memref<28x32xf32, #tpu.memory_space<vmem>>, vector<14x32xf32>
    %c1 = arith.constant 1 : index
    %c0_17 = arith.constant 0 : index
    %37 = vector.load %arg4[%c1, %c0_17] : memref<2x32xf32, #tpu.memory_space<vmem>>, vector<1x32xf32>
    %c1_18 = arith.constant 1 : index
    %c0_19 = arith.constant 0 : index
    %38 = vector.load %arg3[%c1_18, %c0_19] : memref<2x32xf32, #tpu.memory_space<vmem>>, vector<1x32xf32>
    %39 = vector.shape_cast %38 : vector<1x32xf32> to vector<1x32xf32>
    %40 = vector.broadcast %39 : vector<1x32xf32> to vector<6x32xf32>
    %c1_20 = arith.constant 1 : index
    %c0_21 = arith.constant 0 : index
    %41 = vector.load %arg2[%c1_20, %c0_21] : memref<2x32xf32, #tpu.memory_space<vmem>>, vector<1x32xf32>
    %42 = vector.shape_cast %41 : vector<1x32xf32> to vector<1x32xf32>
    %43 = vector.broadcast %42 : vector<1x32xf32> to vector<8x32xf32>
    %44 = tpu.concatenate %40, %43 in 0 : vector<6x32xf32>, vector<8x32xf32> -> vector<14x32xf32>
    %45 = vector.broadcast %37 : vector<1x32xf32> to vector<14x32xf32>
    %46 = arith.mulf %35, %45 : vector<14x32xf32>
    %cst_22 = arith.constant dense<0.000000e+00> : vector<14xf32>
    %47 = vector.multi_reduction <add>, %46, %cst_22 [1] : vector<14x32xf32> to vector<14xf32>
    %48 = vector.shape_cast %47 : vector<14xf32> to vector<14x1xf32>
    %49 = vector.broadcast %48 : vector<14x1xf32> to vector<14x32xf32>
    %50 = vector.broadcast %37 : vector<1x32xf32> to vector<14x32xf32>
    %51 = arith.mulf %49, %50 : vector<14x32xf32>
    %52 = arith.subf %35, %51 : vector<14x32xf32>
    %53 = vector.broadcast %37 : vector<1x32xf32> to vector<14x32xf32>
    %54 = arith.mulf %36, %53 : vector<14x32xf32>
    %cst_23 = arith.constant dense<0.000000e+00> : vector<14xf32>
    %55 = vector.multi_reduction <add>, %54, %cst_23 [1] : vector<14x32xf32> to vector<14xf32>
    %56 = vector.shape_cast %55 : vector<14xf32> to vector<14x1xf32>
    %57 = vector.broadcast %56 : vector<14x1xf32> to vector<14x32xf32>
    %58 = vector.broadcast %37 : vector<1x32xf32> to vector<14x32xf32>
    %59 = arith.mulf %57, %58 : vector<14x32xf32>
    %60 = arith.subf %36, %59 : vector<14x32xf32>
    %61 = arith.addf %52, %44 : vector<14x32xf32>
    %62 = arith.subf %61, %60 : vector<14x32xf32>
    %63 = arith.mulf %62, %62 : vector<14x32xf32>
    %cst_24 = arith.constant dense<0.000000e+00> : vector<14xf32>
    %64 = vector.multi_reduction <add>, %63, %cst_24 [1] : vector<14x32xf32> to vector<14xf32>
    %65 = vector.shape_cast %64 : vector<14xf32> to vector<14x1xf32>
    %66 = math.sqrt %65 : vector<14x1xf32>
    %cst_25 = arith.constant 0.000000e+00 : f32
    %67 = vector.broadcast %cst_25 : f32 to vector<14x1xf32>
    %68 = arith.subf %67, %66 : vector<14x1xf32>
    %c14_26 = arith.constant 14 : index
    %c0_27 = arith.constant 0 : index
    %69 = vector.load %arg5[%c14_26, %c0_27] : memref<28x1xf32, #tpu.memory_space<vmem>>, vector<14x1xf32>
    tpu.vector_store %arg5[%c14_26, %c0_27], %68 {strides = array<i32>} : memref<28x1xf32, #tpu.memory_space<vmem>>, vector<14x1xf32>,
    return
  }
}

</mosaic_0001>

<llo_original>
// kernel: squeeze.0
$region0: #{squeeze.0}
  %s0 = inlined_call_operand.vmem [shape: s32[12,8,1], index: 0, kind: input, shape index: {}]
  %s1 = inlined_call_operand.vmem [shape: s32[96,1], index: 1, kind: output, shape index: {}]
  %v2 = vld [vmem:[%s0] sm:$0xff]
  %vm3 = vcmask 7168
  %4 = vst.msk [vmem:[%s1] ss:$8 sm:$0xf] %vm3, %v2
  %5 = vst.msk [vmem:[%s1] ss:$8 sm:$0xf0] %vm3, %v2
  %s6 = scalar_lea.vmem %s0, 8
  %v7 = vld [vmem:[%s6] sm:$0xf]
  %vm8 = vcmask 7168
  %s9 = scalar_lea.vmem %s1, 64
  %10 = vst.msk [vmem:[%s9] ss:$8 sm:$0xf] %vm8, %v7
  %v11 = vld [vmem:[%s0] sm:$0xff]
  %12 = vrot.lane.b32.xlu0 %v11, 127
  %v13 = vpop.permute.xlu0 %12
  %vm14 = vcmask 7168
  %s15 = scalar_lea.vmem %s1, 1
  %16 = vst.msk [vmem:[%s15] ss:$8 sm:$0xf] %vm14, %v13
  %s17 = scalar_lea.vmem %s1, 1
  %18 = vst.msk [vmem:[%s17] ss:$8 sm:$0xf0] %vm14, %v13
  %s19 = scalar_lea.vmem %s0, 8
  %v20 = vld [vmem:[%s19] sm:$0xf]
  %21 = vrot.lane.b32.xlu0 %v20, 127
  %v22 = vpop.permute.xlu0 %21
  %vm23 = vcmask 7168
  %s24 = scalar_lea.vmem %s1, 65
  %25 = vst.msk [vmem:[%s24] ss:$8 sm:$0xf] %vm23, %v22
  %v26 = vld [vmem:[%s0] sm:$0xff]
  %27 = vrot.lane.b32.xlu0 %v26, 126
  %v28 = vpop.permute.xlu0 %27
  %vm29 = vcmask 7168
  %s30 = scalar_lea.vmem %s1, 2
  %31 = vst.msk [vmem:[%s30] ss:$8 sm:$0xf] %vm29, %v28
  %s32 = scalar_lea.vmem %s1, 2
  %33 = vst.msk [vmem:[%s32] ss:$8 sm:$0xf0] %vm29, %v28
  %s34 = scalar_lea.vmem %s0, 8
  %v35 = vld [vmem:[%s34] sm:$0xf]
  %36 = vrot.lane.b32.xlu0 %v35, 126
  %v37 = vpop.permute.xlu0 %36
  %vm38 = vcmask 7168
  %s39 = scalar_lea.vmem %s1, 66
  %40 = vst.msk [vmem:[%s39] ss:$8 sm:$0xf] %vm38, %v37
  %v41 = vld [vmem:[%s0] sm:$0xff]
  %42 = vrot.lane.b32.xlu0 %v41, 125
  %v43 = vpop.permute.xlu0 %42
  %vm44 = vcmask 7168
  %s45 = scalar_lea.vmem %s1, 3
  %46 = vst.msk [vmem:[%s45] ss:$8 sm:$0xf] %vm44, %v43
  %s47 = scalar_lea.vmem %s1, 3
  %48 = vst.msk [vmem:[%s47] ss:$8 sm:$0xf0] %vm44, %v43
  %s49 = scalar_lea.vmem %s0, 8
  %v50 = vld [vmem:[%s49] sm:$0xf]
  %51 = vrot.lane.b32.xlu0 %v50, 125
  %v52 = vpop.permute.xlu0 %51
  %vm53 = vcmask 7168
  %s54 = scalar_lea.vmem %s1, 67
  %55 = vst.msk [vmem:[%s54] ss:$8 sm:$0xf] %vm53, %v52
  %v56 = vld [vmem:[%s0] sm:$0xff]
  %57 = vrot.lane.b32.xlu0 %v56, 124
  %v58 = vpop.permute.xlu0 %57
  %vm59 = vcmask 7168
  %s60 = scalar_lea.vmem %s1, 4
  %61 = vst.msk [vmem:[%s60] ss:$8 sm:$0xf] %vm59, %v58
  %s62 = scalar_lea.vmem %s1, 4
  %63 = vst.msk [vmem:[%s62] ss:$8 sm:$0xf0] %vm59, %v58
  %s64 = scalar_lea.vmem %s0, 8
  %v65 = vld [vmem:[%s64] sm:$0xf]
  %66 = vrot.lane.b32.xlu0 %v65, 124
  %v67 = vpop.permute.xlu0 %66
  %vm68 = vcmask 7168
  %s69 = scalar_lea.vmem %s1, 68
  %70 = vst.msk [vmem:[%s69] ss:$8 sm:$0xf] %vm68, %v67
  %v71 = vld [vmem:[%s0] sm:$0xff]
  %72 = vrot.lane.b32.xlu0 %v71, 123
  %v73 = vpop.permute.xlu0 %72
  %vm74 = vcmask 7168
  %s75 = scalar_lea.vmem %s1, 5
  %76 = vst.msk [vmem:[%s75] ss:$8 sm:$0xf] %vm74, %v73
  %s77 = scalar_lea.vmem %s1, 5
  %78 = vst.msk [vmem:[%s77] ss:$8 sm:$0xf0] %vm74, %v73
  %s79 = scalar_lea.vmem %s0, 8
  %v80 = vld [vmem:[%s79] sm:$0xf]
  %81 = vrot.lane.b32.xlu0 %v80, 123
  %v82 = vpop.permute.xlu0 %81
  %vm83 = vcmask 7168
  %s84 = scalar_lea.vmem %s1, 69
  %85 = vst.msk [vmem:[%s84] ss:$8 sm:$0xf] %vm83, %v82
  %v86 = vld [vmem:[%s0] sm:$0xff]
  %87 = vrot.lane.b32.xlu0 %v86, 122
  %v88 = vpop.permute.xlu0 %87
  %vm89 = vcmask 7168
  %s90 = scalar_lea.vmem %s1, 6
  %91 = vst.msk [vmem:[%s90] ss:$8 sm:$0xf] %vm89, %v88
  %s92 = scalar_lea.vmem %s1, 6
  %93 = vst.msk [vmem:[%s92] ss:$8 sm:$0xf0] %vm89, %v88
  %s94 = scalar_lea.vmem %s0, 8
  %v95 = vld [vmem:[%s94] sm:$0xf]
  %96 = vrot.lane.b32.xlu0 %v95, 122
  %v97 = vpop.permute.xlu0 %96
  %vm98 = vcmask 7168
  %s99 = scalar_lea.vmem %s1, 70
  %100 = vst.msk [vmem:[%s99] ss:$8 sm:$0xf] %vm98, %v97
  %v101 = vld [vmem:[%s0] sm:$0xff]
  %102 = vrot.lane.b32.xlu0 %v101, 121
  %v103 = vpop.permute.xlu0 %102
  %vm104 = vcmask 7168
  %s105 = scalar_lea.vmem %s1, 7
  %106 = vst.msk [vmem:[%s105] ss:$8 sm:$0xf] %vm104, %v103
  %s107 = scalar_lea.vmem %s1, 7
  %108 = vst.msk [vmem:[%s107] ss:$8 sm:$0xf0] %vm104, %v103
  %s109 = scalar_lea.vmem %s0, 8
  %v110 = vld [vmem:[%s109] sm:$0xf]
  %111 = vrot.lane.b32.xlu0 %v110, 121
  %v112 = vpop.permute.xlu0 %111
  %vm113 = vcmask 7168
  %s114 = scalar_lea.vmem %s1, 71
  %115 = vst.msk [vmem:[%s114] ss:$8 sm:$0xf] %vm113, %v112

// kernel: squeeze.10
$region0: #{squeeze.10}
  %s0 = inlined_call_operand.vmem [shape: f32[2,14,32], index: 0, kind: input, shape index: {}]
  %s1 = inlined_call_operand.vmem [shape: f32[28,32], index: 1, kind: output, shape index: {}]
  %v2 = vld [vmem:[%s0] sm:$0xff]
  %vm3 = vcmask 261120
  %4 = vst.msk [vmem:[%s1] sm:$0xff] %vm3, %v2
  %s5 = scalar_lea.vmem %s0, 8
  %v6 = vld [vmem:[%s5] sm:$0x3f]
  %vm7 = vcmask 261120
  %s8 = scalar_lea.vmem %s1, 8
  %9 = vst.msk [vmem:[%s8] sm:$0x3f] %vm7, %v6
  %s10 = scalar_lea.vmem %s0, 16
  %v11 = vld [vmem:[%s10] sm:$0xff]
  %vm12 = vcmask 261120
  %s13 = scalar_lea.vmem %s1, 14
  %14 = vst.msk [vmem:[%s13] sm:$0xff] %vm12, %v11
  %s15 = scalar_lea.vmem %s0, 24
  %v16 = vld [vmem:[%s15] sm:$0x3f]
  %vm17 = vcmask 261120
  %s18 = scalar_lea.vmem %s1, 22
  %19 = vst.msk [vmem:[%s18] sm:$0x3f] %vm17, %v16

// kernel: metar_forward.5
$region0: #{metar_forward.5}
  #allocation0 [shape = 'u32[]', space=smem, size = 0x4, offset = 0x4, fixed_abs, tag = 'smem constant byte address 0x4 - core index']
  #allocation1 [shape = 'u32[144,128]{1,0:T(1,128)}', space=vmem, size = 0x12000, scoped, tag = 'internal scratch']
  %s0 = inlined_call_operand.vmem [shape: f32[28,32], index: 0, kind: input, shape index: {}]
  %s1 = inlined_call_operand.vmem [shape: f32[28,32], index: 1, kind: input, shape index: {}]
  %s2 = inlined_call_operand.vmem [shape: f32[2,32], index: 2, kind: input, shape index: {}]
  %s3 = inlined_call_operand.vmem [shape: f32[2,32], index: 3, kind: input, shape index: {}]
  %s4 = inlined_call_operand.vmem [shape: f32[2,32], index: 4, kind: input, shape index: {}]
  %s5 = inlined_call_operand.vmem [shape: f32[28,1], index: 5, kind: output, shape index: {}]
  %s6 = sld [smem:[#allocation0]]
  $region30: #{metar_forward.5} parent=0
    _
  %s8 = ssub.s32 1, %s6
  %s9 = scalar_select 0, %s8, %s6
  // Predicated region
  $region2: #{metar_forward.5} parent=0 // pred_check
    _
  $region3: #{metar_forward.5} parent=0 // pred_check_branch
    %11 = sbr.rel (0) target = $region5
  $region4: #{metar_forward.5} parent=0 // pred_region
    _
  $region5: #{metar_forward.5} parent=0 // pred_fallthru
    _
  // Predicated region
  $region6: #{metar_forward.5} parent=0 // pred_check
    _
  $region7: #{metar_forward.5} parent=0 // pred_check_branch
    %13 = sbr.rel (0) target = $region9
  $region8: #{metar_forward.5} parent=0 // pred_region
    _
  $region9: #{metar_forward.5} parent=0 // pred_fallthru
    _
  // Predicated region
  $region10: #{metar_forward.5} parent=0 // pred_check
    _
  $region11: #{metar_forward.5} parent=0 // pred_check_branch
    %15 = sbr.rel (0) target = $region13
  $region12: #{metar_forward.5} parent=0 // pred_region
    _
  $region13: #{metar_forward.5} parent=0 // pred_fallthru
    _
  // Predicated region
  $region14: #{metar_forward.5} parent=0 // pred_check
    _
  $region15: #{metar_forward.5} parent=0 // pred_check_branch
    %17 = sbr.rel (0) target = $region17
  $region16: #{metar_forward.5} parent=0 // pred_region
    _
  $region17: #{metar_forward.5} parent=0 // pred_fallthru
    _
  // Predicated region
  $region18: #{metar_forward.5} parent=0 // pred_check
    _
  $region19: #{metar_forward.5} parent=0 // pred_check_branch
    %19 = sbr.rel (0) target = $region21
  $region20: #{metar_forward.5} parent=0 // pred_region
    _
  $region21: #{metar_forward.5} parent=0 // pred_fallthru
    _
  %v20 = vld [vmem:[%s0] sm:$0xff]
  %v21 = vld [vmem:[%s0 + $0x8] sm:$0x3f]
  %v22 = vld [vmem:[%s1] sm:$0xff]
  %v23 = vld [vmem:[%s1 + $0x8] sm:$0x3f]
  %v24 = vld [vmem:[%s4] sm:$0x1]
  %v25 = vld [vmem:[%s3] sm:$0x1]
  %v26 = vlaneseq
  %v27 = vshrl.u32 %v26, 7
  %v28 = vsub.s32 0, %v27
  %v29 = vrot.slane %v25, %v28
  %v30 = vld [vmem:[%s2] sm:$0x1]
  %v31 = vlaneseq
  %v32 = vshrl.u32 %v31, 7
  %v33 = vsub.s32 0, %v32
  %v34 = vrot.slane %v30, %v33
  %vm35 = vcmask 1045504
  %v36 = vsel %vm35, %v29, %v34
  %v37 = vlaneseq
  %v38 = vshrl.u32 %v37, 7
  %v39 = vsub.s32 0, %v38
  %v40 = vrot.slane %v24, %v39
  %v41 = vmul.f32 %v20, %v40
  %v42 = vmul.f32 %v21, %v40
  %vm43 = vcmask 261120
  %v44 = vsel %vm43, %v41, 0.0
  %45 = vadd.xlane.f32.xlu0 %v44
  %v46 = vpop.xlane.xlu0 %45
  %vm47 = vcmask 259072
  %v48 = vsel %vm47, %v42, 0.0
  %49 = vadd.xlane.f32.xlu0 %v48
  %v50 = vpop.xlane.xlu0 %49
  %v51 = vmul.f32 %v46, %v40
  %v52 = vmul.f32 %v50, %v40
  %v53 = vsub.f32 %v20, %v51
  %v54 = vsub.f32 %v21, %v52
  %v55 = vmul.f32 %v22, %v40
  %v56 = vmul.f32 %v23, %v40
  %v57 = vsel %vm43, %v55, 0.0
  %58 = vadd.xlane.f32.xlu0 %v57
  %v59 = vpop.xlane.xlu0 %58
  %v60 = vsel %vm47, %v56, 0.0
  %61 = vadd.xlane.f32.xlu0 %v60
  %v62 = vpop.xlane.xlu0 %61
  %v63 = vmul.f32 %v59, %v40
  %v64 = vmul.f32 %v62, %v40
  %v65 = vsub.f32 %v22, %v63
  %v66 = vsub.f32 %v23, %v64
  %v67 = vadd.f32 %v53, %v36
  %v68 = vadd.f32 %v54, %v34
  %v69 = vsub.f32 %v67, %v65
  %v70 = vsub.f32 %v68, %v66
  %v71 = vmul.f32 %v69, %v69
  %v72 = vmul.f32 %v70, %v70
  %v73 = vsel %vm43, %v71, 0.0
  %74 = vadd.xlane.f32.xlu0 %v73
  %v75 = vpop.xlane.xlu0 %74
  %v76 = vsel %vm47, %v72, 0.0
  %77 = vadd.xlane.f32.xlu0 %v76
  %v78 = vpop.xlane.xlu0 %77
  %v79 = vrsqrt.pop %v75
  %v80 = vmul.f32 %v75, %v79
  %vm81 = vcmp.eq.f32.partialorder %v75, inf
  %v82 = vsel %vm81, %v75, %v80
  %vm83 = vcmp.eq.f32.partialorder %v75, 0.0
  %v84 = vand.u32 %v75, 2147483648
  %v85 = vsel %vm83, %v84, %v82
  %v86 = vrsqrt.pop %v78
  %v87 = vmul.f32 %v78, %v86
  %vm88 = vcmp.eq.f32.partialorder %v78, inf
  %v89 = vsel %vm88, %v78, %v87
  %vm90 = vcmp.eq.f32.partialorder %v78, 0.0
  %v91 = vand.u32 %v78, 2147483648
  %v92 = vsel %vm90, %v91, %v89
  %v93 = vsub.f32 0.0, %v85
  %v94 = vsub.f32 0.0, %v92
  %vm95 = vcmask 7168
  %96 = vst.msk [vmem:[%s5] sm:$0xff] %vm95, %v93
  %vm97 = vcmask 5120
  %98 = vst.msk [vmem:[%s5 + $0x8] sm:$0x3f] %vm97, %v94
  %v99 = vld [vmem:[%s0 + $0xe] sm:$0xff]
  %v100 = vld [vmem:[%s0 + $0x16] sm:$0x3f]
  %v101 = vld [vmem:[%s1 + $0xe] sm:$0xff]
  %v102 = vld [vmem:[%s1 + $0x16] sm:$0x3f]
  %v103 = vld [vmem:[%s4 + $0x1] sm:$0x1]
  %v104 = vld [vmem:[%s3 + $0x1] sm:$0x1]
  %v105 = vlaneseq
  %v106 = vshrl.u32 %v105, 7
  %v107 = vsub.s32 0, %v106
  %v108 = vrot.slane %v104, %v107
  %v109 = vld [vmem:[%s2 + $0x1] sm:$0x1]
  %v110 = vlaneseq
  %v111 = vshrl.u32 %v110, 7
  %v112 = vsub.s32 0, %v111
  %v113 = vrot.slane %v109, %v112
  %v114 = vsel %vm35, %v108, %v113
  %v115 = vlaneseq
  %v116 = vshrl.u32 %v115, 7
  %v117 = vsub.s32 0, %v116
  %v118 = vrot.slane %v103, %v117
  %v119 = vmul.f32 %v99, %v118
  %v120 = vmul.f32 %v100, %v118
  %v121 = vsel %vm43, %v119, 0.0
  %122 = vadd.xlane.f32.xlu0 %v121
  %v123 = vpop.xlane.xlu0 %122
  %v124 = vsel %vm47, %v120, 0.0
  %125 = vadd.xlane.f32.xlu0 %v124
  %v126 = vpop.xlane.xlu0 %125
  %v127 = vmul.f32 %v123, %v118
  %v128 = vmul.f32 %v126, %v118
  %v129 = vsub.f32 %v99, %v127
  %v130 = vsub.f32 %v100, %v128
  %v131 = vmul.f32 %v101, %v118
  %v132 = vmul.f32 %v102, %v118
  %v133 = vsel %vm43, %v131, 0.0
  %134 = vadd.xlane.f32.xlu0 %v133
  %v135 = vpop.xlane.xlu0 %134
  %v136 = vsel %vm47, %v132, 0.0
  %137 = vadd.xlane.f32.xlu0 %v136
  %v138 = vpop.xlane.xlu0 %137
  %v139 = vmul.f32 %v135, %v118
  %v140 = vmul.f32 %v138, %v118
  %v141 = vsub.f32 %v101, %v139
  %v142 = vsub.f32 %v102, %v140
  %v143 = vadd.f32 %v129, %v114
  %v144 = vadd.f32 %v130, %v113
  %v145 = vsub.f32 %v143, %v141
  %v146 = vsub.f32 %v144, %v142
  %v147 = vmul.f32 %v145, %v145
  %v148 = vmul.f32 %v146, %v146
  %v149 = vsel %vm43, %v147, 0.0
  %150 = vadd.xlane.f32.xlu0 %v149
  %v151 = vpop.xlane.xlu0 %150
  %v152 = vsel %vm47, %v148, 0.0
  %153 = vadd.xlane.f32.xlu0 %v152
  %v154 = vpop.xlane.xlu0 %153
  %v155 = vrsqrt.pop %v151
  %v156 = vmul.f32 %v151, %v155
  %vm157 = vcmp.eq.f32.partialorder %v151, inf
  %v158 = vsel %vm157, %v151, %v156
  %vm159 = vcmp.eq.f32.partialorder %v151, 0.0
  %v160 = vand.u32 %v151, 2147483648
  %v161 = vsel %vm159, %v160, %v158
  %v162 = vrsqrt.pop %v154
  %v163 = vmul.f32 %v154, %v162
  %vm164 = vcmp.eq.f32.partialorder %v154, inf
  %v165 = vsel %vm164, %v154, %v163
  %vm166 = vcmp.eq.f32.partialorder %v154, 0.0
  %v167 = vand.u32 %v154, 2147483648
  %v168 = vsel %vm166, %v167, %v165
  %v169 = vsub.f32 0.0, %v161
  %v170 = vsub.f32 0.0, %v168
  %171 = vst.msk [vmem:[%s5 + $0xe] sm:$0xff] %vm95, %v169
  %172 = vst.msk [vmem:[%s5 + $0x16] sm:$0x3f] %vm97, %v170
  // Predicated region
  $region22: #{metar_forward.5} parent=0 // pred_check
    _
  $region23: #{metar_forward.5} parent=0 // pred_check_branch
    %174 = sbr.rel (0) target = $region25
  $region24: #{metar_forward.5} parent=0 // pred_region
    _
  $region25: #{metar_forward.5} parent=0 // pred_fallthru
    _
  // Predicated region
  $region26: #{metar_forward.5} parent=0 // pred_check
    _
  $region27: #{metar_forward.5} parent=0 // pred_check_branch
    %176 = sbr.rel (0) target = $region29
  $region28: #{metar_forward.5} parent=0 // pred_region
    _
  $region29: #{metar_forward.5} parent=0 // pred_fallthru
    _

// kernel: metar_forward.3
$region0: #{metar_forward.3}
  #allocation0 [shape = 'u32[]', space=smem, size = 0x4, offset = 0x4, fixed_abs, tag = 'smem constant byte address 0x4 - core index']
  #allocation1 [shape = 'u32[144,128]{1,0:T(1,128)}', space=vmem, size = 0x12000, scoped, tag = 'internal scratch']
  #allocation2 [shape = 'f32[1,1]{1,0:T(1,128)S(1)}', space=vmem, size = 0x200, scoped, tag = 'scoped memory for metar_forward.3']
  #allocation3 [shape = 'f32[1,1]{1,0:T(1,128)S(1)}', space=vmem, size = 0x200, scoped, tag = 'scoped memory for metar_forward.3']
  %s0 = inlined_call_operand.vmem [shape: s32[96,1], index: 0, kind: input, shape index: {}]
  %s1 = inlined_call_operand.vmem [shape: s32[96,1], index: 1, kind: input, shape index: {}]
  %s2 = inlined_call_operand.vmem [shape: s32[12,1], index: 2, kind: input, shape index: {}]
  %s3 = inlined_call_operand.vmem [shape: f32[21,32], index: 3, kind: input, shape index: {}]
  %s4 = inlined_call_operand.vmem [shape: f32[64,32], index: 4, kind: input, shape index: {}]
  %s5 = inlined_call_operand.vmem [shape: f32[1,32], index: 5, kind: input, shape index: {}]
  %s6 = inlined_call_operand.vmem [shape: f32[1,32], index: 6, kind: input, shape index: {}]
  %s7 = inlined_call_operand.<no memory space> [shape: f32[1,1], index: 7, kind: input, shape index: {}]
  %s8 = inlined_call_operand.vmem [shape: f32[1,32], index: 8, kind: input, shape index: {}]
  %s9 = inlined_call_operand.<no memory space> [shape: f32[1,1], index: 9, kind: input, shape index: {}]
  %s10 = inlined_call_operand.vmem [shape: f32[12,32], index: 10, kind: output, shape index: {}]
  %s11 = sld [smem:[#allocation0]]
  $region50: #{metar_forward.3} parent=0
    _
  %s13 = ssub.s32 1, %s11
  %s14 = scalar_select 0, %s13, %s11
  %v15 = vstv %s7
  %16 = vst [vmem:[#allocation2] sm:$0x1] %v15
  %v17 = vstv %s9
  %18 = vst [vmem:[#allocation3] sm:$0x1] %v17
  // Predicated region
  $region2: #{metar_forward.3} parent=0 // pred_check
    _
  $region3: #{metar_forward.3} parent=0 // pred_check_branch
    %20 = sbr.rel (0) target = $region5
  $region4: #{metar_forward.3} parent=0 // pred_region
    _
  $region5: #{metar_forward.3} parent=0 // pred_fallthru
    _
  // Predicated region
  $region6: #{metar_forward.3} parent=0 // pred_check
    _
  $region7: #{metar_forward.3} parent=0 // pred_check_branch
    %22 = sbr.rel (0) target = $region9
  $region8: #{metar_forward.3} parent=0 // pred_region
    _
  $region9: #{metar_forward.3} parent=0 // pred_fallthru
    _
  // Predicated region
  $region10: #{metar_forward.3} parent=0 // pred_check
    _
  $region11: #{metar_forward.3} parent=0 // pred_check_branch
    %24 = sbr.rel (0) target = $region13
  $region12: #{metar_forward.3} parent=0 // pred_region
    _
  $region13: #{metar_forward.3} parent=0 // pred_fallthru
    _
  // Predicated region
  $region14: #{metar_forward.3} parent=0 // pred_check
    _
  $region15: #{metar_forward.3} parent=0 // pred_check_branch
    %26 = sbr.rel (0) target = $region17
  $region16: #{metar_forward.3} parent=0 // pred_region
    _
  $region17: #{metar_forward.3} parent=0 // pred_fallthru
    _
  // Predicated region
  $region18: #{metar_forward.3} parent=0 // pred_check
    _
  $region19: #{metar_forward.3} parent=0 // pred_check_branch
    %28 = sbr.rel (0) target = $region21
  $region20: #{metar_forward.3} parent=0 // pred_region
    _
  $region21: #{metar_forward.3} parent=0 // pred_fallthru
    _
  // Predicated region
  $region22: #{metar_forward.3} parent=0 // pred_check
    _
  $region23: #{metar_forward.3} parent=0 // pred_check_branch
    %30 = sbr.rel (0) target = $region25
  $region24: #{metar_forward.3} parent=0 // pred_region
    _
  $region25: #{metar_forward.3} parent=0 // pred_fallthru
    _
  // Predicated region
  $region26: #{metar_forward.3} parent=0 // pred_check
    _
  $region27: #{metar_forward.3} parent=0 // pred_check_branch
    %32 = sbr.rel (0) target = $region29
  $region28: #{metar_forward.3} parent=0 // pred_region
    _
  $region29: #{metar_forward.3} parent=0 // pred_fallthru
    _
  // Predicated region
  $region30: #{metar_forward.3} parent=0 // pred_check
    _
  $region31: #{metar_forward.3} parent=0 // pred_check_branch
    %34 = sbr.rel (0) target = $region33
  $region32: #{metar_forward.3} parent=0 // pred_region
    _
  $region33: #{metar_forward.3} parent=0 // pred_fallthru
    _
  // Predicated region
  $region34: #{metar_forward.3} parent=0 // pred_check
    _
  $region35: #{metar_forward.3} parent=0 // pred_check_branch
    %36 = sbr.rel (0) target = $region37
  $region36: #{metar_forward.3} parent=0 // pred_region
    _
  $region37: #{metar_forward.3} parent=0 // pred_fallthru
    _
  // Predicated region
  $region38: #{metar_forward.3} parent=0 // pred_check
    _
  $region39: #{metar_forward.3} parent=0 // pred_check_branch
    %38 = sbr.rel (0) target = $region41
  $region40: #{metar_forward.3} parent=0 // pred_region
    _
  $region41: #{metar_forward.3} parent=0 // pred_fallthru
    _
  %v39 = vld [vmem:[%s3] sm:$0xff]
  %v40 = vld [vmem:[%s3 + $0x8] sm:$0xff]
  %v41 = vld [vmem:[%s3 + $0x10] sm:$0x1f]
  %v42 = vlaneseq
  %v43 = vand.u32 %v42, 127
  %v44 = vld [vmem:[%s0] sm:$0xff]
  %v45 = vld [vmem:[%s0 + $0x8] sm:$0xff]
  %v46 = vld [vmem:[%s0 + $0x10] sm:$0xff]
  %v47 = vld [vmem:[%s0 + $0x18] sm:$0xff]
  %v48 = vld [vmem:[%s0 + $0x20] sm:$0xff]
  %v49 = vld [vmem:[%s0 + $0x28] sm:$0xff]
  %v50 = vld [vmem:[%s0 + $0x30] sm:$0xff]
  %v51 = vld [vmem:[%s0 + $0x38] sm:$0xff]
  %v52 = vld [vmem:[%s0 + $0x40] sm:$0xff]
  %v53 = vld [vmem:[%s0 + $0x48] sm:$0xff]
  %v54 = vld [vmem:[%s0 + $0x50] sm:$0xff]
  %v55 = vld [vmem:[%s0 + $0x58] sm:$0xff]
  %56 = vset.pattern.permute.xlu0 0
  %57 = vperm.xlu0 %56, %v44
  %v58 = vpop.permute.xlu0 %57
  %59 = vset.pattern.permute.xlu0 0
  %60 = vperm.xlu0 %59, %v45
  %v61 = vpop.permute.xlu0 %60
  %62 = vset.pattern.permute.xlu0 0
  %63 = vperm.xlu0 %62, %v46
  %v64 = vpop.permute.xlu0 %63
  %65 = vset.pattern.permute.xlu0 0
  %66 = vperm.xlu0 %65, %v47
  %v67 = vpop.permute.xlu0 %66
  %68 = vset.pattern.permute.xlu0 0
  %69 = vperm.xlu0 %68, %v48
  %v70 = vpop.permute.xlu0 %69
  %71 = vset.pattern.permute.xlu0 0
  %72 = vperm.xlu0 %71, %v49
  %v73 = vpop.permute.xlu0 %72
  %74 = vset.pattern.permute.xlu0 0
  %75 = vperm.xlu0 %74, %v50
  %v76 = vpop.permute.xlu0 %75
  %77 = vset.pattern.permute.xlu0 0
  %78 = vperm.xlu0 %77, %v51
  %v79 = vpop.permute.xlu0 %78
  %80 = vset.pattern.permute.xlu0 0
  %81 = vperm.xlu0 %80, %v52
  %v82 = vpop.permute.xlu0 %81
  %83 = vset.pattern.permute.xlu0 0
  %84 = vperm.xlu0 %83, %v53
  %v85 = vpop.permute.xlu0 %84
  %86 = vset.pattern.permute.xlu0 0
  %87 = vperm.xlu0 %86, %v54
  %v88 = vpop.permute.xlu0 %87
  %89 = vset.pattern.permute.xlu0 0
  %90 = vperm.xlu0 %89, %v55
  %v91 = vpop.permute.xlu0 %90
  %vm92 = vcmp.eq.s32.totalorder %v58, %v43
  %vm93 = vcmp.eq.s32.totalorder %v61, %v43
  %vm94 = vcmp.eq.s32.totalorder %v64, %v43
  %vm95 = vcmp.eq.s32.totalorder %v67, %v43
  %vm96 = vcmp.eq.s32.totalorder %v70, %v43
  %vm97 = vcmp.eq.s32.totalorder %v73, %v43
  %vm98 = vcmp.eq.s32.totalorder %v76, %v43
  %vm99 = vcmp.eq.s32.totalorder %v79, %v43
  %vm100 = vcmp.eq.s32.totalorder %v82, %v43
  %vm101 = vcmp.eq.s32.totalorder %v85, %v43
  %vm102 = vcmp.eq.s32.totalorder %v88, %v43
  %vm103 = vcmp.eq.s32.totalorder %v91, %v43
  %v104 = vsel %vm92, 1, 0
  %v105 = vsel %vm93, 1, 0
  %v106 = vsel %vm94, 1, 0
  %v107 = vsel %vm95, 1, 0
  %v108 = vsel %vm96, 1, 0
  %v109 = vsel %vm97, 1, 0
  %v110 = vsel %vm98, 1, 0
  %v111 = vsel %vm99, 1, 0
  %v112 = vsel %vm100, 1, 0
  %v113 = vsel %vm101, 1, 0
  %v114 = vsel %vm102, 1, 0
  %v115 = vsel %vm103, 1, 0
  %v116 = vcvt.s32.f32 %v104
  %v117 = vcvt.s32.f32 %v105
  %v118 = vcvt.s32.f32 %v106
  %v119 = vcvt.s32.f32 %v107
  %v120 = vcvt.s32.f32 %v108
  %v121 = vcvt.s32.f32 %v109
  %v122 = vcvt.s32.f32 %v110
  %v123 = vcvt.s32.f32 %v111
  %v124 = vcvt.s32.f32 %v112
  %v125 = vcvt.s32.f32 %v113
  %v126 = vcvt.s32.f32 %v114
  %v127 = vcvt.s32.f32 %v115
  %vm128 = vcmask 171008
  %v130 = vsel %vm128, %v116, 0
  %v133 = vsel %vm128, %v117, 0
  %v136 = vsel %vm128, %v118, 0
  %v139 = vsel %vm128, %v119, 0
  %v142 = vsel %vm128, %v120, 0
  %v145 = vsel %vm128, %v121, 0
  %v148 = vsel %vm128, %v122, 0
  %v151 = vsel %vm128, %v123, 0
  %v154 = vsel %vm128, %v124, 0
  %v157 = vsel %vm128, %v125, 0
  %v160 = vsel %vm128, %v126, 0
  %v163 = vsel %vm128, %v127, 0
  %vm165 = vcmask 1044480
  %v167 = vsel %vm165, %v41, 0
  %169 = vmatprep.subr.mxu0 0.0
  %170 = vmatpush1.msra.mxu0 0.0
  %171 = vmatprep.subr.mxu0 0.0
  %172 = vmatpush1.msra.mxu0 0.0
  %173 = vmatprep.subr.mxu0 0.0
  %174 = vmatpush1.msra.mxu0 0.0
  %175 = vmatprep.subr.mxu0 0.0
  %176 = vmatpush1.msra.mxu0 0.0
  %177 = vmatprep.subr.mxu0 0.0
  %178 = vmatpush1.msra.mxu0 0.0
  %179 = vmatprep.subr.mxu0 0.0
  %180 = vmatpush1.msra.mxu0 0.0
  %181 = vmatprep.subr.mxu0 0.0
  %182 = vmatpush1.msra.mxu0 0.0
  %183 = vmatprep.subr.mxu0 0.0
  %184 = vmatpush1.msra.mxu0 0.0
  %185 = vmatprep.subr.mxu0 0.0
  %186 = vmatpush1.msra.mxu0 0.0
  %187 = vmatprep.subr.mxu0 0.0
  %188 = vmatpush1.msra.mxu0 0.0
  %189 = vmatprep.subr.mxu0 0.0
  %190 = vmatpush1.msra.mxu0 0.0
  %191 = vmatprep.subr.mxu0 0.0
  %192 = vmatpush1.msra.mxu0 0.0
  %193 = vmatprep.subr.mxu0 0.0
  %194 = vmatpush1.msra.mxu0 0.0
  %195 = vmatprep.subr.mxu0 0.0
  %196 = vmatpush1.msra.mxu0 %v167
  %197 = vmatprep.subr.mxu0 0.0
  %198 = vmatpush1.msra.mxu0 %v40
  %199 = vmatprep.subr.mxu0 0.0
  %200 = vmatpush1.msra.mxu0 %v39
  %201 = vmatprep.subr.mxu0 0.0
  %202 = vmatpush2.msra.mxu0 0.0
  %203 = vmatprep.subr.mxu0 0.0
  %204 = vmatpush2.msra.mxu0 0.0
  %205 = vmatprep.subr.mxu0 0.0
  %206 = vmatpush2.msra.mxu0 0.0
  %207 = vmatprep.subr.mxu0 0.0
  %208 = vmatpush2.msra.mxu0 0.0
  %209 = vmatprep.subr.mxu0 0.0
  %210 = vmatpush2.msra.mxu0 0.0
  %211 = vmatprep.subr.mxu0 0.0
  %212 = vmatpush2.msra.mxu0 0.0
  %213 = vmatprep.subr.mxu0 0.0
  %214 = vmatpush2.msra.mxu0 0.0
  %215 = vmatprep.subr.mxu0 0.0
  %216 = vmatpush2.msra.mxu0 0.0
  %217 = vmatprep.subr.mxu0 0.0
  %218 = vmatpush2.msra.mxu0 0.0
  %219 = vmatprep.subr.mxu0 0.0
  %220 = vmatpush2.msra.mxu0 0.0
  %221 = vmatprep.subr.mxu0 0.0
  %222 = vmatpush2.msra.mxu0 0.0
  %223 = vmatprep.subr.mxu0 0.0
  %224 = vmatpush2.msra.mxu0 0.0
  %225 = vmatprep.subr.mxu0 0.0
  %226 = vmatpush2.msra.mxu0 0.0
  %227 = vmatprep.subr.mxu0 0.0
  %228 = vmatpush2.msra.mxu0 0.0
  %229 = vmatprep.subr.mxu0 0.0
  %230 = vmatpush2.msra.mxu0 0.0
  %231 = vmatprep.subr.mxu0 0.0
  %232 = vmatpush2.msra.mxu0 0.0
  %233 = vmatprep.mubr.f32.mxu0 0.0
  %234 = vmatmul.mubr.f32.gmra.mxu0 %v130
  %v235 = vpop.f32.mrf.mxu0
  %v236 = vadd.f32 0.0, %v235
  %v237 = vpop.f32.mrf.mxu0
  %238 = vmatprep.mubr.f32.mxu0 0.0
  %239 = vmatmul.mubr.f32.gmra.mxu0 %v133
  %v240 = vpop.f32.mrf.mxu0
  %v241 = vadd.f32 0.0, %v240
  %v242 = vpop.f32.mrf.mxu0
  %243 = vmatprep.mubr.f32.mxu0 0.0
  %244 = vmatmul.mubr.f32.gmra.mxu0 %v136
  %v245 = vpop.f32.mrf.mxu0
  %v246 = vadd.f32 0.0, %v245
  %v247 = vpop.f32.mrf.mxu0
  %248 = vmatprep.mubr.f32.mxu0 0.0
  %249 = vmatmul.mubr.f32.gmra.mxu0 %v139
  %v250 = vpop.f32.mrf.mxu0
  %v251 = vadd.f32 0.0, %v250
  %v252 = vpop.f32.mrf.mxu0
  %253 = vmatprep.mubr.f32.mxu0 0.0
  %254 = vmatmul.mubr.f32.gmra.mxu0 %v142
  %v255 = vpop.f32.mrf.mxu0
  %v256 = vadd.f32 0.0, %v255
  %v257 = vpop.f32.mrf.mxu0
  %258 = vmatprep.mubr.f32.mxu0 0.0
  %259 = vmatmul.mubr.f32.gmra.mxu0 %v145
  %v260 = vpop.f32.mrf.mxu0
  %v261 = vadd.f32 0.0, %v260
  %v262 = vpop.f32.mrf.mxu0
  %263 = vmatprep.mubr.f32.mxu0 0.0
  %264 = vmatmul.mubr.f32.gmra.mxu0 %v148
  %v265 = vpop.f32.mrf.mxu0
  %v266 = vadd.f32 0.0, %v265
  %v267 = vpop.f32.mrf.mxu0
  %268 = vmatprep.mubr.f32.mxu0 0.0
  %269 = vmatmul.mubr.f32.gmra.mxu0 %v151
  %v270 = vpop.f32.mrf.mxu0
  %v271 = vadd.f32 0.0, %v270
  %v272 = vpop.f32.mrf.mxu0
  %273 = vmatprep.mubr.f32.mxu0 0.0
  %274 = vmatmul.mubr.f32.gmra.mxu0 %v154
  %v275 = vpop.f32.mrf.mxu0
  %v276 = vadd.f32 0.0, %v275
  %v277 = vpop.f32.mrf.mxu0
  %278 = vmatprep.mubr.f32.mxu0 0.0
  %279 = vmatmul.mubr.f32.gmra.mxu0 %v157
  %v280 = vpop.f32.mrf.mxu0
  %v281 = vadd.f32 0.0, %v280
  %v282 = vpop.f32.mrf.mxu0
  %283 = vmatprep.mubr.f32.mxu0 0.0
  %284 = vmatmul.mubr.f32.gmra.mxu0 %v160
  %v285 = vpop.f32.mrf.mxu0
  %v286 = vadd.f32 0.0, %v285
  %v287 = vpop.f32.mrf.mxu0
  %288 = vmatprep.mubr.f32.mxu0 0.0
  %289 = vmatmul.mubr.f32.gmra.mxu0 %v163
  %v290 = vpop.f32.mrf.mxu0
  %v291 = vadd.f32 0.0, %v290
  %v292 = vpop.f32.mrf.mxu0
  %293 = vdwg.mxu0
  %v294 = vld [vmem:[%s1] sm:$0xff]
  %v295 = vld [vmem:[%s1 + $0x8] sm:$0xff]
  %v296 = vld [vmem:[%s1 + $0x10] sm:$0xff]
  %v297 = vld [vmem:[%s1 + $0x18] sm:$0xff]
  %v298 = vld [vmem:[%s1 + $0x20] sm:$0xff]
  %v299 = vld [vmem:[%s1 + $0x28] sm:$0xff]
  %v300 = vld [vmem:[%s1 + $0x30] sm:$0xff]
  %v301 = vld [vmem:[%s1 + $0x38] sm:$0xff]
  %v302 = vld [vmem:[%s1 + $0x40] sm:$0xff]
  %v303 = vld [vmem:[%s1 + $0x48] sm:$0xff]
  %v304 = vld [vmem:[%s1 + $0x50] sm:$0xff]
  %v305 = vld [vmem:[%s1 + $0x58] sm:$0xff]
  %306 = vset.pattern.permute.xlu0 0
  %307 = vperm.xlu0 %306, %v294
  %v308 = vpop.permute.xlu0 %307
  %309 = vset.pattern.permute.xlu0 0
  %310 = vperm.xlu0 %309, %v295
  %v311 = vpop.permute.xlu0 %310
  %312 = vset.pattern.permute.xlu0 0
  %313 = vperm.xlu0 %312, %v296
  %v314 = vpop.permute.xlu0 %313
  %315 = vset.pattern.permute.xlu0 0
  %316 = vperm.xlu0 %315, %v297
  %v317 = vpop.permute.xlu0 %316
  %318 = vset.pattern.permute.xlu0 0
  %319 = vperm.xlu0 %318, %v298
  %v320 = vpop.permute.xlu0 %319
  %321 = vset.pattern.permute.xlu0 0
  %322 = vperm.xlu0 %321, %v299
  %v323 = vpop.permute.xlu0 %322
  %324 = vset.pattern.permute.xlu0 0
  %325 = vperm.xlu0 %324, %v300
  %v326 = vpop.permute.xlu0 %325
  %327 = vset.pattern.permute.xlu0 0
  %328 = vperm.xlu0 %327, %v301
  %v329 = vpop.permute.xlu0 %328
  %330 = vset.pattern.permute.xlu0 0
  %331 = vperm.xlu0 %330, %v302
  %v332 = vpop.permute.xlu0 %331
  %333 = vset.pattern.permute.xlu0 0
  %334 = vperm.xlu0 %333, %v303
  %v335 = vpop.permute.xlu0 %334
  %336 = vset.pattern.permute.xlu0 0
  %337 = vperm.xlu0 %336, %v304
  %v338 = vpop.permute.xlu0 %337
  %339 = vset.pattern.permute.xlu0 0
  %340 = vperm.xlu0 %339, %v305
  %v341 = vpop.permute.xlu0 %340
  %vm342 = vcmp.eq.s32.totalorder %v308, %v43
  %vm343 = vcmp.eq.s32.totalorder %v311, %v43
  %vm344 = vcmp.eq.s32.totalorder %v314, %v43
  %vm345 = vcmp.eq.s32.totalorder %v317, %v43
  %vm346 = vcmp.eq.s32.totalorder %v320, %v43
  %vm347 = vcmp.eq.s32.totalorder %v323, %v43
  %vm348 = vcmp.eq.s32.totalorder %v326, %v43
  %vm349 = vcmp.eq.s32.totalorder %v329, %v43
  %vm350 = vcmp.eq.s32.totalorder %v332, %v43
  %vm351 = vcmp.eq.s32.totalorder %v335, %v43
  %vm352 = vcmp.eq.s32.totalorder %v338, %v43
  %vm353 = vcmp.eq.s32.totalorder %v341, %v43
  %v354 = vsel %vm342, 1, 0
  %v355 = vsel %vm343, 1, 0
  %v356 = vsel %vm344, 1, 0
  %v357 = vsel %vm345, 1, 0
  %v358 = vsel %vm346, 1, 0
  %v359 = vsel %vm347, 1, 0
  %v360 = vsel %vm348, 1, 0
  %v361 = vsel %vm349, 1, 0
  %v362 = vsel %vm350, 1, 0
  %v363 = vsel %vm351, 1, 0
  %v364 = vsel %vm352, 1, 0
  %v365 = vsel %vm353, 1, 0
  %v366 = vcvt.s32.f32 %v354
  %v367 = vcvt.s32.f32 %v355
  %v368 = vcvt.s32.f32 %v356
  %v369 = vcvt.s32.f32 %v357
  %v370 = vcvt.s32.f32 %v358
  %v371 = vcvt.s32.f32 %v359
  %v372 = vcvt.s32.f32 %v360
  %v373 = vcvt.s32.f32 %v361
  %v374 = vcvt.s32.f32 %v362
  %v375 = vcvt.s32.f32 %v363
  %v376 = vcvt.s32.f32 %v364
  %v377 = vcvt.s32.f32 %v365
  %v379 = vsel %vm128, %v366, 0
  %v382 = vsel %vm128, %v367, 0
  %v385 = vsel %vm128, %v368, 0
  %v388 = vsel %vm128, %v369, 0
  %v391 = vsel %vm128, %v370, 0
  %v394 = vsel %vm128, %v371, 0
  %v397 = vsel %vm128, %v372, 0
  %v400 = vsel %vm128, %v373, 0
  %v403 = vsel %vm128, %v374, 0
  %v406 = vsel %vm128, %v375, 0
  %v409 = vsel %vm128, %v376, 0
  %v412 = vsel %vm128, %v377, 0
  %414 = vmatprep.subr.mxu0 0.0
  %415 = vmatpush1.msra.mxu0 0.0
  %416 = vmatprep.subr.mxu0 0.0
  %417 = vmatpush1.msra.mxu0 0.0
  %418 = vmatprep.subr.mxu0 0.0
  %419 = vmatpush1.msra.mxu0 0.0
  %420 = vmatprep.subr.mxu0 0.0
  %421 = vmatpush1.msra.mxu0 0.0
  %422 = vmatprep.subr.mxu0 0.0
  %423 = vmatpush1.msra.mxu0 0.0
  %424 = vmatprep.subr.mxu0 0.0
  %425 = vmatpush1.msra.mxu0 0.0
  %426 = vmatprep.subr.mxu0 0.0
  %427 = vmatpush1.msra.mxu0 0.0
  %428 = vmatprep.subr.mxu0 0.0
  %429 = vmatpush1.msra.mxu0 0.0
  %430 = vmatprep.subr.mxu0 0.0
  %431 = vmatpush1.msra.mxu0 0.0
  %432 = vmatprep.subr.mxu0 0.0
  %433 = vmatpush1.msra.mxu0 0.0
  %434 = vmatprep.subr.mxu0 0.0
  %435 = vmatpush1.msra.mxu0 0.0
  %436 = vmatprep.subr.mxu0 0.0
  %437 = vmatpush1.msra.mxu0 0.0
  %438 = vmatprep.subr.mxu0 0.0
  %439 = vmatpush1.msra.mxu0 0.0
  %440 = vmatprep.subr.mxu0 0.0
  %441 = vmatpush1.msra.mxu0 %v167
  %442 = vmatprep.subr.mxu0 0.0
  %443 = vmatpush1.msra.mxu0 %v40
  %444 = vmatprep.subr.mxu0 0.0
  %445 = vmatpush1.msra.mxu0 %v39
  %446 = vmatprep.subr.mxu0 0.0
  %447 = vmatpush2.msra.mxu0 0.0
  %448 = vmatprep.subr.mxu0 0.0
  %449 = vmatpush2.msra.mxu0 0.0
  %450 = vmatprep.subr.mxu0 0.0
  %451 = vmatpush2.msra.mxu0 0.0
  %452 = vmatprep.subr.mxu0 0.0
  %453 = vmatpush2.msra.mxu0 0.0
  %454 = vmatprep.subr.mxu0 0.0
  %455 = vmatpush2.msra.mxu0 0.0
  %456 = vmatprep.subr.mxu0 0.0
  %457 = vmatpush2.msra.mxu0 0.0
  %458 = vmatprep.subr.mxu0 0.0
  %459 = vmatpush2.msra.mxu0 0.0
  %460 = vmatprep.subr.mxu0 0.0
  %461 = vmatpush2.msra.mxu0 0.0
  %462 = vmatprep.subr.mxu0 0.0
  %463 = vmatpush2.msra.mxu0 0.0
  %464 = vmatprep.subr.mxu0 0.0
  %465 = vmatpush2.msra.mxu0 0.0
  %466 = vmatprep.subr.mxu0 0.0
  %467 = vmatpush2.msra.mxu0 0.0
  %468 = vmatprep.subr.mxu0 0.0
  %469 = vmatpush2.msra.mxu0 0.0
  %470 = vmatprep.subr.mxu0 0.0
  %471 = vmatpush2.msra.mxu0 0.0
  %472 = vmatprep.subr.mxu0 0.0
  %473 = vmatpush2.msra.mxu0 0.0
  %474 = vmatprep.subr.mxu0 0.0
  %475 = vmatpush2.msra.mxu0 0.0
  %476 = vmatprep.subr.mxu0 0.0
  %477 = vmatpush2.msra.mxu0 0.0
  %478 = vmatprep.mubr.f32.mxu0 0.0
  %479 = vmatmul.mubr.f32.gmra.mxu0 %v379
  %v480 = vpop.f32.mrf.mxu0
  %v481 = vadd.f32 0.0, %v480
  %v482 = vpop.f32.mrf.mxu0
  %483 = vmatprep.mubr.f32.mxu0 0.0
  %484 = vmatmul.mubr.f32.gmra.mxu0 %v382
  %v485 = vpop.f32.mrf.mxu0
  %v486 = vadd.f32 0.0, %v485
  %v487 = vpop.f32.mrf.mxu0
  %488 = vmatprep.mubr.f32.mxu0 0.0
  %489 = vmatmul.mubr.f32.gmra.mxu0 %v385
  %v490 = vpop.f32.mrf.mxu0
  %v491 = vadd.f32 0.0, %v490
  %v492 = vpop.f32.mrf.mxu0
  %493 = vmatprep.mubr.f32.mxu0 0.0
  %494 = vmatmul.mubr.f32.gmra.mxu0 %v388
  %v495 = vpop.f32.mrf.mxu0
  %v496 = vadd.f32 0.0, %v495
  %v497 = vpop.f32.mrf.mxu0
  %498 = vmatprep.mubr.f32.mxu0 0.0
  %499 = vmatmul.mubr.f32.gmra.mxu0 %v391
  %v500 = vpop.f32.mrf.mxu0
  %v501 = vadd.f32 0.0, %v500
  %v502 = vpop.f32.mrf.mxu0
  %503 = vmatprep.mubr.f32.mxu0 0.0
  %504 = vmatmul.mubr.f32.gmra.mxu0 %v394
  %v505 = vpop.f32.mrf.mxu0
  %v506 = vadd.f32 0.0, %v505
  %v507 = vpop.f32.mrf.mxu0
  %508 = vmatprep.mubr.f32.mxu0 0.0
  %509 = vmatmul.mubr.f32.gmra.mxu0 %v397
  %v510 = vpop.f32.mrf.mxu0
  %v511 = vadd.f32 0.0, %v510
  %v512 = vpop.f32.mrf.mxu0
  %513 = vmatprep.mubr.f32.mxu0 0.0
  %514 = vmatmul.mubr.f32.gmra.mxu0 %v400
  %v515 = vpop.f32.mrf.mxu0
  %v516 = vadd.f32 0.0, %v515
  %v517 = vpop.f32.mrf.mxu0
  %518 = vmatprep.mubr.f32.mxu0 0.0
  %519 = vmatmul.mubr.f32.gmra.mxu0 %v403
  %v520 = vpop.f32.mrf.mxu0
  %v521 = vadd.f32 0.0, %v520
  %v522 = vpop.f32.mrf.mxu0
  %523 = vmatprep.mubr.f32.mxu0 0.0
  %524 = vmatmul.mubr.f32.gmra.mxu0 %v406
  %v525 = vpop.f32.mrf.mxu0
  %v526 = vadd.f32 0.0, %v525
  %v527 = vpop.f32.mrf.mxu0
  %528 = vmatprep.mubr.f32.mxu0 0.0
  %529 = vmatmul.mubr.f32.gmra.mxu0 %v409
  %v530 = vpop.f32.mrf.mxu0
  %v531 = vadd.f32 0.0, %v530
  %v532 = vpop.f32.mrf.mxu0
  %533 = vmatprep.mubr.f32.mxu0 0.0
  %534 = vmatmul.mubr.f32.gmra.mxu0 %v412
  %v535 = vpop.f32.mrf.mxu0
  %v536 = vadd.f32 0.0, %v535
  %v537 = vpop.f32.mrf.mxu0
  %538 = vdwg.mxu0
  %v539 = vld [vmem:[%s2] sm:$0xff]
  %v540 = vld [vmem:[%s2 + $0x8] sm:$0xf]
  %541 = vset.pattern.permute.xlu0 0
  %542 = vperm.xlu0 %541, %v539
  %v543 = vpop.permute.xlu0 %542
  %544 = vset.pattern.permute.xlu0 0
  %545 = vperm.xlu0 %544, %v540
  %v546 = vpop.permute.xlu0 %545
  %vm547 = vcmp.eq.s32.totalorder %v543, %v43
  %vm548 = vcmp.eq.s32.totalorder %v546, %v43
  %v549 = vsel %vm547, 1, 0
  %v550 = vsel %vm548, 1, 0
  %v551 = vcvt.s32.f32 %v549
  %v552 = vcvt.s32.f32 %v550
  %v554 = vsel %vm128, %v551, 0
  %v557 = vsel %vm128, %v552, 0
  %559 = vmatprep.subr.mxu0 0.0
  %560 = vmatpush1.msra.mxu0 0.0
  %561 = vmatprep.subr.mxu0 0.0
  %562 = vmatpush1.msra.mxu0 0.0
  %563 = vmatprep.subr.mxu0 0.0
  %564 = vmatpush1.msra.mxu0 0.0
  %565 = vmatprep.subr.mxu0 0.0
  %566 = vmatpush1.msra.mxu0 0.0
  %567 = vmatprep.subr.mxu0 0.0
  %568 = vmatpush1.msra.mxu0 0.0
  %569 = vmatprep.subr.mxu0 0.0
  %570 = vmatpush1.msra.mxu0 0.0
  %571 = vmatprep.subr.mxu0 0.0
  %572 = vmatpush1.msra.mxu0 0.0
  %573 = vmatprep.subr.mxu0 0.0
  %574 = vmatpush1.msra.mxu0 0.0
  %575 = vmatprep.subr.mxu0 0.0
  %576 = vmatpush1.msra.mxu0 0.0
  %577 = vmatprep.subr.mxu0 0.0
  %578 = vmatpush1.msra.mxu0 0.0
  %579 = vmatprep.subr.mxu0 0.0
  %580 = vmatpush1.msra.mxu0 0.0
  %581 = vmatprep.subr.mxu0 0.0
  %582 = vmatpush1.msra.mxu0 0.0
  %583 = vmatprep.subr.mxu0 0.0
  %584 = vmatpush1.msra.mxu0 0.0
  %585 = vmatprep.subr.mxu0 0.0
  %586 = vmatpush1.msra.mxu0 %v167
  %587 = vmatprep.subr.mxu0 0.0
  %588 = vmatpush1.msra.mxu0 %v40
  %589 = vmatprep.subr.mxu0 0.0
  %590 = vmatpush1.msra.mxu0 %v39
  %591 = vmatprep.subr.mxu0 0.0
  %592 = vmatpush2.msra.mxu0 0.0
  %593 = vmatprep.subr.mxu0 0.0
  %594 = vmatpush2.msra.mxu0 0.0
  %595 = vmatprep.subr.mxu0 0.0
  %596 = vmatpush2.msra.mxu0 0.0
  %597 = vmatprep.subr.mxu0 0.0
  %598 = vmatpush2.msra.mxu0 0.0
  %599 = vmatprep.subr.mxu0 0.0
  %600 = vmatpush2.msra.mxu0 0.0
  %601 = vmatprep.subr.mxu0 0.0
  %602 = vmatpush2.msra.mxu0 0.0
  %603 = vmatprep.subr.mxu0 0.0
  %604 = vmatpush2.msra.mxu0 0.0
  %605 = vmatprep.subr.mxu0 0.0
  %606 = vmatpush2.msra.mxu0 0.0
  %607 = vmatprep.subr.mxu0 0.0
  %608 = vmatpush2.msra.mxu0 0.0
  %609 = vmatprep.subr.mxu0 0.0
  %610 = vmatpush2.msra.mxu0 0.0
  %611 = vmatprep.subr.mxu0 0.0
  %612 = vmatpush2.msra.mxu0 0.0
  %613 = vmatprep.subr.mxu0 0.0
  %614 = vmatpush2.msra.mxu0 0.0
  %615 = vmatprep.subr.mxu0 0.0
  %616 = vmatpush2.msra.mxu0 0.0
  %617 = vmatprep.subr.mxu0 0.0
  %618 = vmatpush2.msra.mxu0 0.0
  %619 = vmatprep.subr.mxu0 0.0
  %620 = vmatpush2.msra.mxu0 0.0
  %621 = vmatprep.subr.mxu0 0.0
  %622 = vmatpush2.msra.mxu0 0.0
  %623 = vmatprep.mubr.f32.mxu0 0.0
  %624 = vmatmul.mubr.f32.gmra.mxu0 %v554
  %v625 = vpop.f32.mrf.mxu0
  %v626 = vadd.f32 0.0, %v625
  %v627 = vpop.f32.mrf.mxu0
  %628 = vmatprep.mubr.f32.mxu0 0.0
  %629 = vmatmul.mubr.f32.gmra.mxu0 %v557
  %v630 = vpop.f32.mrf.mxu0
  %v631 = vadd.f32 0.0, %v630
  %v632 = vpop.f32.mrf.mxu0
  %633 = vdwg.mxu0
  %646 = vrot.lane.b32.xlu0 %v481, 32
  %v647 = vpop.permute.xlu0 %646
  %648 = vrot.lane.b32.xlu0 %v486, 32
  %v649 = vpop.permute.xlu0 %648
  %650 = vrot.lane.b32.xlu0 %v491, 32
  %v651 = vpop.permute.xlu0 %650
  %652 = vrot.lane.b32.xlu0 %v496, 32
  %v653 = vpop.permute.xlu0 %652
  %654 = vrot.lane.b32.xlu0 %v501, 32
  %v655 = vpop.permute.xlu0 %654
  %656 = vrot.lane.b32.xlu0 %v506, 32
  %v657 = vpop.permute.xlu0 %656
  %658 = vrot.lane.b32.xlu0 %v511, 32
  %v659 = vpop.permute.xlu0 %658
  %660 = vrot.lane.b32.xlu0 %v516, 32
  %v661 = vpop.permute.xlu0 %660
  %662 = vrot.lane.b32.xlu0 %v521, 32
  %v663 = vpop.permute.xlu0 %662
  %664 = vrot.lane.b32.xlu0 %v526, 32
  %v665 = vpop.permute.xlu0 %664
  %666 = vrot.lane.b32.xlu0 %v531, 32
  %v667 = vpop.permute.xlu0 %666
  %668 = vrot.lane.b32.xlu0 %v536, 32
  %v669 = vpop.permute.xlu0 %668
  %vm682 = vcmask 261120
  %v683 = vsel %vm682, %v236, %v647
  %v684 = vsel %vm682, %v241, %v649
  %v685 = vsel %vm682, %v246, %v651
  %v686 = vsel %vm682, %v251, %v653
  %v687 = vsel %vm682, %v256, %v655
  %v688 = vsel %vm682, %v261, %v657
  %v689 = vsel %vm682, %v266, %v659
  %v690 = vsel %vm682, %v271, %v661
  %v691 = vsel %vm682, %v276, %v663
  %v692 = vsel %vm682, %v281, %v665
  %v693 = vsel %vm682, %v286, %v667
  %v694 = vsel %vm682, %v291, %v669
  %v695 = vld [vmem:[%s4] sm:$0xff]
  %v696 = vld [vmem:[%s4 + $0x8] sm:$0xff]
  %v697 = vld [vmem:[%s4 + $0x10] sm:$0xff]
  %v698 = vld [vmem:[%s4 + $0x18] sm:$0xff]
  %v699 = vld [vmem:[%s4 + $0x20] sm:$0xff]
  %v700 = vld [vmem:[%s4 + $0x28] sm:$0xff]
  %v701 = vld [vmem:[%s4 + $0x30] sm:$0xff]
  %v702 = vld [vmem:[%s4 + $0x38] sm:$0xff]
  %v703 = vld [vmem:[%s5] sm:$0x1]
  %v705 = vlaneseq
  %v706 = vshrl.u32 %v705, 7
  %v707 = vsub.s32 0, %v706
  %v708 = vrot.slane %v703, %v707
  %vm710 = vcmask 523264
  %v712 = vsel %vm710, %v683, 0
  %v715 = vsel %vm710, %v684, 0
  %v718 = vsel %vm710, %v685, 0
  %v721 = vsel %vm710, %v686, 0
  %v724 = vsel %vm710, %v687, 0
  %v727 = vsel %vm710, %v688, 0
  %v730 = vsel %vm710, %v689, 0
  %v733 = vsel %vm710, %v690, 0
  %v736 = vsel %vm710, %v691, 0
  %v739 = vsel %vm710, %v692, 0
  %v742 = vsel %vm710, %v693, 0
  %v745 = vsel %vm710, %v694, 0
  %747 = vmatprep.subr.mxu0 0.0
  %748 = vmatpush1.msra.mxu0 0.0
  %749 = vmatprep.subr.mxu0 0.0
  %750 = vmatpush1.msra.mxu0 0.0
  %751 = vmatprep.subr.mxu0 0.0
  %752 = vmatpush1.msra.mxu0 0.0
  %753 = vmatprep.subr.mxu0 0.0
  %754 = vmatpush1.msra.mxu0 0.0
  %755 = vmatprep.subr.mxu0 0.0
  %756 = vmatpush1.msra.mxu0 0.0
  %757 = vmatprep.subr.mxu0 0.0
  %758 = vmatpush1.msra.mxu0 0.0
  %759 = vmatprep.subr.mxu0 0.0
  %760 = vmatpush1.msra.mxu0 0.0
  %761 = vmatprep.subr.mxu0 0.0
  %762 = vmatpush1.msra.mxu0 0.0
  %763 = vmatprep.subr.mxu0 0.0
  %764 = vmatpush1.msra.mxu0 %v702
  %765 = vmatprep.subr.mxu0 0.0
  %766 = vmatpush1.msra.mxu0 %v701
  %767 = vmatprep.subr.mxu0 0.0
  %768 = vmatpush1.msra.mxu0 %v700
  %769 = vmatprep.subr.mxu0 0.0
  %770 = vmatpush1.msra.mxu0 %v699
  %771 = vmatprep.subr.mxu0 0.0
  %772 = vmatpush1.msra.mxu0 %v698
  %773 = vmatprep.subr.mxu0 0.0
  %774 = vmatpush1.msra.mxu0 %v697
  %775 = vmatprep.subr.mxu0 0.0
  %776 = vmatpush1.msra.mxu0 %v696
  %777 = vmatprep.subr.mxu0 0.0
  %778 = vmatpush1.msra.mxu0 %v695
  %779 = vmatprep.subr.mxu0 0.0
  %780 = vmatpush2.msra.mxu0 0.0
  %781 = vmatprep.subr.mxu0 0.0
  %782 = vmatpush2.msra.mxu0 0.0
  %783 = vmatprep.subr.mxu0 0.0
  %784 = vmatpush2.msra.mxu0 0.0
  %785 = vmatprep.subr.mxu0 0.0
  %786 = vmatpush2.msra.mxu0 0.0
  %787 = vmatprep.subr.mxu0 0.0
  %788 = vmatpush2.msra.mxu0 0.0
  %789 = vmatprep.subr.mxu0 0.0
  %790 = vmatpush2.msra.mxu0 0.0
  %791 = vmatprep.subr.mxu0 0.0
  %792 = vmatpush2.msra.mxu0 0.0
  %793 = vmatprep.subr.mxu0 0.0
  %794 = vmatpush2.msra.mxu0 0.0
  %795 = vmatprep.subr.mxu0 0.0
  %796 = vmatpush2.msra.mxu0 0.0
  %797 = vmatprep.subr.mxu0 0.0
  %798 = vmatpush2.msra.mxu0 0.0
  %799 = vmatprep.subr.mxu0 0.0
  %800 = vmatpush2.msra.mxu0 0.0
  %801 = vmatprep.subr.mxu0 0.0
  %802 = vmatpush2.msra.mxu0 0.0
  %803 = vmatprep.subr.mxu0 0.0
  %804 = vmatpush2.msra.mxu0 0.0
  %805 = vmatprep.subr.mxu0 0.0
  %806 = vmatpush2.msra.mxu0 0.0
  %807 = vmatprep.subr.mxu0 0.0
  %808 = vmatpush2.msra.mxu0 0.0
  %809 = vmatprep.subr.mxu0 0.0
  %810 = vmatpush2.msra.mxu0 0.0
  %811 = vmatprep.mubr.f32.mxu0 0.0
  %812 = vmatmul.mubr.f32.gmra.mxu0 %v712
  %v813 = vpop.f32.mrf.mxu0
  %v814 = vadd.f32 %v708, %v813
  %v815 = vpop.f32.mrf.mxu0
  %816 = vmatprep.mubr.f32.mxu0 0.0
  %817 = vmatmul.mubr.f32.gmra.mxu0 %v715
  %v818 = vpop.f32.mrf.mxu0
  %v819 = vadd.f32 %v708, %v818
  %v820 = vpop.f32.mrf.mxu0
  %821 = vmatprep.mubr.f32.mxu0 0.0
  %822 = vmatmul.mubr.f32.gmra.mxu0 %v718
  %v823 = vpop.f32.mrf.mxu0
  %v824 = vadd.f32 %v708, %v823
  %v825 = vpop.f32.mrf.mxu0
  %826 = vmatprep.mubr.f32.mxu0 0.0
  %827 = vmatmul.mubr.f32.gmra.mxu0 %v721
  %v828 = vpop.f32.mrf.mxu0
  %v829 = vadd.f32 %v708, %v828
  %v830 = vpop.f32.mrf.mxu0
  %831 = vmatprep.mubr.f32.mxu0 0.0
  %832 = vmatmul.mubr.f32.gmra.mxu0 %v724
  %v833 = vpop.f32.mrf.mxu0
  %v834 = vadd.f32 %v708, %v833
  %v835 = vpop.f32.mrf.mxu0
  %836 = vmatprep.mubr.f32.mxu0 0.0
  %837 = vmatmul.mubr.f32.gmra.mxu0 %v727
  %v838 = vpop.f32.mrf.mxu0
  %v839 = vadd.f32 %v708, %v838
  %v840 = vpop.f32.mrf.mxu0
  %841 = vmatprep.mubr.f32.mxu0 0.0
  %842 = vmatmul.mubr.f32.gmra.mxu0 %v730
  %v843 = vpop.f32.mrf.mxu0
  %v844 = vadd.f32 %v708, %v843
  %v845 = vpop.f32.mrf.mxu0
  %846 = vmatprep.mubr.f32.mxu0 0.0
  %847 = vmatmul.mubr.f32.gmra.mxu0 %v733
  %v848 = vpop.f32.mrf.mxu0
  %v849 = vadd.f32 %v708, %v848
  %v850 = vpop.f32.mrf.mxu0
  %851 = vmatprep.mubr.f32.mxu0 0.0
  %852 = vmatmul.mubr.f32.gmra.mxu0 %v736
  %v853 = vpop.f32.mrf.mxu0
  %v854 = vadd.f32 %v708, %v853
  %v855 = vpop.f32.mrf.mxu0
  %856 = vmatprep.mubr.f32.mxu0 0.0
  %857 = vmatmul.mubr.f32.gmra.mxu0 %v739
  %v858 = vpop.f32.mrf.mxu0
  %v859 = vadd.f32 %v708, %v858
  %v860 = vpop.f32.mrf.mxu0
  %861 = vmatprep.mubr.f32.mxu0 0.0
  %862 = vmatmul.mubr.f32.gmra.mxu0 %v742
  %v863 = vpop.f32.mrf.mxu0
  %v864 = vadd.f32 %v708, %v863
  %v865 = vpop.f32.mrf.mxu0
  %866 = vmatprep.mubr.f32.mxu0 0.0
  %867 = vmatmul.mubr.f32.gmra.mxu0 %v745
  %v868 = vpop.f32.mrf.mxu0
  %v869 = vadd.f32 %v708, %v868
  %v870 = vpop.f32.mrf.mxu0
  %871 = vdwg.mxu0
  %vm872 = vcmp.ge.f32.partialorder %v814, 0.0
  %vm873 = vcmp.ge.f32.partialorder %v819, 0.0
  %vm874 = vcmp.ge.f32.partialorder %v824, 0.0
  %vm875 = vcmp.ge.f32.partialorder %v829, 0.0
  %vm876 = vcmp.ge.f32.partialorder %v834, 0.0
  %vm877 = vcmp.ge.f32.partialorder %v839, 0.0
  %vm878 = vcmp.ge.f32.partialorder %v844, 0.0
  %vm879 = vcmp.ge.f32.partialorder %v849, 0.0
  %vm880 = vcmp.ge.f32.partialorder %v854, 0.0
  %vm881 = vcmp.ge.f32.partialorder %v859, 0.0
  %vm882 = vcmp.ge.f32.partialorder %v864, 0.0
  %vm883 = vcmp.ge.f32.partialorder %v869, 0.0
  %v884 = vmul.f32 %v814, 0.01
  %v885 = vmul.f32 %v819, 0.01
  %v886 = vmul.f32 %v824, 0.01
  %v887 = vmul.f32 %v829, 0.01
  %v888 = vmul.f32 %v834, 0.01
  %v889 = vmul.f32 %v839, 0.01
  %v890 = vmul.f32 %v844, 0.01
  %v891 = vmul.f32 %v849, 0.01
  %v892 = vmul.f32 %v854, 0.01
  %v893 = vmul.f32 %v859, 0.01
  %v894 = vmul.f32 %v864, 0.01
  %v895 = vmul.f32 %v869, 0.01
  %v896 = vsel %vm872, %v814, %v884
  %v897 = vsel %vm873, %v819, %v885
  %v898 = vsel %vm874, %v824, %v886
  %v899 = vsel %vm875, %v829, %v887
  %v900 = vsel %vm876, %v834, %v888
  %v901 = vsel %vm877, %v839, %v889
  %v902 = vsel %vm878, %v844, %v890
  %v903 = vsel %vm879, %v849, %v891
  %v904 = vsel %vm880, %v854, %v892
  %v905 = vsel %vm881, %v859, %v893
  %v906 = vsel %vm882, %v864, %v894
  %v907 = vsel %vm883, %v869, %v895
  %v908 = vld [vmem:[%s6] sm:$0x1]
  %v910 = vlaneseq
  %v911 = vshrl.u32 %v910, 7
  %v912 = vsub.s32 0, %v911
  %v913 = vrot.slane %v908, %v912
  %v915 = vmul.f32 %v896, %v913
  %v916 = vmul.f32 %v897, %v913
  %v917 = vmul.f32 %v898, %v913
  %v918 = vmul.f32 %v899, %v913
  %v919 = vmul.f32 %v900, %v913
  %v920 = vmul.f32 %v901, %v913
  %v921 = vmul.f32 %v902, %v913
  %v922 = vmul.f32 %v903, %v913
  %v923 = vmul.f32 %v904, %v913
  %v924 = vmul.f32 %v905, %v913
  %v925 = vmul.f32 %v906, %v913
  %v926 = vmul.f32 %v907, %v913
  %v927 = vsel %vm682, %v915, 0.0
  %928 = vadd.xlane.f32.xlu0 %v927
  %v929 = vpop.xlane.xlu0 %928
  %v930 = vsel %vm682, %v916, 0.0
  %931 = vadd.xlane.f32.xlu0 %v930
  %v932 = vpop.xlane.xlu0 %931
  %v933 = vsel %vm682, %v917, 0.0
  %934 = vadd.xlane.f32.xlu0 %v933
  %v935 = vpop.xlane.xlu0 %934
  %v936 = vsel %vm682, %v918, 0.0
  %937 = vadd.xlane.f32.xlu0 %v936
  %v938 = vpop.xlane.xlu0 %937
  %v939 = vsel %vm682, %v919, 0.0
  %940 = vadd.xlane.f32.xlu0 %v939
  %v941 = vpop.xlane.xlu0 %940
  %v942 = vsel %vm682, %v920, 0.0
  %943 = vadd.xlane.f32.xlu0 %v942
  %v944 = vpop.xlane.xlu0 %943
  %v945 = vsel %vm682, %v921, 0.0
  %946 = vadd.xlane.f32.xlu0 %v945
  %v947 = vpop.xlane.xlu0 %946
  %v948 = vsel %vm682, %v922, 0.0
  %949 = vadd.xlane.f32.xlu0 %v948
  %v950 = vpop.xlane.xlu0 %949
  %v951 = vsel %vm682, %v923, 0.0
  %952 = vadd.xlane.f32.xlu0 %v951
  %v953 = vpop.xlane.xlu0 %952
  %v954 = vsel %vm682, %v924, 0.0
  %955 = vadd.xlane.f32.xlu0 %v954
  %v956 = vpop.xlane.xlu0 %955
  %v957 = vsel %vm682, %v925, 0.0
  %958 = vadd.xlane.f32.xlu0 %v957
  %v959 = vpop.xlane.xlu0 %958
  %v960 = vsel %vm682, %v926, 0.0
  %961 = vadd.xlane.f32.xlu0 %v960
  %v962 = vpop.xlane.xlu0 %961
  %v963 = vld [vmem:[#allocation2] sm:$0x1]
  %v965 = vlaneseq
  %v966 = vshrl.u32 %v965, 7
  %v967 = vsub.s32 0, %v966
  %v968 = vrot.slane %v963, %v967
  %v970 = vadd.f32 %v929, %v968
  %v971 = vadd.f32 %v932, %v968
  %v972 = vadd.f32 %v935, %v968
  %v973 = vadd.f32 %v938, %v968
  %v974 = vadd.f32 %v941, %v968
  %v975 = vadd.f32 %v944, %v968
  %v976 = vadd.f32 %v947, %v968
  %v977 = vadd.f32 %v950, %v968
  %v978 = vadd.f32 %v953, %v968
  %v979 = vadd.f32 %v956, %v968
  %v980 = vadd.f32 %v959, %v968
  %v981 = vadd.f32 %v962, %v968
  %vm982 = vcmask 7168
  %v983 = vsel %vm982, %v970, -inf
  %v984 = vrot.slane %v983, 4
  %v985 = vmax.f32 %v983, %v984
  %v986 = vrot.slane %v985, 2
  %v987 = vmax.f32 %v985, %v986
  %v988 = vrot.slane %v987, 1
  %v989 = vmax.f32 %v987, %v988
  %v990 = vsel %vm982, %v971, -inf
  %v991 = vrot.slane %v990, 4
  %v992 = vmax.f32 %v990, %v991
  %v993 = vrot.slane %v992, 2
  %v994 = vmax.f32 %v992, %v993
  %v995 = vrot.slane %v994, 1
  %v996 = vmax.f32 %v994, %v995
  %v997 = vsel %vm982, %v972, -inf
  %v998 = vrot.slane %v997, 4
  %v999 = vmax.f32 %v997, %v998
  %v1000 = vrot.slane %v999, 2
  %v1001 = vmax.f32 %v999, %v1000
  %v1002 = vrot.slane %v1001, 1
  %v1003 = vmax.f32 %v1001, %v1002
  %v1004 = vsel %vm982, %v973, -inf
  %v1005 = vrot.slane %v1004, 4
  %v1006 = vmax.f32 %v1004, %v1005
  %v1007 = vrot.slane %v1006, 2
  %v1008 = vmax.f32 %v1006, %v1007
  %v1009 = vrot.slane %v1008, 1
  %v1010 = vmax.f32 %v1008, %v1009
  %v1011 = vsel %vm982, %v974, -inf
  %v1012 = vrot.slane %v1011, 4
  %v1013 = vmax.f32 %v1011, %v1012
  %v1014 = vrot.slane %v1013, 2
  %v1015 = vmax.f32 %v1013, %v1014
  %v1016 = vrot.slane %v1015, 1
  %v1017 = vmax.f32 %v1015, %v1016
  %v1018 = vsel %vm982, %v975, -inf
  %v1019 = vrot.slane %v1018, 4
  %v1020 = vmax.f32 %v1018, %v1019
  %v1021 = vrot.slane %v1020, 2
  %v1022 = vmax.f32 %v1020, %v1021
  %v1023 = vrot.slane %v1022, 1
  %v1024 = vmax.f32 %v1022, %v1023
  %v1025 = vsel %vm982, %v976, -inf
  %v1026 = vrot.slane %v1025, 4
  %v1027 = vmax.f32 %v1025, %v1026
  %v1028 = vrot.slane %v1027, 2
  %v1029 = vmax.f32 %v1027, %v1028
  %v1030 = vrot.slane %v1029, 1
  %v1031 = vmax.f32 %v1029, %v1030
  %v1032 = vsel %vm982, %v977, -inf
  %v1033 = vrot.slane %v1032, 4
  %v1034 = vmax.f32 %v1032, %v1033
  %v1035 = vrot.slane %v1034, 2
  %v1036 = vmax.f32 %v1034, %v1035
  %v1037 = vrot.slane %v1036, 1
  %v1038 = vmax.f32 %v1036, %v1037
  %v1039 = vsel %vm982, %v978, -inf
  %v1040 = vrot.slane %v1039, 4
  %v1041 = vmax.f32 %v1039, %v1040
  %v1042 = vrot.slane %v1041, 2
  %v1043 = vmax.f32 %v1041, %v1042
  %v1044 = vrot.slane %v1043, 1
  %v1045 = vmax.f32 %v1043, %v1044
  %v1046 = vsel %vm982, %v979, -inf
  %v1047 = vrot.slane %v1046, 4
  %v1048 = vmax.f32 %v1046, %v1047
  %v1049 = vrot.slane %v1048, 2
  %v1050 = vmax.f32 %v1048, %v1049
  %v1051 = vrot.slane %v1050, 1
  %v1052 = vmax.f32 %v1050, %v1051
  %v1053 = vsel %vm982, %v980, -inf
  %v1054 = vrot.slane %v1053, 4
  %v1055 = vmax.f32 %v1053, %v1054
  %v1056 = vrot.slane %v1055, 2
  %v1057 = vmax.f32 %v1055, %v1056
  %v1058 = vrot.slane %v1057, 1
  %v1059 = vmax.f32 %v1057, %v1058
  %v1060 = vsel %vm982, %v981, -inf
  %v1061 = vrot.slane %v1060, 4
  %v1062 = vmax.f32 %v1060, %v1061
  %v1063 = vrot.slane %v1062, 2
  %v1064 = vmax.f32 %v1062, %v1063
  %v1065 = vrot.slane %v1064, 1
  %v1066 = vmax.f32 %v1064, %v1065
  %v1067 = vsub.f32 %v970, %v989
  %v1068 = vsub.f32 %v971, %v996
  %v1069 = vsub.f32 %v972, %v1003
  %v1070 = vsub.f32 %v973, %v1010
  %v1071 = vsub.f32 %v974, %v1017
  %v1072 = vsub.f32 %v975, %v1024
  %v1073 = vsub.f32 %v976, %v1031
  %v1074 = vsub.f32 %v977, %v1038
  %v1075 = vsub.f32 %v978, %v1045
  %v1076 = vsub.f32 %v979, %v1052
  %v1077 = vsub.f32 %v980, %v1059
  %v1078 = vsub.f32 %v981, %v1066
  %v1079 = vmul.f32 %v1067, 1.442695
  %v1080 = vpow.pop %v1079
  %v1081 = vmul.f32 %v1068, 1.442695
  %v1082 = vpow.pop %v1081
  %v1083 = vmul.f32 %v1069, 1.442695
  %v1084 = vpow.pop %v1083
  %v1085 = vmul.f32 %v1070, 1.442695
  %v1086 = vpow.pop %v1085
  %v1087 = vmul.f32 %v1071, 1.442695
  %v1088 = vpow.pop %v1087
  %v1089 = vmul.f32 %v1072, 1.442695
  %v1090 = vpow.pop %v1089
  %v1091 = vmul.f32 %v1073, 1.442695
  %v1092 = vpow.pop %v1091
  %v1093 = vmul.f32 %v1074, 1.442695
  %v1094 = vpow.pop %v1093
  %v1095 = vmul.f32 %v1075, 1.442695
  %v1096 = vpow.pop %v1095
  %v1097 = vmul.f32 %v1076, 1.442695
  %v1098 = vpow.pop %v1097
  %v1099 = vmul.f32 %v1077, 1.442695
  %v1100 = vpow.pop %v1099
  %v1101 = vmul.f32 %v1078, 1.442695
  %v1102 = vpow.pop %v1101
  %v1103 = vsel %vm982, %v1080, 0.0
  %v1104 = vrot.slane %v1103, 4
  %v1105 = vadd.f32 %v1103, %v1104
  %v1106 = vrot.slane %v1105, 2
  %v1107 = vadd.f32 %v1105, %v1106
  %v1108 = vrot.slane %v1107, 1
  %v1109 = vadd.f32 %v1107, %v1108
  %v1110 = vsel %vm982, %v1082, 0.0
  %v1111 = vrot.slane %v1110, 4
  %v1112 = vadd.f32 %v1110, %v1111
  %v1113 = vrot.slane %v1112, 2
  %v1114 = vadd.f32 %v1112, %v1113
  %v1115 = vrot.slane %v1114, 1
  %v1116 = vadd.f32 %v1114, %v1115
  %v1117 = vsel %vm982, %v1084, 0.0
  %v1118 = vrot.slane %v1117, 4
  %v1119 = vadd.f32 %v1117, %v1118
  %v1120 = vrot.slane %v1119, 2
  %v1121 = vadd.f32 %v1119, %v1120
  %v1122 = vrot.slane %v1121, 1
  %v1123 = vadd.f32 %v1121, %v1122
  %v1124 = vsel %vm982, %v1086, 0.0
  %v1125 = vrot.slane %v1124, 4
  %v1126 = vadd.f32 %v1124, %v1125
  %v1127 = vrot.slane %v1126, 2
  %v1128 = vadd.f32 %v1126, %v1127
  %v1129 = vrot.slane %v1128, 1
  %v1130 = vadd.f32 %v1128, %v1129
  %v1131 = vsel %vm982, %v1088, 0.0
  %v1132 = vrot.slane %v1131, 4
  %v1133 = vadd.f32 %v1131, %v1132
  %v1134 = vrot.slane %v1133, 2
  %v1135 = vadd.f32 %v1133, %v1134
  %v1136 = vrot.slane %v1135, 1
  %v1137 = vadd.f32 %v1135, %v1136
  %v1138 = vsel %vm982, %v1090, 0.0
  %v1139 = vrot.slane %v1138, 4
  %v1140 = vadd.f32 %v1138, %v1139
  %v1141 = vrot.slane %v1140, 2
  %v1142 = vadd.f32 %v1140, %v1141
  %v1143 = vrot.slane %v1142, 1
  %v1144 = vadd.f32 %v1142, %v1143
  %v1145 = vsel %vm982, %v1092, 0.0
  %v1146 = vrot.slane %v1145, 4
  %v1147 = vadd.f32 %v1145, %v1146
  %v1148 = vrot.slane %v1147, 2
  %v1149 = vadd.f32 %v1147, %v1148
  %v1150 = vrot.slane %v1149, 1
  %v1151 = vadd.f32 %v1149, %v1150
  %v1152 = vsel %vm982, %v1094, 0.0
  %v1153 = vrot.slane %v1152, 4
  %v1154 = vadd.f32 %v1152, %v1153
  %v1155 = vrot.slane %v1154, 2
  %v1156 = vadd.f32 %v1154, %v1155
  %v1157 = vrot.slane %v1156, 1
  %v1158 = vadd.f32 %v1156, %v1157
  %v1159 = vsel %vm982, %v1096, 0.0
  %v1160 = vrot.slane %v1159, 4
  %v1161 = vadd.f32 %v1159, %v1160
  %v1162 = vrot.slane %v1161, 2
  %v1163 = vadd.f32 %v1161, %v1162
  %v1164 = vrot.slane %v1163, 1
  %v1165 = vadd.f32 %v1163, %v1164
  %v1166 = vsel %vm982, %v1098, 0.0
  %v1167 = vrot.slane %v1166, 4
  %v1168 = vadd.f32 %v1166, %v1167
  %v1169 = vrot.slane %v1168, 2
  %v1170 = vadd.f32 %v1168, %v1169
  %v1171 = vrot.slane %v1170, 1
  %v1172 = vadd.f32 %v1170, %v1171
  %v1173 = vsel %vm982, %v1100, 0.0
  %v1174 = vrot.slane %v1173, 4
  %v1175 = vadd.f32 %v1173, %v1174
  %v1176 = vrot.slane %v1175, 2
  %v1177 = vadd.f32 %v1175, %v1176
  %v1178 = vrot.slane %v1177, 1
  %v1179 = vadd.f32 %v1177, %v1178
  %v1180 = vsel %vm982, %v1102, 0.0
  %v1181 = vrot.slane %v1180, 4
  %v1182 = vadd.f32 %v1180, %v1181
  %v1183 = vrot.slane %v1182, 2
  %v1184 = vadd.f32 %v1182, %v1183
  %v1185 = vrot.slane %v1184, 1
  %v1186 = vadd.f32 %v1184, %v1185
  %v1187 = vrcp.pop %v1109
  %v1188 = vmul.f32 %v1080, %v1187
  %v1189 = vrcp.pop %v1116
  %v1190 = vmul.f32 %v1082, %v1189
  %v1191 = vrcp.pop %v1123
  %v1192 = vmul.f32 %v1084, %v1191
  %v1193 = vrcp.pop %v1130
  %v1194 = vmul.f32 %v1086, %v1193
  %v1195 = vrcp.pop %v1137
  %v1196 = vmul.f32 %v1088, %v1195
  %v1197 = vrcp.pop %v1144
  %v1198 = vmul.f32 %v1090, %v1197
  %v1199 = vrcp.pop %v1151
  %v1200 = vmul.f32 %v1092, %v1199
  %v1201 = vrcp.pop %v1158
  %v1202 = vmul.f32 %v1094, %v1201
  %v1203 = vrcp.pop %v1165
  %v1204 = vmul.f32 %v1096, %v1203
  %v1205 = vrcp.pop %v1172
  %v1206 = vmul.f32 %v1098, %v1205
  %v1207 = vrcp.pop %v1179
  %v1208 = vmul.f32 %v1100, %v1207
  %v1209 = vrcp.pop %v1186
  %v1210 = vmul.f32 %v1102, %v1209
  %1212 = vset.pattern.permute.xlu0 0
  %1213 = vperm.xlu0 %1212, %v1188
  %v1214 = vpop.permute.xlu0 %1213
  %1217 = vset.pattern.permute.xlu0 0
  %1218 = vperm.xlu0 %1217, %v1190
  %v1219 = vpop.permute.xlu0 %1218
  %1222 = vset.pattern.permute.xlu0 0
  %1223 = vperm.xlu0 %1222, %v1192
  %v1224 = vpop.permute.xlu0 %1223
  %1227 = vset.pattern.permute.xlu0 0
  %1228 = vperm.xlu0 %1227, %v1194
  %v1229 = vpop.permute.xlu0 %1228
  %1232 = vset.pattern.permute.xlu0 0
  %1233 = vperm.xlu0 %1232, %v1196
  %v1234 = vpop.permute.xlu0 %1233
  %1237 = vset.pattern.permute.xlu0 0
  %1238 = vperm.xlu0 %1237, %v1198
  %v1239 = vpop.permute.xlu0 %1238
  %1242 = vset.pattern.permute.xlu0 0
  %1243 = vperm.xlu0 %1242, %v1200
  %v1244 = vpop.permute.xlu0 %1243
  %1247 = vset.pattern.permute.xlu0 0
  %1248 = vperm.xlu0 %1247, %v1202
  %v1249 = vpop.permute.xlu0 %1248
  %1252 = vset.pattern.permute.xlu0 0
  %1253 = vperm.xlu0 %1252, %v1204
  %v1254 = vpop.permute.xlu0 %1253
  %1257 = vset.pattern.permute.xlu0 0
  %1258 = vperm.xlu0 %1257, %v1206
  %v1259 = vpop.permute.xlu0 %1258
  %1262 = vset.pattern.permute.xlu0 0
  %1263 = vperm.xlu0 %1262, %v1208
  %v1264 = vpop.permute.xlu0 %1263
  %1267 = vset.pattern.permute.xlu0 0
  %1268 = vperm.xlu0 %1267, %v1210
  %v1269 = vpop.permute.xlu0 %1268
  %v1271 = vmul.f32 %v896, %v1214
  %v1272 = vmul.f32 %v897, %v1219
  %v1273 = vmul.f32 %v898, %v1224
  %v1274 = vmul.f32 %v899, %v1229
  %v1275 = vmul.f32 %v900, %v1234
  %v1276 = vmul.f32 %v901, %v1239
  %v1277 = vmul.f32 %v902, %v1244
  %v1278 = vmul.f32 %v903, %v1249
  %v1279 = vmul.f32 %v904, %v1254
  %v1280 = vmul.f32 %v905, %v1259
  %v1281 = vmul.f32 %v906, %v1264
  %v1282 = vmul.f32 %v907, %v1269
  %v1283 = vsel %vm682, %v1271, 0.0
  %v1284 = vrot.slane %v1283, 4
  %v1285 = vadd.f32 %v1283, %v1284
  %v1286 = vrot.slane %v1285, 2
  %v1287 = vadd.f32 %v1285, %v1286
  %v1288 = vrot.slane %v1287, 1
  %v1289 = vadd.f32 %v1287, %v1288
  %v1290 = vsel %vm682, %v1272, 0.0
  %v1291 = vrot.slane %v1290, 4
  %v1292 = vadd.f32 %v1290, %v1291
  %v1293 = vrot.slane %v1292, 2
  %v1294 = vadd.f32 %v1292, %v1293
  %v1295 = vrot.slane %v1294, 1
  %v1296 = vadd.f32 %v1294, %v1295
  %v1297 = vsel %vm682, %v1273, 0.0
  %v1298 = vrot.slane %v1297, 4
  %v1299 = vadd.f32 %v1297, %v1298
  %v1300 = vrot.slane %v1299, 2
  %v1301 = vadd.f32 %v1299, %v1300
  %v1302 = vrot.slane %v1301, 1
  %v1303 = vadd.f32 %v1301, %v1302
  %v1304 = vsel %vm682, %v1274, 0.0
  %v1305 = vrot.slane %v1304, 4
  %v1306 = vadd.f32 %v1304, %v1305
  %v1307 = vrot.slane %v1306, 2
  %v1308 = vadd.f32 %v1306, %v1307
  %v1309 = vrot.slane %v1308, 1
  %v1310 = vadd.f32 %v1308, %v1309
  %v1311 = vsel %vm682, %v1275, 0.0
  %v1312 = vrot.slane %v1311, 4
  %v1313 = vadd.f32 %v1311, %v1312
  %v1314 = vrot.slane %v1313, 2
  %v1315 = vadd.f32 %v1313, %v1314
  %v1316 = vrot.slane %v1315, 1
  %v1317 = vadd.f32 %v1315, %v1316
  %v1318 = vsel %vm682, %v1276, 0.0
  %v1319 = vrot.slane %v1318, 4
  %v1320 = vadd.f32 %v1318, %v1319
  %v1321 = vrot.slane %v1320, 2
  %v1322 = vadd.f32 %v1320, %v1321
  %v1323 = vrot.slane %v1322, 1
  %v1324 = vadd.f32 %v1322, %v1323
  %v1325 = vsel %vm682, %v1277, 0.0
  %v1326 = vrot.slane %v1325, 4
  %v1327 = vadd.f32 %v1325, %v1326
  %v1328 = vrot.slane %v1327, 2
  %v1329 = vadd.f32 %v1327, %v1328
  %v1330 = vrot.slane %v1329, 1
  %v1331 = vadd.f32 %v1329, %v1330
  %v1332 = vsel %vm682, %v1278, 0.0
  %v1333 = vrot.slane %v1332, 4
  %v1334 = vadd.f32 %v1332, %v1333
  %v1335 = vrot.slane %v1334, 2
  %v1336 = vadd.f32 %v1334, %v1335
  %v1337 = vrot.slane %v1336, 1
  %v1338 = vadd.f32 %v1336, %v1337
  %v1339 = vsel %vm682, %v1279, 0.0
  %v1340 = vrot.slane %v1339, 4
  %v1341 = vadd.f32 %v1339, %v1340
  %v1342 = vrot.slane %v1341, 2
  %v1343 = vadd.f32 %v1341, %v1342
  %v1344 = vrot.slane %v1343, 1
  %v1345 = vadd.f32 %v1343, %v1344
  %v1346 = vsel %vm682, %v1280, 0.0
  %v1347 = vrot.slane %v1346, 4
  %v1348 = vadd.f32 %v1346, %v1347
  %v1349 = vrot.slane %v1348, 2
  %v1350 = vadd.f32 %v1348, %v1349
  %v1351 = vrot.slane %v1350, 1
  %v1352 = vadd.f32 %v1350, %v1351
  %v1353 = vsel %vm682, %v1281, 0.0
  %v1354 = vrot.slane %v1353, 4
  %v1355 = vadd.f32 %v1353, %v1354
  %v1356 = vrot.slane %v1355, 2
  %v1357 = vadd.f32 %v1355, %v1356
  %v1358 = vrot.slane %v1357, 1
  %v1359 = vadd.f32 %v1357, %v1358
  %v1360 = vsel %vm682, %v1282, 0.0
  %v1361 = vrot.slane %v1360, 4
  %v1362 = vadd.f32 %v1360, %v1361
  %v1363 = vrot.slane %v1362, 2
  %v1364 = vadd.f32 %v1362, %v1363
  %v1365 = vrot.slane %v1364, 1
  %v1366 = vadd.f32 %v1364, %v1365
  %v1367 = vld [vmem:[%s8] sm:$0x1]
  %v1369 = vlaneseq
  %v1370 = vshrl.u32 %v1369, 7
  %v1371 = vsub.s32 0, %v1370
  %v1372 = vrot.slane %v1367, %v1371
  %v1374 = vmul.f32 %v1289, %v1372
  %v1375 = vmul.f32 %v1296, %v1372
  %v1376 = vmul.f32 %v1303, %v1372
  %v1377 = vmul.f32 %v1310, %v1372
  %v1378 = vmul.f32 %v1317, %v1372
  %v1379 = vmul.f32 %v1324, %v1372
  %v1380 = vmul.f32 %v1331, %v1372
  %v1381 = vmul.f32 %v1338, %v1372
  %v1382 = vmul.f32 %v1345, %v1372
  %v1383 = vmul.f32 %v1352, %v1372
  %v1384 = vmul.f32 %v1359, %v1372
  %v1385 = vmul.f32 %v1366, %v1372
  %v1398 = vrot.slane %v1375, 7
  %vm1399 = vcmask 1041409
  %v1400 = vsel %vm1399, %v1398, %v1374
  %v1401 = vrot.slane %v1376, 6
  %vm1402 = vcmask 1042434
  %v1403 = vsel %vm1402, %v1401, %v1400
  %v1404 = vrot.slane %v1377, 5
  %vm1405 = vcmask 1043459
  %v1406 = vsel %vm1405, %v1404, %v1403
  %v1407 = vrot.slane %v1378, 4
  %vm1408 = vcmask 1044484
  %v1409 = vsel %vm1408, %v1407, %v1406
  %v1410 = vrot.slane %v1379, 3
  %vm1411 = vcmask 1045509
  %v1412 = vsel %vm1411, %v1410, %v1409
  %v1413 = vrot.slane %v1380, 2
  %vm1414 = vcmask 1046534
  %v1415 = vsel %vm1414, %v1413, %v1412
  %v1416 = vrot.slane %v1381, 1
  %vm1417 = vcmask 1047559
  %v1418 = vsel %vm1417, %v1416, %v1415
  %v1419 = vrot.slane %v1383, 7
  %v1420 = vsel %vm1399, %v1419, %v1382
  %v1421 = vrot.slane %v1384, 6
  %v1422 = vsel %vm1402, %v1421, %v1420
  %v1423 = vrot.slane %v1385, 5
  %v1424 = vsel %vm1405, %v1423, %v1422
  %v1427 = vsel %vm682, %v1418, 0.0
  %1428 = vadd.xlane.f32.xlu0 %v1427
  %v1429 = vpop.xlane.xlu0 %1428
  %vm1430 = vcmask 257024
  %v1431 = vsel %vm1430, %v1424, 0.0
  %1432 = vadd.xlane.f32.xlu0 %v1431
  %v1433 = vpop.xlane.xlu0 %1432
  %v1434 = vld [vmem:[#allocation3] sm:$0x1]
  %v1436 = vlaneseq
  %v1437 = vshrl.u32 %v1436, 7
  %v1438 = vsub.s32 0, %v1437
  %v1439 = vrot.slane %v1434, %v1438
  %v1441 = vadd.f32 %v1429, %v1439
  %v1442 = vadd.f32 %v1433, %v1439
  %v1443 = vxor.u32 %v1441, 2147483648
  %v1444 = vxor.u32 %v1442, 2147483648
  %v1445 = vmul.f32 %v1443, 1.442695
  %v1446 = vpow.pop %v1445
  %v1447 = vmul.f32 %v1444, 1.442695
  %v1448 = vpow.pop %v1447
  %v1449 = vadd.f32 %v1446, 1.0
  %v1450 = vadd.f32 %v1448, 1.0
  %v1451 = vrcp.pop %v1449
  %v1452 = vmul.f32 1.0, %v1451
  %v1453 = vrcp.pop %v1450
  %v1454 = vmul.f32 1.0, %v1453
  %1456 = vset.pattern.permute.xlu0 0
  %1457 = vperm.xlu0 %1456, %v1452
  %v1458 = vpop.permute.xlu0 %1457
  %1460 = vset.pattern.permute.xlu0 0
  %1461 = vperm.xlu0 %1460, %v1454
  %v1462 = vpop.permute.xlu0 %1461
  %v1463 = vrot.slane %v1458, 1
  %v1464 = vrot.slane %v1458, 2
  %v1465 = vrot.slane %v1458, 3
  %v1466 = vrot.slane %v1458, 4
  %v1467 = vrot.slane %v1458, 5
  %v1468 = vrot.slane %v1458, 6
  %v1469 = vrot.slane %v1458, 7
  %v1470 = vrot.slane %v1462, 1
  %v1471 = vrot.slane %v1462, 2
  %v1472 = vrot.slane %v1462, 3
  %v1485 = vmul.f32 %v1289, %v1458
  %v1486 = vmul.f32 %v1296, %v1463
  %v1487 = vmul.f32 %v1303, %v1464
  %v1488 = vmul.f32 %v1310, %v1465
  %v1489 = vmul.f32 %v1317, %v1466
  %v1490 = vmul.f32 %v1324, %v1467
  %v1491 = vmul.f32 %v1331, %v1468
  %v1492 = vmul.f32 %v1338, %v1469
  %v1493 = vmul.f32 %v1345, %v1462
  %v1494 = vmul.f32 %v1352, %v1470
  %v1495 = vmul.f32 %v1359, %v1471
  %v1496 = vmul.f32 %v1366, %v1472
  %v1497 = vsub.f32 1.0, %v1452
  %v1498 = vsub.f32 1.0, %v1454
  %1500 = vset.pattern.permute.xlu0 0
  %1501 = vperm.xlu0 %1500, %v1497
  %v1502 = vpop.permute.xlu0 %1501
  %1505 = vset.pattern.permute.xlu0 0
  %1506 = vperm.xlu0 %1505, %v1498
  %v1507 = vpop.permute.xlu0 %1506
  %v1509 = vmul.f32 %v626, %v1502
  %v1510 = vmul.f32 %v631, %v1507
  %v1513 = vrot.slane %v1509, 1
  %v1514 = vrot.slane %v1509, 2
  %v1515 = vrot.slane %v1509, 3
  %v1516 = vrot.slane %v1509, 4
  %v1517 = vrot.slane %v1509, 5
  %v1518 = vrot.slane %v1509, 6
  %v1519 = vrot.slane %v1509, 7
  %v1520 = vrot.slane %v1510, 1
  %v1521 = vrot.slane %v1510, 2
  %v1522 = vrot.slane %v1510, 3
  %v1535 = vadd.f32 %v1485, %v1509
  %v1536 = vadd.f32 %v1486, %v1513
  %v1537 = vadd.f32 %v1487, %v1514
  %v1538 = vadd.f32 %v1488, %v1515
  %v1539 = vadd.f32 %v1489, %v1516
  %v1540 = vadd.f32 %v1490, %v1517
  %v1541 = vadd.f32 %v1491, %v1518
  %v1542 = vadd.f32 %v1492, %v1519
  %v1543 = vadd.f32 %v1493, %v1510
  %v1544 = vadd.f32 %v1494, %v1520
  %v1545 = vadd.f32 %v1495, %v1521
  %v1546 = vadd.f32 %v1496, %v1522
  %v1559 = vrot.slane %v1536, 7
  %v1560 = vsel %vm1399, %v1559, %v1535
  %v1561 = vrot.slane %v1537, 6
  %v1562 = vsel %vm1402, %v1561, %v1560
  %v1563 = vrot.slane %v1538, 5
  %v1564 = vsel %vm1405, %v1563, %v1562
  %v1565 = vrot.slane %v1539, 4
  %v1566 = vsel %vm1408, %v1565, %v1564
  %v1567 = vrot.slane %v1540, 3
  %v1568 = vsel %vm1411, %v1567, %v1566
  %v1569 = vrot.slane %v1541, 2
  %v1570 = vsel %vm1414, %v1569, %v1568
  %v1571 = vrot.slane %v1542, 1
  %v1572 = vsel %vm1417, %v1571, %v1570
  %v1573 = vrot.slane %v1544, 7
  %v1574 = vsel %vm1399, %v1573, %v1543
  %v1575 = vrot.slane %v1545, 6
  %v1576 = vsel %vm1402, %v1575, %v1574
  %v1577 = vrot.slane %v1546, 5
  %v1578 = vsel %vm1405, %v1577, %v1576
  %1581 = vst.msk [vmem:[%s10] sm:$0xff] %vm682, %v1572
  %1582 = vst.msk [vmem:[%s10 + $0x8] sm:$0xf] %vm1430, %v1578
  // Predicated region
  $region42: #{metar_forward.3} parent=0 // pred_check
    _
  $region43: #{metar_forward.3} parent=0 // pred_check_branch
    %1584 = sbr.rel (0) target = $region45
  $region44: #{metar_forward.3} parent=0 // pred_region
    _
  $region45: #{metar_forward.3} parent=0 // pred_fallthru
    _
  // Predicated region
  $region46: #{metar_forward.3} parent=0 // pred_check
    _
  $region47: #{metar_forward.3} parent=0 // pred_check_branch
    %1586 = sbr.rel (0) target = $region49
  $region48: #{metar_forward.3} parent=0 // pred_region
    _
  $region49: #{metar_forward.3} parent=0 // pred_fallthru
    _

// kernel: metar_forward.4
$region0: #{metar_forward.4}
  #allocation0 [shape = 'u32[]', space=smem, size = 0x4, offset = 0x4, fixed_abs, tag = 'smem constant byte address 0x4 - core index']
  #allocation1 [shape = 'u32[144,128]{1,0:T(1,128)}', space=vmem, size = 0x12000, scoped, tag = 'internal scratch']
  #allocation2 [shape = 'f32[1,1]{1,0:T(1,128)S(1)}', space=vmem, size = 0x200, scoped, tag = 'scoped memory for metar_forward.4']
  #allocation3 [shape = 'f32[1,1]{1,0:T(1,128)S(1)}', space=vmem, size = 0x200, scoped, tag = 'scoped memory for metar_forward.4']
  %s0 = inlined_call_operand.vmem [shape: f32[6,64], index: 0, kind: input, shape index: {}]
  %s1 = inlined_call_operand.vmem [shape: f32[64,64], index: 1, kind: input, shape index: {}]
  %s2 = inlined_call_operand.vmem [shape: f32[16,64], index: 2, kind: input, shape index: {}]
  %s3 = inlined_call_operand.vmem [shape: f32[1,64], index: 3, kind: input, shape index: {}]
  %s4 = inlined_call_operand.vmem [shape: f32[64,64], index: 4, kind: input, shape index: {}]
  %s5 = inlined_call_operand.vmem [shape: f32[16,64], index: 5, kind: input, shape index: {}]
  %s6 = inlined_call_operand.vmem [shape: f32[1,64], index: 6, kind: input, shape index: {}]
  %s7 = inlined_call_operand.vmem [shape: f32[32,64], index: 7, kind: input, shape index: {}]
  %s8 = inlined_call_operand.vmem [shape: f32[16,64], index: 8, kind: input, shape index: {}]
  %s9 = inlined_call_operand.vmem [shape: f32[1,64], index: 9, kind: input, shape index: {}]
  %s10 = inlined_call_operand.vmem [shape: f32[32,64], index: 10, kind: input, shape index: {}]
  %s11 = inlined_call_operand.vmem [shape: f32[16,64], index: 11, kind: input, shape index: {}]
  %s12 = inlined_call_operand.vmem [shape: f32[1,64], index: 12, kind: input, shape index: {}]
  %s13 = inlined_call_operand.vmem [shape: f32[64,64], index: 13, kind: input, shape index: {}]
  %s14 = inlined_call_operand.vmem [shape: f32[32,32], index: 14, kind: input, shape index: {}]
  %s15 = inlined_call_operand.vmem [shape: f32[32,32], index: 15, kind: input, shape index: {}]
  %s16 = inlined_call_operand.vmem [shape: f32[1,32], index: 16, kind: input, shape index: {}]
  %s17 = inlined_call_operand.<no memory space> [shape: f32[1,1], index: 17, kind: input, shape index: {}]
  %s18 = inlined_call_operand.<no memory space> [shape: f32[1,1], index: 18, kind: input, shape index: {}]
  %s19 = inlined_call_operand.vmem [shape: f32[2,32], index: 19, kind: output, shape index: {0}]
  %s20 = inlined_call_operand.vmem [shape: f32[2,32], index: 20, kind: output, shape index: {1}]
  %21 = xla_tuple %s19, %s20
  %s22 = sld [smem:[#allocation0]]
  $region94: #{metar_forward.4} parent=0
    _
  %s24 = ssub.s32 1, %s22
  %s25 = scalar_select 0, %s24, %s22
  %v26 = vstv %s17
  %27 = vst [vmem:[#allocation2] sm:$0x1] %v26
  %v28 = vstv %s18
  %29 = vst [vmem:[#allocation3] sm:$0x1] %v28
  // Predicated region
  $region2: #{metar_forward.4} parent=0 // pred_check
    _
  $region3: #{metar_forward.4} parent=0 // pred_check_branch
    %31 = sbr.rel (0) target = $region5
  $region4: #{metar_forward.4} parent=0 // pred_region
    _
  $region5: #{metar_forward.4} parent=0 // pred_fallthru
    _
  // Predicated region
  $region6: #{metar_forward.4} parent=0 // pred_check
    _
  $region7: #{metar_forward.4} parent=0 // pred_check_branch
    %33 = sbr.rel (0) target = $region9
  $region8: #{metar_forward.4} parent=0 // pred_region
    _
  $region9: #{metar_forward.4} parent=0 // pred_fallthru
    _
  // Predicated region
  $region10: #{metar_forward.4} parent=0 // pred_check
    _
  $region11: #{metar_forward.4} parent=0 // pred_check_branch
    %35 = sbr.rel (0) target = $region13
  $region12: #{metar_forward.4} parent=0 // pred_region
    _
  $region13: #{metar_forward.4} parent=0 // pred_fallthru
    _
  // Predicated region
  $region14: #{metar_forward.4} parent=0 // pred_check
    _
  $region15: #{metar_forward.4} parent=0 // pred_check_branch
    %37 = sbr.rel (0) target = $region17
  $region16: #{metar_forward.4} parent=0 // pred_region
    _
  $region17: #{metar_forward.4} parent=0 // pred_fallthru
    _
  // Predicated region
  $region18: #{metar_forward.4} parent=0 // pred_check
    _
  $region19: #{metar_forward.4} parent=0 // pred_check_branch
    %39 = sbr.rel (0) target = $region21
  $region20: #{metar_forward.4} parent=0 // pred_region
    _
  $region21: #{metar_forward.4} parent=0 // pred_fallthru
    _
  // Predicated region
  $region22: #{metar_forward.4} parent=0 // pred_check
    _
  $region23: #{metar_forward.4} parent=0 // pred_check_branch
    %41 = sbr.rel (0) target = $region25
  $region24: #{metar_forward.4} parent=0 // pred_region
    _
  $region25: #{metar_forward.4} parent=0 // pred_fallthru
    _
  // Predicated region
  $region26: #{metar_forward.4} parent=0 // pred_check
    _
  $region27: #{metar_forward.4} parent=0 // pred_check_branch
    %43 = sbr.rel (0) target = $region29
  $region28: #{metar_forward.4} parent=0 // pred_region
    _
  $region29: #{metar_forward.4} parent=0 // pred_fallthru
    _
  // Predicated region
  $region30: #{metar_forward.4} parent=0 // pred_check
    _
  $region31: #{metar_forward.4} parent=0 // pred_check_branch
    %45 = sbr.rel (0) target = $region33
  $region32: #{metar_forward.4} parent=0 // pred_region
    _
  $region33: #{metar_forward.4} parent=0 // pred_fallthru
    _
  // Predicated region
  $region34: #{metar_forward.4} parent=0 // pred_check
    _
  $region35: #{metar_forward.4} parent=0 // pred_check_branch
    %47 = sbr.rel (0) target = $region37
  $region36: #{metar_forward.4} parent=0 // pred_region
    _
  $region37: #{metar_forward.4} parent=0 // pred_fallthru
    _
  // Predicated region
  $region38: #{metar_forward.4} parent=0 // pred_check
    _
  $region39: #{metar_forward.4} parent=0 // pred_check_branch
    %49 = sbr.rel (0) target = $region41
  $region40: #{metar_forward.4} parent=0 // pred_region
    _
  $region41: #{metar_forward.4} parent=0 // pred_fallthru
    _
  // Predicated region
  $region42: #{metar_forward.4} parent=0 // pred_check
    _
  $region43: #{metar_forward.4} parent=0 // pred_check_branch
    %51 = sbr.rel (0) target = $region45
  $region44: #{metar_forward.4} parent=0 // pred_region
    _
  $region45: #{metar_forward.4} parent=0 // pred_fallthru
    _
  // Predicated region
  $region46: #{metar_forward.4} parent=0 // pred_check
    _
  $region47: #{metar_forward.4} parent=0 // pred_check_branch
    %53 = sbr.rel (0) target = $region49
  $region48: #{metar_forward.4} parent=0 // pred_region
    _
  $region49: #{metar_forward.4} parent=0 // pred_fallthru
    _
  // Predicated region
  $region50: #{metar_forward.4} parent=0 // pred_check
    _
  $region51: #{metar_forward.4} parent=0 // pred_check_branch
    %55 = sbr.rel (0) target = $region53
  $region52: #{metar_forward.4} parent=0 // pred_region
    _
  $region53: #{metar_forward.4} parent=0 // pred_fallthru
    _
  // Predicated region
  $region54: #{metar_forward.4} parent=0 // pred_check
    _
  $region55: #{metar_forward.4} parent=0 // pred_check_branch
    %57 = sbr.rel (0) target = $region57
  $region56: #{metar_forward.4} parent=0 // pred_region
    _
  $region57: #{metar_forward.4} parent=0 // pred_fallthru
    _
  // Predicated region
  $region58: #{metar_forward.4} parent=0 // pred_check
    _
  $region59: #{metar_forward.4} parent=0 // pred_check_branch
    %59 = sbr.rel (0) target = $region61
  $region60: #{metar_forward.4} parent=0 // pred_region
    _
  $region61: #{metar_forward.4} parent=0 // pred_fallthru
    _
  // Predicated region
  $region62: #{metar_forward.4} parent=0 // pred_check
    _
  $region63: #{metar_forward.4} parent=0 // pred_check_branch
    %61 = sbr.rel (0) target = $region65
  $region64: #{metar_forward.4} parent=0 // pred_region
    _
  $region65: #{metar_forward.4} parent=0 // pred_fallthru
    _
  // Predicated region
  $region66: #{metar_forward.4} parent=0 // pred_check
    _
  $region67: #{metar_forward.4} parent=0 // pred_check_branch
    %63 = sbr.rel (0) target = $region69
  $region68: #{metar_forward.4} parent=0 // pred_region
    _
  $region69: #{metar_forward.4} parent=0 // pred_fallthru
    _
  // Predicated region
  $region70: #{metar_forward.4} parent=0 // pred_check
    _
  $region71: #{metar_forward.4} parent=0 // pred_check_branch
    %65 = sbr.rel (0) target = $region73
  $region72: #{metar_forward.4} parent=0 // pred_region
    _
  $region73: #{metar_forward.4} parent=0 // pred_fallthru
    _
  // Predicated region
  $region74: #{metar_forward.4} parent=0 // pred_check
    _
  $region75: #{metar_forward.4} parent=0 // pred_check_branch
    %67 = sbr.rel (0) target = $region77
  $region76: #{metar_forward.4} parent=0 // pred_region
    _
  $region77: #{metar_forward.4} parent=0 // pred_fallthru
    _
  %v68 = vld [vmem:[%s0] sm:$0x3f]
  %v69 = vld [vmem:[%s1] sm:$0xff]
  %v70 = vld [vmem:[%s1 + $0x8] sm:$0xff]
  %v71 = vld [vmem:[%s1 + $0x10] sm:$0xff]
  %v72 = vld [vmem:[%s1 + $0x18] sm:$0xff]
  %v73 = vld [vmem:[%s1 + $0x20] sm:$0xff]
  %v74 = vld [vmem:[%s1 + $0x28] sm:$0xff]
  %v75 = vld [vmem:[%s1 + $0x30] sm:$0xff]
  %v76 = vld [vmem:[%s1 + $0x38] sm:$0xff]
  %v77 = vld [vmem:[%s3] sm:$0x1]
  %v79 = vlaneseq
  %v80 = vshrl.u32 %v79, 7
  %v81 = vsub.s32 0, %v80
  %v82 = vrot.slane %v77, %v81
  %vm84 = vcmask 523264
  %v86 = vsel %vm84, %v68, 0
  %88 = vmatprep.subr.mxu0 0.0
  %89 = vmatpush1.msra.mxu0 0.0
  %90 = vmatprep.subr.mxu0 0.0
  %91 = vmatpush1.msra.mxu0 0.0
  %92 = vmatprep.subr.mxu0 0.0
  %93 = vmatpush1.msra.mxu0 0.0
  %94 = vmatprep.subr.mxu0 0.0
  %95 = vmatpush1.msra.mxu0 0.0
  %96 = vmatprep.subr.mxu0 0.0
  %97 = vmatpush1.msra.mxu0 0.0
  %98 = vmatprep.subr.mxu0 0.0
  %99 = vmatpush1.msra.mxu0 0.0
  %100 = vmatprep.subr.mxu0 0.0
  %101 = vmatpush1.msra.mxu0 0.0
  %102 = vmatprep.subr.mxu0 0.0
  %103 = vmatpush1.msra.mxu0 0.0
  %104 = vmatprep.subr.mxu0 0.0
  %105 = vmatpush1.msra.mxu0 %v76
  %106 = vmatprep.subr.mxu0 0.0
  %107 = vmatpush1.msra.mxu0 %v75
  %108 = vmatprep.subr.mxu0 0.0
  %109 = vmatpush1.msra.mxu0 %v74
  %110 = vmatprep.subr.mxu0 0.0
  %111 = vmatpush1.msra.mxu0 %v73
  %112 = vmatprep.subr.mxu0 0.0
  %113 = vmatpush1.msra.mxu0 %v72
  %114 = vmatprep.subr.mxu0 0.0
  %115 = vmatpush1.msra.mxu0 %v71
  %116 = vmatprep.subr.mxu0 0.0
  %117 = vmatpush1.msra.mxu0 %v70
  %118 = vmatprep.subr.mxu0 0.0
  %119 = vmatpush1.msra.mxu0 %v69
  %120 = vmatprep.subr.mxu0 0.0
  %121 = vmatpush2.msra.mxu0 0.0
  %122 = vmatprep.subr.mxu0 0.0
  %123 = vmatpush2.msra.mxu0 0.0
  %124 = vmatprep.subr.mxu0 0.0
  %125 = vmatpush2.msra.mxu0 0.0
  %126 = vmatprep.subr.mxu0 0.0
  %127 = vmatpush2.msra.mxu0 0.0
  %128 = vmatprep.subr.mxu0 0.0
  %129 = vmatpush2.msra.mxu0 0.0
  %130 = vmatprep.subr.mxu0 0.0
  %131 = vmatpush2.msra.mxu0 0.0
  %132 = vmatprep.subr.mxu0 0.0
  %133 = vmatpush2.msra.mxu0 0.0
  %134 = vmatprep.subr.mxu0 0.0
  %135 = vmatpush2.msra.mxu0 0.0
  %136 = vmatprep.subr.mxu0 0.0
  %137 = vmatpush2.msra.mxu0 0.0
  %138 = vmatprep.subr.mxu0 0.0
  %139 = vmatpush2.msra.mxu0 0.0
  %140 = vmatprep.subr.mxu0 0.0
  %141 = vmatpush2.msra.mxu0 0.0
  %142 = vmatprep.subr.mxu0 0.0
  %143 = vmatpush2.msra.mxu0 0.0
  %144 = vmatprep.subr.mxu0 0.0
  %145 = vmatpush2.msra.mxu0 0.0
  %146 = vmatprep.subr.mxu0 0.0
  %147 = vmatpush2.msra.mxu0 0.0
  %148 = vmatprep.subr.mxu0 0.0
  %149 = vmatpush2.msra.mxu0 0.0
  %150 = vmatprep.subr.mxu0 0.0
  %151 = vmatpush2.msra.mxu0 0.0
  %152 = vmatprep.mubr.f32.mxu0 0.0
  %153 = vmatmul.mubr.f32.gmra.mxu0 %v86
  %v154 = vpop.f32.mrf.mxu0
  %v155 = vadd.f32 %v82, %v154
  %v156 = vpop.f32.mrf.mxu0
  %157 = vdwg.mxu0
  %v158 = vld [vmem:[%s2] sm:$0xff]
  %v159 = vld [vmem:[%s2 + $0x8] sm:$0xff]
  %vm160 = vcmask 130048
  %v162 = vsel %vm160, 0.0, 0
  %164 = vmatprep.subr.mxu0 0.0
  %165 = vmatpush1.msra.mxu0 0.0
  %166 = vmatprep.subr.mxu0 0.0
  %167 = vmatpush1.msra.mxu0 0.0
  %168 = vmatprep.subr.mxu0 0.0
  %169 = vmatpush1.msra.mxu0 0.0
  %170 = vmatprep.subr.mxu0 0.0
  %171 = vmatpush1.msra.mxu0 0.0
  %172 = vmatprep.subr.mxu0 0.0
  %173 = vmatpush1.msra.mxu0 0.0
  %174 = vmatprep.subr.mxu0 0.0
  %175 = vmatpush1.msra.mxu0 0.0
  %176 = vmatprep.subr.mxu0 0.0
  %177 = vmatpush1.msra.mxu0 0.0
  %178 = vmatprep.subr.mxu0 0.0
  %179 = vmatpush1.msra.mxu0 0.0
  %180 = vmatprep.subr.mxu0 0.0
  %181 = vmatpush1.msra.mxu0 0.0
  %182 = vmatprep.subr.mxu0 0.0
  %183 = vmatpush1.msra.mxu0 0.0
  %184 = vmatprep.subr.mxu0 0.0
  %185 = vmatpush1.msra.mxu0 0.0
  %186 = vmatprep.subr.mxu0 0.0
  %187 = vmatpush1.msra.mxu0 0.0
  %188 = vmatprep.subr.mxu0 0.0
  %189 = vmatpush1.msra.mxu0 0.0
  %190 = vmatprep.subr.mxu0 0.0
  %191 = vmatpush1.msra.mxu0 0.0
  %192 = vmatprep.subr.mxu0 0.0
  %193 = vmatpush1.msra.mxu0 %v159
  %194 = vmatprep.subr.mxu0 0.0
  %195 = vmatpush1.msra.mxu0 %v158
  %196 = vmatprep.subr.mxu0 0.0
  %197 = vmatpush2.msra.mxu0 0.0
  %198 = vmatprep.subr.mxu0 0.0
  %199 = vmatpush2.msra.mxu0 0.0
  %200 = vmatprep.subr.mxu0 0.0
  %201 = vmatpush2.msra.mxu0 0.0
  %202 = vmatprep.subr.mxu0 0.0
  %203 = vmatpush2.msra.mxu0 0.0
  %204 = vmatprep.subr.mxu0 0.0
  %205 = vmatpush2.msra.mxu0 0.0
  %206 = vmatprep.subr.mxu0 0.0
  %207 = vmatpush2.msra.mxu0 0.0
  %208 = vmatprep.subr.mxu0 0.0
  %209 = vmatpush2.msra.mxu0 0.0
  %210 = vmatprep.subr.mxu0 0.0
  %211 = vmatpush2.msra.mxu0 0.0
  %212 = vmatprep.subr.mxu0 0.0
  %213 = vmatpush2.msra.mxu0 0.0
  %214 = vmatprep.subr.mxu0 0.0
  %215 = vmatpush2.msra.mxu0 0.0
  %216 = vmatprep.subr.mxu0 0.0
  %217 = vmatpush2.msra.mxu0 0.0
  %218 = vmatprep.subr.mxu0 0.0
  %219 = vmatpush2.msra.mxu0 0.0
  %220 = vmatprep.subr.mxu0 0.0
  %221 = vmatpush2.msra.mxu0 0.0
  %222 = vmatprep.subr.mxu0 0.0
  %223 = vmatpush2.msra.mxu0 0.0
  %224 = vmatprep.subr.mxu0 0.0
  %225 = vmatpush2.msra.mxu0 0.0
  %226 = vmatprep.subr.mxu0 0.0
  %227 = vmatpush2.msra.mxu0 0.0
  %228 = vmatprep.mubr.f32.mxu0 0.0
  %229 = vmatmul.mubr.f32.gmra.mxu0 %v162
  %v230 = vpop.f32.mrf.mxu0
  %v231 = vadd.f32 0.0, %v230
  %v232 = vpop.f32.mrf.mxu0
  %233 = vdwg.mxu0
  %v234 = vadd.f32 %v155, %v231
  %v235 = vxor.u32 %v234, 2147483648
  %v236 = vmul.f32 %v235, 1.442695
  %v237 = vpow.pop %v236
  %v238 = vadd.f32 %v237, 1.0
  %v239 = vrcp.pop %v238
  %v240 = vmul.f32 1.0, %v239
  %v241 = vtanh.pop %v234
  %v242 = vmul.f32 %v240, 0.0
  %244 = vrot.lane.b32.xlu0 %v241, 96
  %v245 = vpop.permute.xlu0 %244
  %v247 = vmul.f32 %v240, %v245
  %249 = vrot.lane.b32.xlu0 %v247, 16
  %v250 = vpop.permute.xlu0 %249
  %v252 = vadd.f32 %v242, %v250
  %v253 = vtanh.pop %v252
  %255 = vrot.lane.b32.xlu0 %v253, 32
  %v256 = vpop.permute.xlu0 %255
  %v258 = vmul.f32 %v240, %v256
  %260 = vrot.lane.b32.xlu0 %v258, 80
  %v261 = vpop.permute.xlu0 %260
  %v262 = vsel %vm160, %v261, 0
  %264 = vmatprep.subr.mxu0 0.0
  %265 = vmatpush1.msra.mxu0 0.0
  %266 = vmatprep.subr.mxu0 0.0
  %267 = vmatpush1.msra.mxu0 0.0
  %268 = vmatprep.subr.mxu0 0.0
  %269 = vmatpush1.msra.mxu0 0.0
  %270 = vmatprep.subr.mxu0 0.0
  %271 = vmatpush1.msra.mxu0 0.0
  %272 = vmatprep.subr.mxu0 0.0
  %273 = vmatpush1.msra.mxu0 0.0
  %274 = vmatprep.subr.mxu0 0.0
  %275 = vmatpush1.msra.mxu0 0.0
  %276 = vmatprep.subr.mxu0 0.0
  %277 = vmatpush1.msra.mxu0 0.0
  %278 = vmatprep.subr.mxu0 0.0
  %279 = vmatpush1.msra.mxu0 0.0
  %280 = vmatprep.subr.mxu0 0.0
  %281 = vmatpush1.msra.mxu0 0.0
  %282 = vmatprep.subr.mxu0 0.0
  %283 = vmatpush1.msra.mxu0 0.0
  %284 = vmatprep.subr.mxu0 0.0
  %285 = vmatpush1.msra.mxu0 0.0
  %286 = vmatprep.subr.mxu0 0.0
  %287 = vmatpush1.msra.mxu0 0.0
  %288 = vmatprep.subr.mxu0 0.0
  %289 = vmatpush1.msra.mxu0 0.0
  %290 = vmatprep.subr.mxu0 0.0
  %291 = vmatpush1.msra.mxu0 0.0
  %292 = vmatprep.subr.mxu0 0.0
  %293 = vmatpush1.msra.mxu0 %v159
  %294 = vmatprep.subr.mxu0 0.0
  %295 = vmatpush1.msra.mxu0 %v158
  %296 = vmatprep.subr.mxu0 0.0
  %297 = vmatpush2.msra.mxu0 0.0
  %298 = vmatprep.subr.mxu0 0.0
  %299 = vmatpush2.msra.mxu0 0.0
  %300 = vmatprep.subr.mxu0 0.0
  %301 = vmatpush2.msra.mxu0 0.0
  %302 = vmatprep.subr.mxu0 0.0
  %303 = vmatpush2.msra.mxu0 0.0
  %304 = vmatprep.subr.mxu0 0.0
  %305 = vmatpush2.msra.mxu0 0.0
  %306 = vmatprep.subr.mxu0 0.0
  %307 = vmatpush2.msra.mxu0 0.0
  %308 = vmatprep.subr.mxu0 0.0
  %309 = vmatpush2.msra.mxu0 0.0
  %310 = vmatprep.subr.mxu0 0.0
  %311 = vmatpush2.msra.mxu0 0.0
  %312 = vmatprep.subr.mxu0 0.0
  %313 = vmatpush2.msra.mxu0 0.0
  %314 = vmatprep.subr.mxu0 0.0
  %315 = vmatpush2.msra.mxu0 0.0
  %316 = vmatprep.subr.mxu0 0.0
  %317 = vmatpush2.msra.mxu0 0.0
  %318 = vmatprep.subr.mxu0 0.0
  %319 = vmatpush2.msra.mxu0 0.0
  %320 = vmatprep.subr.mxu0 0.0
  %321 = vmatpush2.msra.mxu0 0.0
  %322 = vmatprep.subr.mxu0 0.0
  %323 = vmatpush2.msra.mxu0 0.0
  %324 = vmatprep.subr.mxu0 0.0
  %325 = vmatpush2.msra.mxu0 0.0
  %326 = vmatprep.subr.mxu0 0.0
  %327 = vmatpush2.msra.mxu0 0.0
  %328 = vmatprep.mubr.f32.mxu0 0.0
  %329 = vmatmul.mubr.f32.gmra.mxu0 %v262
  %v330 = vpop.f32.mrf.mxu0
  %v331 = vadd.f32 0.0, %v330
  %v332 = vpop.f32.mrf.mxu0
  %333 = vdwg.mxu0
  %v335 = vrot.slane %v331, 6
  %v337 = vadd.f32 %v155, %v335
  %v338 = vxor.u32 %v337, 2147483648
  %v339 = vmul.f32 %v338, 1.442695
  %v340 = vpow.pop %v339
  %v341 = vadd.f32 %v340, 1.0
  %v342 = vrcp.pop %v341
  %v343 = vmul.f32 1.0, %v342
  %v344 = vtanh.pop %v337
  %v346 = vrot.slane %v252, 6
  %v348 = vmul.f32 %v343, %v346
  %350 = vrot.lane.b32.xlu0 %v344, 96
  %v351 = vpop.permute.xlu0 %350
  %v353 = vmul.f32 %v343, %v351
  %355 = vrot.lane.b32.xlu0 %v353, 16
  %v356 = vpop.permute.xlu0 %355
  %v358 = vadd.f32 %v348, %v356
  %v359 = vtanh.pop %v358
  %361 = vrot.lane.b32.xlu0 %v359, 32
  %v362 = vpop.permute.xlu0 %361
  %v364 = vmul.f32 %v343, %v362
  %v366 = vrot.slane %v364, 2
  %367 = vrot.lane.b32.xlu0 %v366, 80
  %v368 = vpop.permute.xlu0 %367
  %v369 = vsel %vm160, %v368, 0
  %371 = vmatprep.subr.mxu0 0.0
  %372 = vmatpush1.msra.mxu0 0.0
  %373 = vmatprep.subr.mxu0 0.0
  %374 = vmatpush1.msra.mxu0 0.0
  %375 = vmatprep.subr.mxu0 0.0
  %376 = vmatpush1.msra.mxu0 0.0
  %377 = vmatprep.subr.mxu0 0.0
  %378 = vmatpush1.msra.mxu0 0.0
  %379 = vmatprep.subr.mxu0 0.0
  %380 = vmatpush1.msra.mxu0 0.0
  %381 = vmatprep.subr.mxu0 0.0
  %382 = vmatpush1.msra.mxu0 0.0
  %383 = vmatprep.subr.mxu0 0.0
  %384 = vmatpush1.msra.mxu0 0.0
  %385 = vmatprep.subr.mxu0 0.0
  %386 = vmatpush1.msra.mxu0 0.0
  %387 = vmatprep.subr.mxu0 0.0
  %388 = vmatpush1.msra.mxu0 0.0
  %389 = vmatprep.subr.mxu0 0.0
  %390 = vmatpush1.msra.mxu0 0.0
  %391 = vmatprep.subr.mxu0 0.0
  %392 = vmatpush1.msra.mxu0 0.0
  %393 = vmatprep.subr.mxu0 0.0
  %394 = vmatpush1.msra.mxu0 0.0
  %395 = vmatprep.subr.mxu0 0.0
  %396 = vmatpush1.msra.mxu0 0.0
  %397 = vmatprep.subr.mxu0 0.0
  %398 = vmatpush1.msra.mxu0 0.0
  %399 = vmatprep.subr.mxu0 0.0
  %400 = vmatpush1.msra.mxu0 %v159
  %401 = vmatprep.subr.mxu0 0.0
  %402 = vmatpush1.msra.mxu0 %v158
  %403 = vmatprep.subr.mxu0 0.0
  %404 = vmatpush2.msra.mxu0 0.0
  %405 = vmatprep.subr.mxu0 0.0
  %406 = vmatpush2.msra.mxu0 0.0
  %407 = vmatprep.subr.mxu0 0.0
  %408 = vmatpush2.msra.mxu0 0.0
  %409 = vmatprep.subr.mxu0 0.0
  %410 = vmatpush2.msra.mxu0 0.0
  %411 = vmatprep.subr.mxu0 0.0
  %412 = vmatpush2.msra.mxu0 0.0
  %413 = vmatprep.subr.mxu0 0.0
  %414 = vmatpush2.msra.mxu0 0.0
  %415 = vmatprep.subr.mxu0 0.0
  %416 = vmatpush2.msra.mxu0 0.0
  %417 = vmatprep.subr.mxu0 0.0
  %418 = vmatpush2.msra.mxu0 0.0
  %419 = vmatprep.subr.mxu0 0.0
  %420 = vmatpush2.msra.mxu0 0.0
  %421 = vmatprep.subr.mxu0 0.0
  %422 = vmatpush2.msra.mxu0 0.0
  %423 = vmatprep.subr.mxu0 0.0
  %424 = vmatpush2.msra.mxu0 0.0
  %425 = vmatprep.subr.mxu0 0.0
  %426 = vmatpush2.msra.mxu0 0.0
  %427 = vmatprep.subr.mxu0 0.0
  %428 = vmatpush2.msra.mxu0 0.0
  %429 = vmatprep.subr.mxu0 0.0
  %430 = vmatpush2.msra.mxu0 0.0
  %431 = vmatprep.subr.mxu0 0.0
  %432 = vmatpush2.msra.mxu0 0.0
  %433 = vmatprep.subr.mxu0 0.0
  %434 = vmatpush2.msra.mxu0 0.0
  %435 = vmatprep.mubr.f32.mxu0 0.0
  %436 = vmatmul.mubr.f32.gmra.mxu0 %v369
  %v437 = vpop.f32.mrf.mxu0
  %v438 = vadd.f32 0.0, %v437
  %v439 = vpop.f32.mrf.mxu0
  %440 = vdwg.mxu0
  %v442 = vrot.slane %v438, 4
  %v444 = vadd.f32 %v155, %v442
  %v445 = vxor.u32 %v444, 2147483648
  %v446 = vmul.f32 %v445, 1.442695
  %v447 = vpow.pop %v446
  %v448 = vadd.f32 %v447, 1.0
  %v449 = vrcp.pop %v448
  %v450 = vmul.f32 1.0, %v449
  %v451 = vtanh.pop %v444
  %v453 = vrot.slane %v358, 6
  %v455 = vmul.f32 %v450, %v453
  %457 = vrot.lane.b32.xlu0 %v451, 96
  %v458 = vpop.permute.xlu0 %457
  %v460 = vmul.f32 %v450, %v458
  %462 = vrot.lane.b32.xlu0 %v460, 16
  %v463 = vpop.permute.xlu0 %462
  %v465 = vadd.f32 %v455, %v463
  %v466 = vtanh.pop %v465
  %468 = vrot.lane.b32.xlu0 %v466, 32
  %v469 = vpop.permute.xlu0 %468
  %v471 = vmul.f32 %v450, %v469
  %v472 = vld [vmem:[%s4] sm:$0xff]
  %v473 = vld [vmem:[%s4 + $0x8] sm:$0xff]
  %v474 = vld [vmem:[%s4 + $0x10] sm:$0xff]
  %v475 = vld [vmem:[%s4 + $0x18] sm:$0xff]
  %v476 = vld [vmem:[%s4 + $0x20] sm:$0xff]
  %v477 = vld [vmem:[%s4 + $0x28] sm:$0xff]
  %v478 = vld [vmem:[%s4 + $0x30] sm:$0xff]
  %v479 = vld [vmem:[%s4 + $0x38] sm:$0xff]
  %v480 = vld [vmem:[%s6] sm:$0x1]
  %v482 = vlaneseq
  %v483 = vshrl.u32 %v482, 7
  %v484 = vsub.s32 0, %v483
  %v485 = vrot.slane %v480, %v484
  %487 = vmatprep.subr.mxu0 0.0
  %488 = vmatpush1.msra.mxu0 0.0
  %489 = vmatprep.subr.mxu0 0.0
  %490 = vmatpush1.msra.mxu0 0.0
  %491 = vmatprep.subr.mxu0 0.0
  %492 = vmatpush1.msra.mxu0 0.0
  %493 = vmatprep.subr.mxu0 0.0
  %494 = vmatpush1.msra.mxu0 0.0
  %495 = vmatprep.subr.mxu0 0.0
  %496 = vmatpush1.msra.mxu0 0.0
  %497 = vmatprep.subr.mxu0 0.0
  %498 = vmatpush1.msra.mxu0 0.0
  %499 = vmatprep.subr.mxu0 0.0
  %500 = vmatpush1.msra.mxu0 0.0
  %501 = vmatprep.subr.mxu0 0.0
  %502 = vmatpush1.msra.mxu0 0.0
  %503 = vmatprep.subr.mxu0 0.0
  %504 = vmatpush1.msra.mxu0 %v479
  %505 = vmatprep.subr.mxu0 0.0
  %506 = vmatpush1.msra.mxu0 %v478
  %507 = vmatprep.subr.mxu0 0.0
  %508 = vmatpush1.msra.mxu0 %v477
  %509 = vmatprep.subr.mxu0 0.0
  %510 = vmatpush1.msra.mxu0 %v476
  %511 = vmatprep.subr.mxu0 0.0
  %512 = vmatpush1.msra.mxu0 %v475
  %513 = vmatprep.subr.mxu0 0.0
  %514 = vmatpush1.msra.mxu0 %v474
  %515 = vmatprep.subr.mxu0 0.0
  %516 = vmatpush1.msra.mxu0 %v473
  %517 = vmatprep.subr.mxu0 0.0
  %518 = vmatpush1.msra.mxu0 %v472
  %519 = vmatprep.subr.mxu0 0.0
  %520 = vmatpush2.msra.mxu0 0.0
  %521 = vmatprep.subr.mxu0 0.0
  %522 = vmatpush2.msra.mxu0 0.0
  %523 = vmatprep.subr.mxu0 0.0
  %524 = vmatpush2.msra.mxu0 0.0
  %525 = vmatprep.subr.mxu0 0.0
  %526 = vmatpush2.msra.mxu0 0.0
  %527 = vmatprep.subr.mxu0 0.0
  %528 = vmatpush2.msra.mxu0 0.0
  %529 = vmatprep.subr.mxu0 0.0
  %530 = vmatpush2.msra.mxu0 0.0
  %531 = vmatprep.subr.mxu0 0.0
  %532 = vmatpush2.msra.mxu0 0.0
  %533 = vmatprep.subr.mxu0 0.0
  %534 = vmatpush2.msra.mxu0 0.0
  %535 = vmatprep.subr.mxu0 0.0
  %536 = vmatpush2.msra.mxu0 0.0
  %537 = vmatprep.subr.mxu0 0.0
  %538 = vmatpush2.msra.mxu0 0.0
  %539 = vmatprep.subr.mxu0 0.0
  %540 = vmatpush2.msra.mxu0 0.0
  %541 = vmatprep.subr.mxu0 0.0
  %542 = vmatpush2.msra.mxu0 0.0
  %543 = vmatprep.subr.mxu0 0.0
  %544 = vmatpush2.msra.mxu0 0.0
  %545 = vmatprep.subr.mxu0 0.0
  %546 = vmatpush2.msra.mxu0 0.0
  %547 = vmatprep.subr.mxu0 0.0
  %548 = vmatpush2.msra.mxu0 0.0
  %549 = vmatprep.subr.mxu0 0.0
  %550 = vmatpush2.msra.mxu0 0.0
  %551 = vmatprep.mubr.f32.mxu0 0.0
  %552 = vmatmul.mubr.f32.gmra.mxu0 %v86
  %v553 = vpop.f32.mrf.mxu0
  %v554 = vadd.f32 %v485, %v553
  %v555 = vpop.f32.mrf.mxu0
  %556 = vdwg.mxu0
  %v557 = vld [vmem:[%s5] sm:$0xff]
  %v558 = vld [vmem:[%s5 + $0x8] sm:$0xff]
  %559 = vmatprep.subr.mxu0 0.0
  %560 = vmatpush1.msra.mxu0 0.0
  %561 = vmatprep.subr.mxu0 0.0
  %562 = vmatpush1.msra.mxu0 0.0
  %563 = vmatprep.subr.mxu0 0.0
  %564 = vmatpush1.msra.mxu0 0.0
  %565 = vmatprep.subr.mxu0 0.0
  %566 = vmatpush1.msra.mxu0 0.0
  %567 = vmatprep.subr.mxu0 0.0
  %568 = vmatpush1.msra.mxu0 0.0
  %569 = vmatprep.subr.mxu0 0.0
  %570 = vmatpush1.msra.mxu0 0.0
  %571 = vmatprep.subr.mxu0 0.0
  %572 = vmatpush1.msra.mxu0 0.0
  %573 = vmatprep.subr.mxu0 0.0
  %574 = vmatpush1.msra.mxu0 0.0
  %575 = vmatprep.subr.mxu0 0.0
  %576 = vmatpush1.msra.mxu0 0.0
  %577 = vmatprep.subr.mxu0 0.0
  %578 = vmatpush1.msra.mxu0 0.0
  %579 = vmatprep.subr.mxu0 0.0
  %580 = vmatpush1.msra.mxu0 0.0
  %581 = vmatprep.subr.mxu0 0.0
  %582 = vmatpush1.msra.mxu0 0.0
  %583 = vmatprep.subr.mxu0 0.0
  %584 = vmatpush1.msra.mxu0 0.0
  %585 = vmatprep.subr.mxu0 0.0
  %586 = vmatpush1.msra.mxu0 0.0
  %587 = vmatprep.subr.mxu0 0.0
  %588 = vmatpush1.msra.mxu0 %v558
  %589 = vmatprep.subr.mxu0 0.0
  %590 = vmatpush1.msra.mxu0 %v557
  %591 = vmatprep.subr.mxu0 0.0
  %592 = vmatpush2.msra.mxu0 0.0
  %593 = vmatprep.subr.mxu0 0.0
  %594 = vmatpush2.msra.mxu0 0.0
  %595 = vmatprep.subr.mxu0 0.0
  %596 = vmatpush2.msra.mxu0 0.0
  %597 = vmatprep.subr.mxu0 0.0
  %598 = vmatpush2.msra.mxu0 0.0
  %599 = vmatprep.subr.mxu0 0.0
  %600 = vmatpush2.msra.mxu0 0.0
  %601 = vmatprep.subr.mxu0 0.0
  %602 = vmatpush2.msra.mxu0 0.0
  %603 = vmatprep.subr.mxu0 0.0
  %604 = vmatpush2.msra.mxu0 0.0
  %605 = vmatprep.subr.mxu0 0.0
  %606 = vmatpush2.msra.mxu0 0.0
  %607 = vmatprep.subr.mxu0 0.0
  %608 = vmatpush2.msra.mxu0 0.0
  %609 = vmatprep.subr.mxu0 0.0
  %610 = vmatpush2.msra.mxu0 0.0
  %611 = vmatprep.subr.mxu0 0.0
  %612 = vmatpush2.msra.mxu0 0.0
  %613 = vmatprep.subr.mxu0 0.0
  %614 = vmatpush2.msra.mxu0 0.0
  %615 = vmatprep.subr.mxu0 0.0
  %616 = vmatpush2.msra.mxu0 0.0
  %617 = vmatprep.subr.mxu0 0.0
  %618 = vmatpush2.msra.mxu0 0.0
  %619 = vmatprep.subr.mxu0 0.0
  %620 = vmatpush2.msra.mxu0 0.0
  %621 = vmatprep.subr.mxu0 0.0
  %622 = vmatpush2.msra.mxu0 0.0
  %623 = vmatprep.mubr.f32.mxu0 0.0
  %624 = vmatmul.mubr.f32.gmra.mxu0 %v162
  %v625 = vpop.f32.mrf.mxu0
  %v626 = vadd.f32 0.0, %v625
  %v627 = vpop.f32.mrf.mxu0
  %628 = vdwg.mxu0
  %v630 = vrot.slane %v626, 4
  %v632 = vadd.f32 %v554, %v630
  %v633 = vxor.u32 %v632, 2147483648
  %v634 = vmul.f32 %v633, 1.442695
  %v635 = vpow.pop %v634
  %v636 = vadd.f32 %v635, 1.0
  %v637 = vrcp.pop %v636
  %v638 = vmul.f32 1.0, %v637
  %v639 = vtanh.pop %v632
  %v640 = vmul.f32 %v638, 0.0
  %642 = vrot.lane.b32.xlu0 %v639, 96
  %v643 = vpop.permute.xlu0 %642
  %v645 = vmul.f32 %v638, %v643
  %647 = vrot.lane.b32.xlu0 %v645, 16
  %v648 = vpop.permute.xlu0 %647
  %v650 = vadd.f32 %v640, %v648
  %v651 = vtanh.pop %v650
  %653 = vrot.lane.b32.xlu0 %v651, 32
  %v654 = vpop.permute.xlu0 %653
  %v656 = vmul.f32 %v638, %v654
  %v658 = vrot.slane %v656, 4
  %659 = vrot.lane.b32.xlu0 %v658, 80
  %v660 = vpop.permute.xlu0 %659
  %v661 = vsel %vm160, %v660, 0
  %663 = vmatprep.subr.mxu0 0.0
  %664 = vmatpush1.msra.mxu0 0.0
  %665 = vmatprep.subr.mxu0 0.0
  %666 = vmatpush1.msra.mxu0 0.0
  %667 = vmatprep.subr.mxu0 0.0
  %668 = vmatpush1.msra.mxu0 0.0
  %669 = vmatprep.subr.mxu0 0.0
  %670 = vmatpush1.msra.mxu0 0.0
  %671 = vmatprep.subr.mxu0 0.0
  %672 = vmatpush1.msra.mxu0 0.0
  %673 = vmatprep.subr.mxu0 0.0
  %674 = vmatpush1.msra.mxu0 0.0
  %675 = vmatprep.subr.mxu0 0.0
  %676 = vmatpush1.msra.mxu0 0.0
  %677 = vmatprep.subr.mxu0 0.0
  %678 = vmatpush1.msra.mxu0 0.0
  %679 = vmatprep.subr.mxu0 0.0
  %680 = vmatpush1.msra.mxu0 0.0
  %681 = vmatprep.subr.mxu0 0.0
  %682 = vmatpush1.msra.mxu0 0.0
  %683 = vmatprep.subr.mxu0 0.0
  %684 = vmatpush1.msra.mxu0 0.0
  %685 = vmatprep.subr.mxu0 0.0
  %686 = vmatpush1.msra.mxu0 0.0
  %687 = vmatprep.subr.mxu0 0.0
  %688 = vmatpush1.msra.mxu0 0.0
  %689 = vmatprep.subr.mxu0 0.0
  %690 = vmatpush1.msra.mxu0 0.0
  %691 = vmatprep.subr.mxu0 0.0
  %692 = vmatpush1.msra.mxu0 %v558
  %693 = vmatprep.subr.mxu0 0.0
  %694 = vmatpush1.msra.mxu0 %v557
  %695 = vmatprep.subr.mxu0 0.0
  %696 = vmatpush2.msra.mxu0 0.0
  %697 = vmatprep.subr.mxu0 0.0
  %698 = vmatpush2.msra.mxu0 0.0
  %699 = vmatprep.subr.mxu0 0.0
  %700 = vmatpush2.msra.mxu0 0.0
  %701 = vmatprep.subr.mxu0 0.0
  %702 = vmatpush2.msra.mxu0 0.0
  %703 = vmatprep.subr.mxu0 0.0
  %704 = vmatpush2.msra.mxu0 0.0
  %705 = vmatprep.subr.mxu0 0.0
  %706 = vmatpush2.msra.mxu0 0.0
  %707 = vmatprep.subr.mxu0 0.0
  %708 = vmatpush2.msra.mxu0 0.0
  %709 = vmatprep.subr.mxu0 0.0
  %710 = vmatpush2.msra.mxu0 0.0
  %711 = vmatprep.subr.mxu0 0.0
  %712 = vmatpush2.msra.mxu0 0.0
  %713 = vmatprep.subr.mxu0 0.0
  %714 = vmatpush2.msra.mxu0 0.0
  %715 = vmatprep.subr.mxu0 0.0
  %716 = vmatpush2.msra.mxu0 0.0
  %717 = vmatprep.subr.mxu0 0.0
  %718 = vmatpush2.msra.mxu0 0.0
  %719 = vmatprep.subr.mxu0 0.0
  %720 = vmatpush2.msra.mxu0 0.0
  %721 = vmatprep.subr.mxu0 0.0
  %722 = vmatpush2.msra.mxu0 0.0
  %723 = vmatprep.subr.mxu0 0.0
  %724 = vmatpush2.msra.mxu0 0.0
  %725 = vmatprep.subr.mxu0 0.0
  %726 = vmatpush2.msra.mxu0 0.0
  %727 = vmatprep.mubr.f32.mxu0 0.0
  %728 = vmatmul.mubr.f32.gmra.mxu0 %v661
  %v729 = vpop.f32.mrf.mxu0
  %v730 = vadd.f32 0.0, %v729
  %v731 = vpop.f32.mrf.mxu0
  %732 = vdwg.mxu0
  %v734 = vrot.slane %v730, 6
  %v736 = vadd.f32 %v554, %v734
  %v737 = vxor.u32 %v736, 2147483648
  %v738 = vmul.f32 %v737, 1.442695
  %v739 = vpow.pop %v738
  %v740 = vadd.f32 %v739, 1.0
  %v741 = vrcp.pop %v740
  %v742 = vmul.f32 1.0, %v741
  %v743 = vtanh.pop %v736
  %v745 = vrot.slane %v650, 2
  %v747 = vmul.f32 %v742, %v745
  %749 = vrot.lane.b32.xlu0 %v743, 96
  %v750 = vpop.permute.xlu0 %749
  %v752 = vmul.f32 %v742, %v750
  %754 = vrot.lane.b32.xlu0 %v752, 16
  %v755 = vpop.permute.xlu0 %754
  %v757 = vadd.f32 %v747, %v755
  %v758 = vtanh.pop %v757
  %760 = vrot.lane.b32.xlu0 %v758, 32
  %v761 = vpop.permute.xlu0 %760
  %v763 = vmul.f32 %v742, %v761
  %v765 = vrot.slane %v763, 2
  %766 = vrot.lane.b32.xlu0 %v765, 80
  %v767 = vpop.permute.xlu0 %766
  %v768 = vsel %vm160, %v767, 0
  %770 = vmatprep.subr.mxu0 0.0
  %771 = vmatpush1.msra.mxu0 0.0
  %772 = vmatprep.subr.mxu0 0.0
  %773 = vmatpush1.msra.mxu0 0.0
  %774 = vmatprep.subr.mxu0 0.0
  %775 = vmatpush1.msra.mxu0 0.0
  %776 = vmatprep.subr.mxu0 0.0
  %777 = vmatpush1.msra.mxu0 0.0
  %778 = vmatprep.subr.mxu0 0.0
  %779 = vmatpush1.msra.mxu0 0.0
  %780 = vmatprep.subr.mxu0 0.0
  %781 = vmatpush1.msra.mxu0 0.0
  %782 = vmatprep.subr.mxu0 0.0
  %783 = vmatpush1.msra.mxu0 0.0
  %784 = vmatprep.subr.mxu0 0.0
  %785 = vmatpush1.msra.mxu0 0.0
  %786 = vmatprep.subr.mxu0 0.0
  %787 = vmatpush1.msra.mxu0 0.0
  %788 = vmatprep.subr.mxu0 0.0
  %789 = vmatpush1.msra.mxu0 0.0
  %790 = vmatprep.subr.mxu0 0.0
  %791 = vmatpush1.msra.mxu0 0.0
  %792 = vmatprep.subr.mxu0 0.0
  %793 = vmatpush1.msra.mxu0 0.0
  %794 = vmatprep.subr.mxu0 0.0
  %795 = vmatpush1.msra.mxu0 0.0
  %796 = vmatprep.subr.mxu0 0.0
  %797 = vmatpush1.msra.mxu0 0.0
  %798 = vmatprep.subr.mxu0 0.0
  %799 = vmatpush1.msra.mxu0 %v558
  %800 = vmatprep.subr.mxu0 0.0
  %801 = vmatpush1.msra.mxu0 %v557
  %802 = vmatprep.subr.mxu0 0.0
  %803 = vmatpush2.msra.mxu0 0.0
  %804 = vmatprep.subr.mxu0 0.0
  %805 = vmatpush2.msra.mxu0 0.0
  %806 = vmatprep.subr.mxu0 0.0
  %807 = vmatpush2.msra.mxu0 0.0
  %808 = vmatprep.subr.mxu0 0.0
  %809 = vmatpush2.msra.mxu0 0.0
  %810 = vmatprep.subr.mxu0 0.0
  %811 = vmatpush2.msra.mxu0 0.0
  %812 = vmatprep.subr.mxu0 0.0
  %813 = vmatpush2.msra.mxu0 0.0
  %814 = vmatprep.subr.mxu0 0.0
  %815 = vmatpush2.msra.mxu0 0.0
  %816 = vmatprep.subr.mxu0 0.0
  %817 = vmatpush2.msra.mxu0 0.0
  %818 = vmatprep.subr.mxu0 0.0
  %819 = vmatpush2.msra.mxu0 0.0
  %820 = vmatprep.subr.mxu0 0.0
  %821 = vmatpush2.msra.mxu0 0.0
  %822 = vmatprep.subr.mxu0 0.0
  %823 = vmatpush2.msra.mxu0 0.0
  %824 = vmatprep.subr.mxu0 0.0
  %825 = vmatpush2.msra.mxu0 0.0
  %826 = vmatprep.subr.mxu0 0.0
  %827 = vmatpush2.msra.mxu0 0.0
  %828 = vmatprep.subr.mxu0 0.0
  %829 = vmatpush2.msra.mxu0 0.0
  %830 = vmatprep.subr.mxu0 0.0
  %831 = vmatpush2.msra.mxu0 0.0
  %832 = vmatprep.subr.mxu0 0.0
  %833 = vmatpush2.msra.mxu0 0.0
  %834 = vmatprep.mubr.f32.mxu0 0.0
  %835 = vmatmul.mubr.f32.gmra.mxu0 %v768
  %v836 = vpop.f32.mrf.mxu0
  %v837 = vadd.f32 0.0, %v836
  %v838 = vpop.f32.mrf.mxu0
  %839 = vdwg.mxu0
  %v840 = vadd.f32 %v554, %v837
  %v841 = vxor.u32 %v840, 2147483648
  %v842 = vmul.f32 %v841, 1.442695
  %v843 = vpow.pop %v842
  %v844 = vadd.f32 %v843, 1.0
  %v845 = vrcp.pop %v844
  %v846 = vmul.f32 1.0, %v845
  %v847 = vtanh.pop %v840
  %v849 = vrot.slane %v757, 2
  %v851 = vmul.f32 %v846, %v849
  %853 = vrot.lane.b32.xlu0 %v847, 96
  %v854 = vpop.permute.xlu0 %853
  %v856 = vmul.f32 %v846, %v854
  %858 = vrot.lane.b32.xlu0 %v856, 16
  %v859 = vpop.permute.xlu0 %858
  %v861 = vadd.f32 %v851, %v859
  %v862 = vtanh.pop %v861
  %864 = vrot.lane.b32.xlu0 %v862, 32
  %v865 = vpop.permute.xlu0 %864
  %v867 = vmul.f32 %v846, %v865
  %870 = vrot.lane.b32.xlu0 %v867, 96
  %v871 = vpop.permute.xlu0 %870
  %v873 = vsel %vm160, %v261, %v871
  %874 = vrot.lane.b32.xlu0 %v364, 80
  %v875 = vpop.permute.xlu0 %874
  %877 = vrot.lane.b32.xlu0 %v763, 96
  %v878 = vpop.permute.xlu0 %877
  %v880 = vsel %vm160, %v875, %v878
  %882 = vrot.lane.b32.xlu0 %v471, 80
  %v883 = vpop.permute.xlu0 %882
  %885 = vrot.lane.b32.xlu0 %v656, 96
  %v886 = vpop.permute.xlu0 %885
  %v888 = vsel %vm160, %v883, %v886
  %vm889 = vcmask 1041408
  %v890 = vsel %vm889, %v873, %v880
  %vm891 = vcmask 1043456
  %v892 = vsel %vm891, %v890, %v888
  %v893 = vld [vmem:[%s7] sm:$0xff]
  %v894 = vld [vmem:[%s7 + $0x8] sm:$0xff]
  %v895 = vld [vmem:[%s7 + $0x10] sm:$0xff]
  %v896 = vld [vmem:[%s7 + $0x18] sm:$0xff]
  %v897 = vld [vmem:[%s9] sm:$0x1]
  %v899 = vlaneseq
  %v900 = vshrl.u32 %v899, 7
  %v901 = vsub.s32 0, %v900
  %v902 = vrot.slane %v897, %v901
  %vm904 = vcmask 261120
  %v906 = vsel %vm904, %v892, 0
  %908 = vmatprep.subr.mxu0 0.0
  %909 = vmatpush1.msra.mxu0 0.0
  %910 = vmatprep.subr.mxu0 0.0
  %911 = vmatpush1.msra.mxu0 0.0
  %912 = vmatprep.subr.mxu0 0.0
  %913 = vmatpush1.msra.mxu0 0.0
  %914 = vmatprep.subr.mxu0 0.0
  %915 = vmatpush1.msra.mxu0 0.0
  %916 = vmatprep.subr.mxu0 0.0
  %917 = vmatpush1.msra.mxu0 0.0
  %918 = vmatprep.subr.mxu0 0.0
  %919 = vmatpush1.msra.mxu0 0.0
  %920 = vmatprep.subr.mxu0 0.0
  %921 = vmatpush1.msra.mxu0 0.0
  %922 = vmatprep.subr.mxu0 0.0
  %923 = vmatpush1.msra.mxu0 0.0
  %924 = vmatprep.subr.mxu0 0.0
  %925 = vmatpush1.msra.mxu0 0.0
  %926 = vmatprep.subr.mxu0 0.0
  %927 = vmatpush1.msra.mxu0 0.0
  %928 = vmatprep.subr.mxu0 0.0
  %929 = vmatpush1.msra.mxu0 0.0
  %930 = vmatprep.subr.mxu0 0.0
  %931 = vmatpush1.msra.mxu0 0.0
  %932 = vmatprep.subr.mxu0 0.0
  %933 = vmatpush1.msra.mxu0 %v896
  %934 = vmatprep.subr.mxu0 0.0
  %935 = vmatpush1.msra.mxu0 %v895
  %936 = vmatprep.subr.mxu0 0.0
  %937 = vmatpush1.msra.mxu0 %v894
  %938 = vmatprep.subr.mxu0 0.0
  %939 = vmatpush1.msra.mxu0 %v893
  %940 = vmatprep.subr.mxu0 0.0
  %941 = vmatpush2.msra.mxu0 0.0
  %942 = vmatprep.subr.mxu0 0.0
  %943 = vmatpush2.msra.mxu0 0.0
  %944 = vmatprep.subr.mxu0 0.0
  %945 = vmatpush2.msra.mxu0 0.0
  %946 = vmatprep.subr.mxu0 0.0
  %947 = vmatpush2.msra.mxu0 0.0
  %948 = vmatprep.subr.mxu0 0.0
  %949 = vmatpush2.msra.mxu0 0.0
  %950 = vmatprep.subr.mxu0 0.0
  %951 = vmatpush2.msra.mxu0 0.0
  %952 = vmatprep.subr.mxu0 0.0
  %953 = vmatpush2.msra.mxu0 0.0
  %954 = vmatprep.subr.mxu0 0.0
  %955 = vmatpush2.msra.mxu0 0.0
  %956 = vmatprep.subr.mxu0 0.0
  %957 = vmatpush2.msra.mxu0 0.0
  %958 = vmatprep.subr.mxu0 0.0
  %959 = vmatpush2.msra.mxu0 0.0
  %960 = vmatprep.subr.mxu0 0.0
  %961 = vmatpush2.msra.mxu0 0.0
  %962 = vmatprep.subr.mxu0 0.0
  %963 = vmatpush2.msra.mxu0 0.0
  %964 = vmatprep.subr.mxu0 0.0
  %965 = vmatpush2.msra.mxu0 0.0
  %966 = vmatprep.subr.mxu0 0.0
  %967 = vmatpush2.msra.mxu0 0.0
  %968 = vmatprep.subr.mxu0 0.0
  %969 = vmatpush2.msra.mxu0 0.0
  %970 = vmatprep.subr.mxu0 0.0
  %971 = vmatpush2.msra.mxu0 0.0
  %972 = vmatprep.mubr.f32.mxu0 0.0
  %973 = vmatmul.mubr.f32.gmra.mxu0 %v906
  %v974 = vpop.f32.mrf.mxu0
  %v975 = vadd.f32 %v902, %v974
  %v976 = vpop.f32.mrf.mxu0
  %977 = vdwg.mxu0
  %v978 = vld [vmem:[%s8] sm:$0xff]
  %v979 = vld [vmem:[%s8 + $0x8] sm:$0xff]
  %980 = vmatprep.subr.mxu0 0.0
  %981 = vmatpush1.msra.mxu0 0.0
  %982 = vmatprep.subr.mxu0 0.0
  %983 = vmatpush1.msra.mxu0 0.0
  %984 = vmatprep.subr.mxu0 0.0
  %985 = vmatpush1.msra.mxu0 0.0
  %986 = vmatprep.subr.mxu0 0.0
  %987 = vmatpush1.msra.mxu0 0.0
  %988 = vmatprep.subr.mxu0 0.0
  %989 = vmatpush1.msra.mxu0 0.0
  %990 = vmatprep.subr.mxu0 0.0
  %991 = vmatpush1.msra.mxu0 0.0
  %992 = vmatprep.subr.mxu0 0.0
  %993 = vmatpush1.msra.mxu0 0.0
  %994 = vmatprep.subr.mxu0 0.0
  %995 = vmatpush1.msra.mxu0 0.0
  %996 = vmatprep.subr.mxu0 0.0
  %997 = vmatpush1.msra.mxu0 0.0
  %998 = vmatprep.subr.mxu0 0.0
  %999 = vmatpush1.msra.mxu0 0.0
  %1000 = vmatprep.subr.mxu0 0.0
  %1001 = vmatpush1.msra.mxu0 0.0
  %1002 = vmatprep.subr.mxu0 0.0
  %1003 = vmatpush1.msra.mxu0 0.0
  %1004 = vmatprep.subr.mxu0 0.0
  %1005 = vmatpush1.msra.mxu0 0.0
  %1006 = vmatprep.subr.mxu0 0.0
  %1007 = vmatpush1.msra.mxu0 0.0
  %1008 = vmatprep.subr.mxu0 0.0
  %1009 = vmatpush1.msra.mxu0 %v979
  %1010 = vmatprep.subr.mxu0 0.0
  %1011 = vmatpush1.msra.mxu0 %v978
  %1012 = vmatprep.subr.mxu0 0.0
  %1013 = vmatpush2.msra.mxu0 0.0
  %1014 = vmatprep.subr.mxu0 0.0
  %1015 = vmatpush2.msra.mxu0 0.0
  %1016 = vmatprep.subr.mxu0 0.0
  %1017 = vmatpush2.msra.mxu0 0.0
  %1018 = vmatprep.subr.mxu0 0.0
  %1019 = vmatpush2.msra.mxu0 0.0
  %1020 = vmatprep.subr.mxu0 0.0
  %1021 = vmatpush2.msra.mxu0 0.0
  %1022 = vmatprep.subr.mxu0 0.0
  %1023 = vmatpush2.msra.mxu0 0.0
  %1024 = vmatprep.subr.mxu0 0.0
  %1025 = vmatpush2.msra.mxu0 0.0
  %1026 = vmatprep.subr.mxu0 0.0
  %1027 = vmatpush2.msra.mxu0 0.0
  %1028 = vmatprep.subr.mxu0 0.0
  %1029 = vmatpush2.msra.mxu0 0.0
  %1030 = vmatprep.subr.mxu0 0.0
  %1031 = vmatpush2.msra.mxu0 0.0
  %1032 = vmatprep.subr.mxu0 0.0
  %1033 = vmatpush2.msra.mxu0 0.0
  %1034 = vmatprep.subr.mxu0 0.0
  %1035 = vmatpush2.msra.mxu0 0.0
  %1036 = vmatprep.subr.mxu0 0.0
  %1037 = vmatpush2.msra.mxu0 0.0
  %1038 = vmatprep.subr.mxu0 0.0
  %1039 = vmatpush2.msra.mxu0 0.0
  %1040 = vmatprep.subr.mxu0 0.0
  %1041 = vmatpush2.msra.mxu0 0.0
  %1042 = vmatprep.subr.mxu0 0.0
  %1043 = vmatpush2.msra.mxu0 0.0
  %1044 = vmatprep.mubr.f32.mxu0 0.0
  %1045 = vmatmul.mubr.f32.gmra.mxu0 %v162
  %v1046 = vpop.f32.mrf.mxu0
  %v1047 = vadd.f32 0.0, %v1046
  %v1048 = vpop.f32.mrf.mxu0
  %1049 = vdwg.mxu0
  %v1050 = vadd.f32 %v975, %v1047
  %v1051 = vxor.u32 %v1050, 2147483648
  %v1052 = vmul.f32 %v1051, 1.442695
  %v1053 = vpow.pop %v1052
  %v1054 = vadd.f32 %v1053, 1.0
  %v1055 = vrcp.pop %v1054
  %v1056 = vmul.f32 1.0, %v1055
  %v1057 = vtanh.pop %v1050
  %v1058 = vmul.f32 %v1056, 0.0
  %1060 = vrot.lane.b32.xlu0 %v1057, 96
  %v1061 = vpop.permute.xlu0 %1060
  %v1063 = vmul.f32 %v1056, %v1061
  %1065 = vrot.lane.b32.xlu0 %v1063, 16
  %v1066 = vpop.permute.xlu0 %1065
  %v1068 = vadd.f32 %v1058, %v1066
  %v1069 = vtanh.pop %v1068
  %1071 = vrot.lane.b32.xlu0 %v1069, 32
  %v1072 = vpop.permute.xlu0 %1071
  %v1074 = vmul.f32 %v1056, %v1072
  %1076 = vrot.lane.b32.xlu0 %v1074, 80
  %v1077 = vpop.permute.xlu0 %1076
  %v1078 = vsel %vm160, %v1077, 0
  %1080 = vmatprep.subr.mxu0 0.0
  %1081 = vmatpush1.msra.mxu0 0.0
  %1082 = vmatprep.subr.mxu0 0.0
  %1083 = vmatpush1.msra.mxu0 0.0
  %1084 = vmatprep.subr.mxu0 0.0
  %1085 = vmatpush1.msra.mxu0 0.0
  %1086 = vmatprep.subr.mxu0 0.0
  %1087 = vmatpush1.msra.mxu0 0.0
  %1088 = vmatprep.subr.mxu0 0.0
  %1089 = vmatpush1.msra.mxu0 0.0
  %1090 = vmatprep.subr.mxu0 0.0
  %1091 = vmatpush1.msra.mxu0 0.0
  %1092 = vmatprep.subr.mxu0 0.0
  %1093 = vmatpush1.msra.mxu0 0.0
  %1094 = vmatprep.subr.mxu0 0.0
  %1095 = vmatpush1.msra.mxu0 0.0
  %1096 = vmatprep.subr.mxu0 0.0
  %1097 = vmatpush1.msra.mxu0 0.0
  %1098 = vmatprep.subr.mxu0 0.0
  %1099 = vmatpush1.msra.mxu0 0.0
  %1100 = vmatprep.subr.mxu0 0.0
  %1101 = vmatpush1.msra.mxu0 0.0
  %1102 = vmatprep.subr.mxu0 0.0
  %1103 = vmatpush1.msra.mxu0 0.0
  %1104 = vmatprep.subr.mxu0 0.0
  %1105 = vmatpush1.msra.mxu0 0.0
  %1106 = vmatprep.subr.mxu0 0.0
  %1107 = vmatpush1.msra.mxu0 0.0
  %1108 = vmatprep.subr.mxu0 0.0
  %1109 = vmatpush1.msra.mxu0 %v979
  %1110 = vmatprep.subr.mxu0 0.0
  %1111 = vmatpush1.msra.mxu0 %v978
  %1112 = vmatprep.subr.mxu0 0.0
  %1113 = vmatpush2.msra.mxu0 0.0
  %1114 = vmatprep.subr.mxu0 0.0
  %1115 = vmatpush2.msra.mxu0 0.0
  %1116 = vmatprep.subr.mxu0 0.0
  %1117 = vmatpush2.msra.mxu0 0.0
  %1118 = vmatprep.subr.mxu0 0.0
  %1119 = vmatpush2.msra.mxu0 0.0
  %1120 = vmatprep.subr.mxu0 0.0
  %1121 = vmatpush2.msra.mxu0 0.0
  %1122 = vmatprep.subr.mxu0 0.0
  %1123 = vmatpush2.msra.mxu0 0.0
  %1124 = vmatprep.subr.mxu0 0.0
  %1125 = vmatpush2.msra.mxu0 0.0
  %1126 = vmatprep.subr.mxu0 0.0
  %1127 = vmatpush2.msra.mxu0 0.0
  %1128 = vmatprep.subr.mxu0 0.0
  %1129 = vmatpush2.msra.mxu0 0.0
  %1130 = vmatprep.subr.mxu0 0.0
  %1131 = vmatpush2.msra.mxu0 0.0
  %1132 = vmatprep.subr.mxu0 0.0
  %1133 = vmatpush2.msra.mxu0 0.0
  %1134 = vmatprep.subr.mxu0 0.0
  %1135 = vmatpush2.msra.mxu0 0.0
  %1136 = vmatprep.subr.mxu0 0.0
  %1137 = vmatpush2.msra.mxu0 0.0
  %1138 = vmatprep.subr.mxu0 0.0
  %1139 = vmatpush2.msra.mxu0 0.0
  %1140 = vmatprep.subr.mxu0 0.0
  %1141 = vmatpush2.msra.mxu0 0.0
  %1142 = vmatprep.subr.mxu0 0.0
  %1143 = vmatpush2.msra.mxu0 0.0
  %1144 = vmatprep.mubr.f32.mxu0 0.0
  %1145 = vmatmul.mubr.f32.gmra.mxu0 %v1078
  %v1146 = vpop.f32.mrf.mxu0
  %v1147 = vadd.f32 0.0, %v1146
  %v1148 = vpop.f32.mrf.mxu0
  %1149 = vdwg.mxu0
  %v1151 = vrot.slane %v1147, 6
  %v1153 = vadd.f32 %v975, %v1151
  %v1154 = vxor.u32 %v1153, 2147483648
  %v1155 = vmul.f32 %v1154, 1.442695
  %v1156 = vpow.pop %v1155
  %v1157 = vadd.f32 %v1156, 1.0
  %v1158 = vrcp.pop %v1157
  %v1159 = vmul.f32 1.0, %v1158
  %v1160 = vtanh.pop %v1153
  %v1162 = vrot.slane %v1068, 6
  %v1164 = vmul.f32 %v1159, %v1162
  %1166 = vrot.lane.b32.xlu0 %v1160, 96
  %v1167 = vpop.permute.xlu0 %1166
  %v1169 = vmul.f32 %v1159, %v1167
  %1171 = vrot.lane.b32.xlu0 %v1169, 16
  %v1172 = vpop.permute.xlu0 %1171
  %v1174 = vadd.f32 %v1164, %v1172
  %v1175 = vtanh.pop %v1174
  %1177 = vrot.lane.b32.xlu0 %v1175, 32
  %v1178 = vpop.permute.xlu0 %1177
  %v1180 = vmul.f32 %v1159, %v1178
  %v1182 = vrot.slane %v1180, 2
  %1183 = vrot.lane.b32.xlu0 %v1182, 80
  %v1184 = vpop.permute.xlu0 %1183
  %v1185 = vsel %vm160, %v1184, 0
  %1187 = vmatprep.subr.mxu0 0.0
  %1188 = vmatpush1.msra.mxu0 0.0
  %1189 = vmatprep.subr.mxu0 0.0
  %1190 = vmatpush1.msra.mxu0 0.0
  %1191 = vmatprep.subr.mxu0 0.0
  %1192 = vmatpush1.msra.mxu0 0.0
  %1193 = vmatprep.subr.mxu0 0.0
  %1194 = vmatpush1.msra.mxu0 0.0
  %1195 = vmatprep.subr.mxu0 0.0
  %1196 = vmatpush1.msra.mxu0 0.0
  %1197 = vmatprep.subr.mxu0 0.0
  %1198 = vmatpush1.msra.mxu0 0.0
  %1199 = vmatprep.subr.mxu0 0.0
  %1200 = vmatpush1.msra.mxu0 0.0
  %1201 = vmatprep.subr.mxu0 0.0
  %1202 = vmatpush1.msra.mxu0 0.0
  %1203 = vmatprep.subr.mxu0 0.0
  %1204 = vmatpush1.msra.mxu0 0.0
  %1205 = vmatprep.subr.mxu0 0.0
  %1206 = vmatpush1.msra.mxu0 0.0
  %1207 = vmatprep.subr.mxu0 0.0
  %1208 = vmatpush1.msra.mxu0 0.0
  %1209 = vmatprep.subr.mxu0 0.0
  %1210 = vmatpush1.msra.mxu0 0.0
  %1211 = vmatprep.subr.mxu0 0.0
  %1212 = vmatpush1.msra.mxu0 0.0
  %1213 = vmatprep.subr.mxu0 0.0
  %1214 = vmatpush1.msra.mxu0 0.0
  %1215 = vmatprep.subr.mxu0 0.0
  %1216 = vmatpush1.msra.mxu0 %v979
  %1217 = vmatprep.subr.mxu0 0.0
  %1218 = vmatpush1.msra.mxu0 %v978
  %1219 = vmatprep.subr.mxu0 0.0
  %1220 = vmatpush2.msra.mxu0 0.0
  %1221 = vmatprep.subr.mxu0 0.0
  %1222 = vmatpush2.msra.mxu0 0.0
  %1223 = vmatprep.subr.mxu0 0.0
  %1224 = vmatpush2.msra.mxu0 0.0
  %1225 = vmatprep.subr.mxu0 0.0
  %1226 = vmatpush2.msra.mxu0 0.0
  %1227 = vmatprep.subr.mxu0 0.0
  %1228 = vmatpush2.msra.mxu0 0.0
  %1229 = vmatprep.subr.mxu0 0.0
  %1230 = vmatpush2.msra.mxu0 0.0
  %1231 = vmatprep.subr.mxu0 0.0
  %1232 = vmatpush2.msra.mxu0 0.0
  %1233 = vmatprep.subr.mxu0 0.0
  %1234 = vmatpush2.msra.mxu0 0.0
  %1235 = vmatprep.subr.mxu0 0.0
  %1236 = vmatpush2.msra.mxu0 0.0
  %1237 = vmatprep.subr.mxu0 0.0
  %1238 = vmatpush2.msra.mxu0 0.0
  %1239 = vmatprep.subr.mxu0 0.0
  %1240 = vmatpush2.msra.mxu0 0.0
  %1241 = vmatprep.subr.mxu0 0.0
  %1242 = vmatpush2.msra.mxu0 0.0
  %1243 = vmatprep.subr.mxu0 0.0
  %1244 = vmatpush2.msra.mxu0 0.0
  %1245 = vmatprep.subr.mxu0 0.0
  %1246 = vmatpush2.msra.mxu0 0.0
  %1247 = vmatprep.subr.mxu0 0.0
  %1248 = vmatpush2.msra.mxu0 0.0
  %1249 = vmatprep.subr.mxu0 0.0
  %1250 = vmatpush2.msra.mxu0 0.0
  %1251 = vmatprep.mubr.f32.mxu0 0.0
  %1252 = vmatmul.mubr.f32.gmra.mxu0 %v1185
  %v1253 = vpop.f32.mrf.mxu0
  %v1254 = vadd.f32 0.0, %v1253
  %v1255 = vpop.f32.mrf.mxu0
  %1256 = vdwg.mxu0
  %v1258 = vrot.slane %v1254, 4
  %v1260 = vadd.f32 %v975, %v1258
  %v1261 = vxor.u32 %v1260, 2147483648
  %v1262 = vmul.f32 %v1261, 1.442695
  %v1263 = vpow.pop %v1262
  %v1264 = vadd.f32 %v1263, 1.0
  %v1265 = vrcp.pop %v1264
  %v1266 = vmul.f32 1.0, %v1265
  %v1267 = vtanh.pop %v1260
  %v1269 = vrot.slane %v1174, 6
  %v1271 = vmul.f32 %v1266, %v1269
  %1273 = vrot.lane.b32.xlu0 %v1267, 96
  %v1274 = vpop.permute.xlu0 %1273
  %v1276 = vmul.f32 %v1266, %v1274
  %1278 = vrot.lane.b32.xlu0 %v1276, 16
  %v1279 = vpop.permute.xlu0 %1278
  %v1281 = vadd.f32 %v1271, %v1279
  %v1282 = vtanh.pop %v1281
  %1284 = vrot.lane.b32.xlu0 %v1282, 32
  %v1285 = vpop.permute.xlu0 %1284
  %v1287 = vmul.f32 %v1266, %v1285
  %v1288 = vld [vmem:[%s10] sm:$0xff]
  %v1289 = vld [vmem:[%s10 + $0x8] sm:$0xff]
  %v1290 = vld [vmem:[%s10 + $0x10] sm:$0xff]
  %v1291 = vld [vmem:[%s10 + $0x18] sm:$0xff]
  %v1292 = vld [vmem:[%s12] sm:$0x1]
  %v1294 = vlaneseq
  %v1295 = vshrl.u32 %v1294, 7
  %v1296 = vsub.s32 0, %v1295
  %v1297 = vrot.slane %v1292, %v1296
  %1299 = vmatprep.subr.mxu0 0.0
  %1300 = vmatpush1.msra.mxu0 0.0
  %1301 = vmatprep.subr.mxu0 0.0
  %1302 = vmatpush1.msra.mxu0 0.0
  %1303 = vmatprep.subr.mxu0 0.0
  %1304 = vmatpush1.msra.mxu0 0.0
  %1305 = vmatprep.subr.mxu0 0.0
  %1306 = vmatpush1.msra.mxu0 0.0
  %1307 = vmatprep.subr.mxu0 0.0
  %1308 = vmatpush1.msra.mxu0 0.0
  %1309 = vmatprep.subr.mxu0 0.0
  %1310 = vmatpush1.msra.mxu0 0.0
  %1311 = vmatprep.subr.mxu0 0.0
  %1312 = vmatpush1.msra.mxu0 0.0
  %1313 = vmatprep.subr.mxu0 0.0
  %1314 = vmatpush1.msra.mxu0 0.0
  %1315 = vmatprep.subr.mxu0 0.0
  %1316 = vmatpush1.msra.mxu0 0.0
  %1317 = vmatprep.subr.mxu0 0.0
  %1318 = vmatpush1.msra.mxu0 0.0
  %1319 = vmatprep.subr.mxu0 0.0
  %1320 = vmatpush1.msra.mxu0 0.0
  %1321 = vmatprep.subr.mxu0 0.0
  %1322 = vmatpush1.msra.mxu0 0.0
  %1323 = vmatprep.subr.mxu0 0.0
  %1324 = vmatpush1.msra.mxu0 %v1291
  %1325 = vmatprep.subr.mxu0 0.0
  %1326 = vmatpush1.msra.mxu0 %v1290
  %1327 = vmatprep.subr.mxu0 0.0
  %1328 = vmatpush1.msra.mxu0 %v1289
  %1329 = vmatprep.subr.mxu0 0.0
  %1330 = vmatpush1.msra.mxu0 %v1288
  %1331 = vmatprep.subr.mxu0 0.0
  %1332 = vmatpush2.msra.mxu0 0.0
  %1333 = vmatprep.subr.mxu0 0.0
  %1334 = vmatpush2.msra.mxu0 0.0
  %1335 = vmatprep.subr.mxu0 0.0
  %1336 = vmatpush2.msra.mxu0 0.0
  %1337 = vmatprep.subr.mxu0 0.0
  %1338 = vmatpush2.msra.mxu0 0.0
  %1339 = vmatprep.subr.mxu0 0.0
  %1340 = vmatpush2.msra.mxu0 0.0
  %1341 = vmatprep.subr.mxu0 0.0
  %1342 = vmatpush2.msra.mxu0 0.0
  %1343 = vmatprep.subr.mxu0 0.0
  %1344 = vmatpush2.msra.mxu0 0.0
  %1345 = vmatprep.subr.mxu0 0.0
  %1346 = vmatpush2.msra.mxu0 0.0
  %1347 = vmatprep.subr.mxu0 0.0
  %1348 = vmatpush2.msra.mxu0 0.0
  %1349 = vmatprep.subr.mxu0 0.0
  %1350 = vmatpush2.msra.mxu0 0.0
  %1351 = vmatprep.subr.mxu0 0.0
  %1352 = vmatpush2.msra.mxu0 0.0
  %1353 = vmatprep.subr.mxu0 0.0
  %1354 = vmatpush2.msra.mxu0 0.0
  %1355 = vmatprep.subr.mxu0 0.0
  %1356 = vmatpush2.msra.mxu0 0.0
  %1357 = vmatprep.subr.mxu0 0.0
  %1358 = vmatpush2.msra.mxu0 0.0
  %1359 = vmatprep.subr.mxu0 0.0
  %1360 = vmatpush2.msra.mxu0 0.0
  %1361 = vmatprep.subr.mxu0 0.0
  %1362 = vmatpush2.msra.mxu0 0.0
  %1363 = vmatprep.mubr.f32.mxu0 0.0
  %1364 = vmatmul.mubr.f32.gmra.mxu0 %v906
  %v1365 = vpop.f32.mrf.mxu0
  %v1366 = vadd.f32 %v1297, %v1365
  %v1367 = vpop.f32.mrf.mxu0
  %1368 = vdwg.mxu0
  %v1369 = vld [vmem:[%s11] sm:$0xff]
  %v1370 = vld [vmem:[%s11 + $0x8] sm:$0xff]
  %1371 = vmatprep.subr.mxu0 0.0
  %1372 = vmatpush1.msra.mxu0 0.0
  %1373 = vmatprep.subr.mxu0 0.0
  %1374 = vmatpush1.msra.mxu0 0.0
  %1375 = vmatprep.subr.mxu0 0.0
  %1376 = vmatpush1.msra.mxu0 0.0
  %1377 = vmatprep.subr.mxu0 0.0
  %1378 = vmatpush1.msra.mxu0 0.0
  %1379 = vmatprep.subr.mxu0 0.0
  %1380 = vmatpush1.msra.mxu0 0.0
  %1381 = vmatprep.subr.mxu0 0.0
  %1382 = vmatpush1.msra.mxu0 0.0
  %1383 = vmatprep.subr.mxu0 0.0
  %1384 = vmatpush1.msra.mxu0 0.0
  %1385 = vmatprep.subr.mxu0 0.0
  %1386 = vmatpush1.msra.mxu0 0.0
  %1387 = vmatprep.subr.mxu0 0.0
  %1388 = vmatpush1.msra.mxu0 0.0
  %1389 = vmatprep.subr.mxu0 0.0
  %1390 = vmatpush1.msra.mxu0 0.0
  %1391 = vmatprep.subr.mxu0 0.0
  %1392 = vmatpush1.msra.mxu0 0.0
  %1393 = vmatprep.subr.mxu0 0.0
  %1394 = vmatpush1.msra.mxu0 0.0
  %1395 = vmatprep.subr.mxu0 0.0
  %1396 = vmatpush1.msra.mxu0 0.0
  %1397 = vmatprep.subr.mxu0 0.0
  %1398 = vmatpush1.msra.mxu0 0.0
  %1399 = vmatprep.subr.mxu0 0.0
  %1400 = vmatpush1.msra.mxu0 %v1370
  %1401 = vmatprep.subr.mxu0 0.0
  %1402 = vmatpush1.msra.mxu0 %v1369
  %1403 = vmatprep.subr.mxu0 0.0
  %1404 = vmatpush2.msra.mxu0 0.0
  %1405 = vmatprep.subr.mxu0 0.0
  %1406 = vmatpush2.msra.mxu0 0.0
  %1407 = vmatprep.subr.mxu0 0.0
  %1408 = vmatpush2.msra.mxu0 0.0
  %1409 = vmatprep.subr.mxu0 0.0
  %1410 = vmatpush2.msra.mxu0 0.0
  %1411 = vmatprep.subr.mxu0 0.0
  %1412 = vmatpush2.msra.mxu0 0.0
  %1413 = vmatprep.subr.mxu0 0.0
  %1414 = vmatpush2.msra.mxu0 0.0
  %1415 = vmatprep.subr.mxu0 0.0
  %1416 = vmatpush2.msra.mxu0 0.0
  %1417 = vmatprep.subr.mxu0 0.0
  %1418 = vmatpush2.msra.mxu0 0.0
  %1419 = vmatprep.subr.mxu0 0.0
  %1420 = vmatpush2.msra.mxu0 0.0
  %1421 = vmatprep.subr.mxu0 0.0
  %1422 = vmatpush2.msra.mxu0 0.0
  %1423 = vmatprep.subr.mxu0 0.0
  %1424 = vmatpush2.msra.mxu0 0.0
  %1425 = vmatprep.subr.mxu0 0.0
  %1426 = vmatpush2.msra.mxu0 0.0
  %1427 = vmatprep.subr.mxu0 0.0
  %1428 = vmatpush2.msra.mxu0 0.0
  %1429 = vmatprep.subr.mxu0 0.0
  %1430 = vmatpush2.msra.mxu0 0.0
  %1431 = vmatprep.subr.mxu0 0.0
  %1432 = vmatpush2.msra.mxu0 0.0
  %1433 = vmatprep.subr.mxu0 0.0
  %1434 = vmatpush2.msra.mxu0 0.0
  %1435 = vmatprep.mubr.f32.mxu0 0.0
  %1436 = vmatmul.mubr.f32.gmra.mxu0 %v162
  %v1437 = vpop.f32.mrf.mxu0
  %v1438 = vadd.f32 0.0, %v1437
  %v1439 = vpop.f32.mrf.mxu0
  %1440 = vdwg.mxu0
  %v1442 = vrot.slane %v1438, 4
  %v1444 = vadd.f32 %v1366, %v1442
  %v1445 = vxor.u32 %v1444, 2147483648
  %v1446 = vmul.f32 %v1445, 1.442695
  %v1447 = vpow.pop %v1446
  %v1448 = vadd.f32 %v1447, 1.0
  %v1449 = vrcp.pop %v1448
  %v1450 = vmul.f32 1.0, %v1449
  %v1451 = vtanh.pop %v1444
  %v1452 = vmul.f32 %v1450, 0.0
  %1454 = vrot.lane.b32.xlu0 %v1451, 96
  %v1455 = vpop.permute.xlu0 %1454
  %v1457 = vmul.f32 %v1450, %v1455
  %1459 = vrot.lane.b32.xlu0 %v1457, 16
  %v1460 = vpop.permute.xlu0 %1459
  %v1462 = vadd.f32 %v1452, %v1460
  %v1463 = vtanh.pop %v1462
  %1465 = vrot.lane.b32.xlu0 %v1463, 32
  %v1466 = vpop.permute.xlu0 %1465
  %v1468 = vmul.f32 %v1450, %v1466
  %v1470 = vrot.slane %v1468, 4
  %1471 = vrot.lane.b32.xlu0 %v1470, 80
  %v1472 = vpop.permute.xlu0 %1471
  %v1473 = vsel %vm160, %v1472, 0
  %1475 = vmatprep.subr.mxu0 0.0
  %1476 = vmatpush1.msra.mxu0 0.0
  %1477 = vmatprep.subr.mxu0 0.0
  %1478 = vmatpush1.msra.mxu0 0.0
  %1479 = vmatprep.subr.mxu0 0.0
  %1480 = vmatpush1.msra.mxu0 0.0
  %1481 = vmatprep.subr.mxu0 0.0
  %1482 = vmatpush1.msra.mxu0 0.0
  %1483 = vmatprep.subr.mxu0 0.0
  %1484 = vmatpush1.msra.mxu0 0.0
  %1485 = vmatprep.subr.mxu0 0.0
  %1486 = vmatpush1.msra.mxu0 0.0
  %1487 = vmatprep.subr.mxu0 0.0
  %1488 = vmatpush1.msra.mxu0 0.0
  %1489 = vmatprep.subr.mxu0 0.0
  %1490 = vmatpush1.msra.mxu0 0.0
  %1491 = vmatprep.subr.mxu0 0.0
  %1492 = vmatpush1.msra.mxu0 0.0
  %1493 = vmatprep.subr.mxu0 0.0
  %1494 = vmatpush1.msra.mxu0 0.0
  %1495 = vmatprep.subr.mxu0 0.0
  %1496 = vmatpush1.msra.mxu0 0.0
  %1497 = vmatprep.subr.mxu0 0.0
  %1498 = vmatpush1.msra.mxu0 0.0
  %1499 = vmatprep.subr.mxu0 0.0
  %1500 = vmatpush1.msra.mxu0 0.0
  %1501 = vmatprep.subr.mxu0 0.0
  %1502 = vmatpush1.msra.mxu0 0.0
  %1503 = vmatprep.subr.mxu0 0.0
  %1504 = vmatpush1.msra.mxu0 %v1370
  %1505 = vmatprep.subr.mxu0 0.0
  %1506 = vmatpush1.msra.mxu0 %v1369
  %1507 = vmatprep.subr.mxu0 0.0
  %1508 = vmatpush2.msra.mxu0 0.0
  %1509 = vmatprep.subr.mxu0 0.0
  %1510 = vmatpush2.msra.mxu0 0.0
  %1511 = vmatprep.subr.mxu0 0.0
  %1512 = vmatpush2.msra.mxu0 0.0
  %1513 = vmatprep.subr.mxu0 0.0
  %1514 = vmatpush2.msra.mxu0 0.0
  %1515 = vmatprep.subr.mxu0 0.0
  %1516 = vmatpush2.msra.mxu0 0.0
  %1517 = vmatprep.subr.mxu0 0.0
  %1518 = vmatpush2.msra.mxu0 0.0
  %1519 = vmatprep.subr.mxu0 0.0
  %1520 = vmatpush2.msra.mxu0 0.0
  %1521 = vmatprep.subr.mxu0 0.0
  %1522 = vmatpush2.msra.mxu0 0.0
  %1523 = vmatprep.subr.mxu0 0.0
  %1524 = vmatpush2.msra.mxu0 0.0
  %1525 = vmatprep.subr.mxu0 0.0
  %1526 = vmatpush2.msra.mxu0 0.0
  %1527 = vmatprep.subr.mxu0 0.0
  %1528 = vmatpush2.msra.mxu0 0.0
  %1529 = vmatprep.subr.mxu0 0.0
  %1530 = vmatpush2.msra.mxu0 0.0
  %1531 = vmatprep.subr.mxu0 0.0
  %1532 = vmatpush2.msra.mxu0 0.0
  %1533 = vmatprep.subr.mxu0 0.0
  %1534 = vmatpush2.msra.mxu0 0.0
  %1535 = vmatprep.subr.mxu0 0.0
  %1536 = vmatpush2.msra.mxu0 0.0
  %1537 = vmatprep.subr.mxu0 0.0
  %1538 = vmatpush2.msra.mxu0 0.0
  %1539 = vmatprep.mubr.f32.mxu0 0.0
  %1540 = vmatmul.mubr.f32.gmra.mxu0 %v1473
  %v1541 = vpop.f32.mrf.mxu0
  %v1542 = vadd.f32 0.0, %v1541
  %v1543 = vpop.f32.mrf.mxu0
  %1544 = vdwg.mxu0
  %v1546 = vrot.slane %v1542, 6
  %v1548 = vadd.f32 %v1366, %v1546
  %v1549 = vxor.u32 %v1548, 2147483648
  %v1550 = vmul.f32 %v1549, 1.442695
  %v1551 = vpow.pop %v1550
  %v1552 = vadd.f32 %v1551, 1.0
  %v1553 = vrcp.pop %v1552
  %v1554 = vmul.f32 1.0, %v1553
  %v1555 = vtanh.pop %v1548
  %v1557 = vrot.slane %v1462, 2
  %v1559 = vmul.f32 %v1554, %v1557
  %1561 = vrot.lane.b32.xlu0 %v1555, 96
  %v1562 = vpop.permute.xlu0 %1561
  %v1564 = vmul.f32 %v1554, %v1562
  %1566 = vrot.lane.b32.xlu0 %v1564, 16
  %v1567 = vpop.permute.xlu0 %1566
  %v1569 = vadd.f32 %v1559, %v1567
  %v1570 = vtanh.pop %v1569
  %1572 = vrot.lane.b32.xlu0 %v1570, 32
  %v1573 = vpop.permute.xlu0 %1572
  %v1575 = vmul.f32 %v1554, %v1573
  %v1577 = vrot.slane %v1575, 2
  %1578 = vrot.lane.b32.xlu0 %v1577, 80
  %v1579 = vpop.permute.xlu0 %1578
  %v1580 = vsel %vm160, %v1579, 0
  %1582 = vmatprep.subr.mxu0 0.0
  %1583 = vmatpush1.msra.mxu0 0.0
  %1584 = vmatprep.subr.mxu0 0.0
  %1585 = vmatpush1.msra.mxu0 0.0
  %1586 = vmatprep.subr.mxu0 0.0
  %1587 = vmatpush1.msra.mxu0 0.0
  %1588 = vmatprep.subr.mxu0 0.0
  %1589 = vmatpush1.msra.mxu0 0.0
  %1590 = vmatprep.subr.mxu0 0.0
  %1591 = vmatpush1.msra.mxu0 0.0
  %1592 = vmatprep.subr.mxu0 0.0
  %1593 = vmatpush1.msra.mxu0 0.0
  %1594 = vmatprep.subr.mxu0 0.0
  %1595 = vmatpush1.msra.mxu0 0.0
  %1596 = vmatprep.subr.mxu0 0.0
  %1597 = vmatpush1.msra.mxu0 0.0
  %1598 = vmatprep.subr.mxu0 0.0
  %1599 = vmatpush1.msra.mxu0 0.0
  %1600 = vmatprep.subr.mxu0 0.0
  %1601 = vmatpush1.msra.mxu0 0.0
  %1602 = vmatprep.subr.mxu0 0.0
  %1603 = vmatpush1.msra.mxu0 0.0
  %1604 = vmatprep.subr.mxu0 0.0
  %1605 = vmatpush1.msra.mxu0 0.0
  %1606 = vmatprep.subr.mxu0 0.0
  %1607 = vmatpush1.msra.mxu0 0.0
  %1608 = vmatprep.subr.mxu0 0.0
  %1609 = vmatpush1.msra.mxu0 0.0
  %1610 = vmatprep.subr.mxu0 0.0
  %1611 = vmatpush1.msra.mxu0 %v1370
  %1612 = vmatprep.subr.mxu0 0.0
  %1613 = vmatpush1.msra.mxu0 %v1369
  %1614 = vmatprep.subr.mxu0 0.0
  %1615 = vmatpush2.msra.mxu0 0.0
  %1616 = vmatprep.subr.mxu0 0.0
  %1617 = vmatpush2.msra.mxu0 0.0
  %1618 = vmatprep.subr.mxu0 0.0
  %1619 = vmatpush2.msra.mxu0 0.0
  %1620 = vmatprep.subr.mxu0 0.0
  %1621 = vmatpush2.msra.mxu0 0.0
  %1622 = vmatprep.subr.mxu0 0.0
  %1623 = vmatpush2.msra.mxu0 0.0
  %1624 = vmatprep.subr.mxu0 0.0
  %1625 = vmatpush2.msra.mxu0 0.0
  %1626 = vmatprep.subr.mxu0 0.0
  %1627 = vmatpush2.msra.mxu0 0.0
  %1628 = vmatprep.subr.mxu0 0.0
  %1629 = vmatpush2.msra.mxu0 0.0
  %1630 = vmatprep.subr.mxu0 0.0
  %1631 = vmatpush2.msra.mxu0 0.0
  %1632 = vmatprep.subr.mxu0 0.0
  %1633 = vmatpush2.msra.mxu0 0.0
  %1634 = vmatprep.subr.mxu0 0.0
  %1635 = vmatpush2.msra.mxu0 0.0
  %1636 = vmatprep.subr.mxu0 0.0
  %1637 = vmatpush2.msra.mxu0 0.0
  %1638 = vmatprep.subr.mxu0 0.0
  %1639 = vmatpush2.msra.mxu0 0.0
  %1640 = vmatprep.subr.mxu0 0.0
  %1641 = vmatpush2.msra.mxu0 0.0
  %1642 = vmatprep.subr.mxu0 0.0
  %1643 = vmatpush2.msra.mxu0 0.0
  %1644 = vmatprep.subr.mxu0 0.0
  %1645 = vmatpush2.msra.mxu0 0.0
  %1646 = vmatprep.mubr.f32.mxu0 0.0
  %1647 = vmatmul.mubr.f32.gmra.mxu0 %v1580
  %v1648 = vpop.f32.mrf.mxu0
  %v1649 = vadd.f32 0.0, %v1648
  %v1650 = vpop.f32.mrf.mxu0
  %1651 = vdwg.mxu0
  %v1652 = vadd.f32 %v1366, %v1649
  %v1653 = vxor.u32 %v1652, 2147483648
  %v1654 = vmul.f32 %v1653, 1.442695
  %v1655 = vpow.pop %v1654
  %v1656 = vadd.f32 %v1655, 1.0
  %v1657 = vrcp.pop %v1656
  %v1658 = vmul.f32 1.0, %v1657
  %v1659 = vtanh.pop %v1652
  %v1661 = vrot.slane %v1569, 2
  %v1663 = vmul.f32 %v1658, %v1661
  %1665 = vrot.lane.b32.xlu0 %v1659, 96
  %v1666 = vpop.permute.xlu0 %1665
  %v1668 = vmul.f32 %v1658, %v1666
  %1670 = vrot.lane.b32.xlu0 %v1668, 16
  %v1671 = vpop.permute.xlu0 %1670
  %v1673 = vadd.f32 %v1663, %v1671
  %v1674 = vtanh.pop %v1673
  %1676 = vrot.lane.b32.xlu0 %v1674, 32
  %v1677 = vpop.permute.xlu0 %1676
  %v1679 = vmul.f32 %v1658, %v1677
  %v1680 = vrot.slane %v471, 1
  %1681 = vrot.lane.b32.xlu0 %v1680, 96
  %v1682 = vpop.permute.xlu0 %1681
  %v1684 = vrot.slane %v867, 4
  %1685 = vrot.lane.b32.xlu0 %v1684, 112
  %v1686 = vpop.permute.xlu0 %1685
  %v1688 = vrot.slane %v867, 5
  %1691 = vrot.lane.b32.xlu0 %v1287, 16
  %v1692 = vpop.permute.xlu0 %1691
  %v1694 = vrot.slane %v1287, 1
  %1695 = vrot.lane.b32.xlu0 %v1694, 32
  %v1696 = vpop.permute.xlu0 %1695
  %v1699 = vrot.slane %v1679, 4
  %1700 = vrot.lane.b32.xlu0 %v1699, 48
  %v1701 = vpop.permute.xlu0 %1700
  %v1703 = vrot.slane %v1679, 5
  %1704 = vrot.lane.b32.xlu0 %v1703, 64
  %v1705 = vpop.permute.xlu0 %1704
  %v1707 = vsel %vm160, %v883, %v1682
  %v1708 = vsel %vm904, %v1707, %v1686
  %vm1709 = vcmask 392192
  %v1710 = vsel %vm1709, %v1708, %v1688
  %v1711 = vsel %vm84, %v1710, %v1692
  %vm1712 = vcmask 654336
  %v1713 = vsel %vm1712, %v1711, %v1696
  %vm1714 = vcmask 785408
  %v1715 = vsel %vm1714, %v1713, %v1701
  %vm1716 = vcmask 916480
  %v1717 = vsel %vm1716, %v1715, %v1705
  %v1719 = vrot.slane %v1717, 4
  %v1721 = vrot.slane %v1717, 3
  %1722 = vrot.lane.b32.xlu0 %v1721, 64
  %v1723 = vpop.permute.xlu0 %1722
  %vm1725 = vcmask 1040384
  %v1726 = vsel %vm1725, %v1719, %v1723
  %v1727 = vld [vmem:[%s13] sm:$0xff]
  %v1728 = vld [vmem:[%s13 + $0x8] sm:$0xff]
  %v1729 = vld [vmem:[%s13 + $0x10] sm:$0xff]
  %v1730 = vld [vmem:[%s13 + $0x18] sm:$0xff]
  %v1731 = vld [vmem:[%s13 + $0x20] sm:$0xff]
  %v1732 = vld [vmem:[%s13 + $0x28] sm:$0xff]
  %v1733 = vld [vmem:[%s13 + $0x30] sm:$0xff]
  %v1734 = vld [vmem:[%s13 + $0x38] sm:$0xff]
  %v1736 = vsel %vm84, %v1726, 0
  %1738 = vmatprep.subr.mxu0 0.0
  %1739 = vmatpush1.msra.mxu0 0.0
  %1740 = vmatprep.subr.mxu0 0.0
  %1741 = vmatpush1.msra.mxu0 0.0
  %1742 = vmatprep.subr.mxu0 0.0
  %1743 = vmatpush1.msra.mxu0 0.0
  %1744 = vmatprep.subr.mxu0 0.0
  %1745 = vmatpush1.msra.mxu0 0.0
  %1746 = vmatprep.subr.mxu0 0.0
  %1747 = vmatpush1.msra.mxu0 0.0
  %1748 = vmatprep.subr.mxu0 0.0
  %1749 = vmatpush1.msra.mxu0 0.0
  %1750 = vmatprep.subr.mxu0 0.0
  %1751 = vmatpush1.msra.mxu0 0.0
  %1752 = vmatprep.subr.mxu0 0.0
  %1753 = vmatpush1.msra.mxu0 0.0
  %1754 = vmatprep.subr.mxu0 0.0
  %1755 = vmatpush1.msra.mxu0 %v1734
  %1756 = vmatprep.subr.mxu0 0.0
  %1757 = vmatpush1.msra.mxu0 %v1733
  %1758 = vmatprep.subr.mxu0 0.0
  %1759 = vmatpush1.msra.mxu0 %v1732
  %1760 = vmatprep.subr.mxu0 0.0
  %1761 = vmatpush1.msra.mxu0 %v1731
  %1762 = vmatprep.subr.mxu0 0.0
  %1763 = vmatpush1.msra.mxu0 %v1730
  %1764 = vmatprep.subr.mxu0 0.0
  %1765 = vmatpush1.msra.mxu0 %v1729
  %1766 = vmatprep.subr.mxu0 0.0
  %1767 = vmatpush1.msra.mxu0 %v1728
  %1768 = vmatprep.subr.mxu0 0.0
  %1769 = vmatpush1.msra.mxu0 %v1727
  %1770 = vmatprep.subr.mxu0 0.0
  %1771 = vmatpush2.msra.mxu0 0.0
  %1772 = vmatprep.subr.mxu0 0.0
  %1773 = vmatpush2.msra.mxu0 0.0
  %1774 = vmatprep.subr.mxu0 0.0
  %1775 = vmatpush2.msra.mxu0 0.0
  %1776 = vmatprep.subr.mxu0 0.0
  %1777 = vmatpush2.msra.mxu0 0.0
  %1778 = vmatprep.subr.mxu0 0.0
  %1779 = vmatpush2.msra.mxu0 0.0
  %1780 = vmatprep.subr.mxu0 0.0
  %1781 = vmatpush2.msra.mxu0 0.0
  %1782 = vmatprep.subr.mxu0 0.0
  %1783 = vmatpush2.msra.mxu0 0.0
  %1784 = vmatprep.subr.mxu0 0.0
  %1785 = vmatpush2.msra.mxu0 0.0
  %1786 = vmatprep.subr.mxu0 0.0
  %1787 = vmatpush2.msra.mxu0 0.0
  %1788 = vmatprep.subr.mxu0 0.0
  %1789 = vmatpush2.msra.mxu0 0.0
  %1790 = vmatprep.subr.mxu0 0.0
  %1791 = vmatpush2.msra.mxu0 0.0
  %1792 = vmatprep.subr.mxu0 0.0
  %1793 = vmatpush2.msra.mxu0 0.0
  %1794 = vmatprep.subr.mxu0 0.0
  %1795 = vmatpush2.msra.mxu0 0.0
  %1796 = vmatprep.subr.mxu0 0.0
  %1797 = vmatpush2.msra.mxu0 0.0
  %1798 = vmatprep.subr.mxu0 0.0
  %1799 = vmatpush2.msra.mxu0 0.0
  %1800 = vmatprep.subr.mxu0 0.0
  %1801 = vmatpush2.msra.mxu0 0.0
  %1802 = vmatprep.mubr.f32.mxu0 0.0
  %1803 = vmatmul.mubr.f32.gmra.mxu0 %v1736
  %v1804 = vpop.f32.mrf.mxu0
  %v1805 = vadd.f32 0.0, %v1804
  %v1806 = vpop.f32.mrf.mxu0
  %1807 = vdwg.mxu0
  %1809 = vrot.lane.b32.xlu0 %v1679, 96
  %v1810 = vpop.permute.xlu0 %1809
  %v1812 = vsel %vm160, %v1077, %v1810
  %1813 = vrot.lane.b32.xlu0 %v1180, 80
  %v1814 = vpop.permute.xlu0 %1813
  %1816 = vrot.lane.b32.xlu0 %v1575, 96
  %v1817 = vpop.permute.xlu0 %1816
  %v1819 = vsel %vm160, %v1814, %v1817
  %1820 = vrot.lane.b32.xlu0 %v1287, 80
  %v1821 = vpop.permute.xlu0 %1820
  %1823 = vrot.lane.b32.xlu0 %v1468, 96
  %v1824 = vpop.permute.xlu0 %1823
  %v1826 = vsel %vm160, %v1821, %v1824
  %v1828 = vrot.slane %v1819, 1
  %v1831 = vrot.slane %v1826, 2
  %v1833 = vsel %vm1725, %v1812, %v1828
  %v1834 = vsel %vm889, %v1833, %v1831
  %v1835 = vlaneseq
  %v1836 = vshrl.u32 %v1835, 7
  %v1837 = vsub.s32 0, %v1836
  %v1838 = vrot.slane %v1805, %v1837
  %v1839 = vmul.f32 %v1834, %v1838
  %vm1840 = vcmask 256000
  %v1841 = vsel %vm1840, %v1839, 0.0
  %1842 = vadd.xlane.f32.xlu0 %v1841
  %v1843 = vpop.xlane.xlu0 %1842
  %1845 = vrot.lane.b32.xlu0 %v1838, 96
  %v1846 = vpop.permute.xlu0 %1845
  %v1848 = vmul.f32 %v1834, %v1846
  %v1849 = vsel %vm1840, %v1848, 0.0
  %1850 = vadd.xlane.f32.xlu0 %v1849
  %v1851 = vpop.xlane.xlu0 %1850
  %vm1852 = vcmask 7168
  %v1853 = vsel %vm1852, %v1843, %v1851
  %vm1854 = vcmask 10240
  %v1855 = vsel %vm1854, %v1853, -inf
  %v1856 = vrot.slane %v1855, 4
  %v1857 = vmax.f32 %v1855, %v1856
  %v1858 = vrot.slane %v1857, 2
  %v1859 = vmax.f32 %v1857, %v1858
  %v1860 = vrot.slane %v1859, 1
  %v1861 = vmax.f32 %v1859, %v1860
  %v1862 = vsub.f32 %v1853, %v1861
  %v1863 = vmul.f32 %v1862, 1.442695
  %v1864 = vpow.pop %v1863
  %v1865 = vsel %vm1854, %v1864, 0.0
  %v1866 = vrot.slane %v1865, 4
  %v1867 = vadd.f32 %v1865, %v1866
  %v1868 = vrot.slane %v1867, 2
  %v1869 = vadd.f32 %v1867, %v1868
  %v1870 = vrot.slane %v1869, 1
  %v1871 = vadd.f32 %v1869, %v1870
  %v1872 = vrcp.pop %v1871
  %v1873 = vmul.f32 %v1864, %v1872
  %1875 = vset.pattern.permute.xlu0 0
  %1876 = vperm.xlu0 %1875, %v1873
  %v1877 = vpop.permute.xlu0 %1876
  %v1879 = vmul.f32 %v1834, %v1877
  %v1880 = vsel %vm1840, %v1879, 0.0
  %v1881 = vrot.slane %v1880, 4
  %v1882 = vadd.f32 %v1880, %v1881
  %v1883 = vrot.slane %v1882, 2
  %v1884 = vadd.f32 %v1882, %v1883
  %v1885 = vrot.slane %v1884, 1
  %v1886 = vadd.f32 %v1884, %v1885
  %1887 = vset.pattern.permute.xlu0 1
  %1888 = vperm.xlu0 %1887, %v1873
  %v1889 = vpop.permute.xlu0 %1888
  %v1891 = vmul.f32 %v1834, %v1889
  %v1892 = vsel %vm1840, %v1891, 0.0
  %v1893 = vrot.slane %v1892, 4
  %v1894 = vadd.f32 %v1892, %v1893
  %v1895 = vrot.slane %v1894, 2
  %v1896 = vadd.f32 %v1894, %v1895
  %v1897 = vrot.slane %v1896, 1
  %v1898 = vadd.f32 %v1896, %v1897
  %v1899 = vld [vmem:[%s14] sm:$0xff]
  %v1900 = vld [vmem:[%s14 + $0x8] sm:$0xff]
  %v1901 = vld [vmem:[%s14 + $0x10] sm:$0xff]
  %v1902 = vld [vmem:[%s14 + $0x18] sm:$0xff]
  %v1903 = vld [vmem:[%s15] sm:$0xff]
  %v1904 = vld [vmem:[%s15 + $0x8] sm:$0xff]
  %v1905 = vld [vmem:[%s15 + $0x10] sm:$0xff]
  %v1906 = vld [vmem:[%s15 + $0x18] sm:$0xff]
  %v1908 = vsel %vm904, %v1898, 0
  %1910 = vmatprep.subr.mxu0 0.0
  %1911 = vmatpush1.msra.mxu0 0.0
  %1912 = vmatprep.subr.mxu0 0.0
  %1913 = vmatpush1.msra.mxu0 0.0
  %1914 = vmatprep.subr.mxu0 0.0
  %1915 = vmatpush1.msra.mxu0 0.0
  %1916 = vmatprep.subr.mxu0 0.0
  %1917 = vmatpush1.msra.mxu0 0.0
  %1918 = vmatprep.subr.mxu0 0.0
  %1919 = vmatpush1.msra.mxu0 0.0
  %1920 = vmatprep.subr.mxu0 0.0
  %1921 = vmatpush1.msra.mxu0 0.0
  %1922 = vmatprep.subr.mxu0 0.0
  %1923 = vmatpush1.msra.mxu0 0.0
  %1924 = vmatprep.subr.mxu0 0.0
  %1925 = vmatpush1.msra.mxu0 0.0
  %1926 = vmatprep.subr.mxu0 0.0
  %1927 = vmatpush1.msra.mxu0 0.0
  %1928 = vmatprep.subr.mxu0 0.0
  %1929 = vmatpush1.msra.mxu0 0.0
  %1930 = vmatprep.subr.mxu0 0.0
  %1931 = vmatpush1.msra.mxu0 0.0
  %1932 = vmatprep.subr.mxu0 0.0
  %1933 = vmatpush1.msra.mxu0 0.0
  %1934 = vmatprep.subr.mxu0 0.0
  %1935 = vmatpush1.msra.mxu0 %v1906
  %1936 = vmatprep.subr.mxu0 0.0
  %1937 = vmatpush1.msra.mxu0 %v1905
  %1938 = vmatprep.subr.mxu0 0.0
  %1939 = vmatpush1.msra.mxu0 %v1904
  %1940 = vmatprep.subr.mxu0 0.0
  %1941 = vmatpush1.msra.mxu0 %v1903
  %1942 = vmatprep.subr.mxu0 0.0
  %1943 = vmatpush2.msra.mxu0 0.0
  %1944 = vmatprep.subr.mxu0 0.0
  %1945 = vmatpush2.msra.mxu0 0.0
  %1946 = vmatprep.subr.mxu0 0.0
  %1947 = vmatpush2.msra.mxu0 0.0
  %1948 = vmatprep.subr.mxu0 0.0
  %1949 = vmatpush2.msra.mxu0 0.0
  %1950 = vmatprep.subr.mxu0 0.0
  %1951 = vmatpush2.msra.mxu0 0.0
  %1952 = vmatprep.subr.mxu0 0.0
  %1953 = vmatpush2.msra.mxu0 0.0
  %1954 = vmatprep.subr.mxu0 0.0
  %1955 = vmatpush2.msra.mxu0 0.0
  %1956 = vmatprep.subr.mxu0 0.0
  %1957 = vmatpush2.msra.mxu0 0.0
  %1958 = vmatprep.subr.mxu0 0.0
  %1959 = vmatpush2.msra.mxu0 0.0
  %1960 = vmatprep.subr.mxu0 0.0
  %1961 = vmatpush2.msra.mxu0 0.0
  %1962 = vmatprep.subr.mxu0 0.0
  %1963 = vmatpush2.msra.mxu0 0.0
  %1964 = vmatprep.subr.mxu0 0.0
  %1965 = vmatpush2.msra.mxu0 0.0
  %1966 = vmatprep.subr.mxu0 0.0
  %1967 = vmatpush2.msra.mxu0 0.0
  %1968 = vmatprep.subr.mxu0 0.0
  %1969 = vmatpush2.msra.mxu0 0.0
  %1970 = vmatprep.subr.mxu0 0.0
  %1971 = vmatpush2.msra.mxu0 0.0
  %1972 = vmatprep.subr.mxu0 0.0
  %1973 = vmatpush2.msra.mxu0 0.0
  %1974 = vmatprep.mubr.f32.mxu0 0.0
  %1975 = vmatmul.mubr.f32.gmra.mxu0 %v1908
  %v1976 = vpop.f32.mrf.mxu0
  %v1977 = vadd.f32 0.0, %v1976
  %v1978 = vpop.f32.mrf.mxu0
  %1979 = vdwg.mxu0
  %v1981 = vsel %vm904, %v1886, 0
  %1983 = vmatprep.subr.mxu0 0.0
  %1984 = vmatpush1.msra.mxu0 0.0
  %1985 = vmatprep.subr.mxu0 0.0
  %1986 = vmatpush1.msra.mxu0 0.0
  %1987 = vmatprep.subr.mxu0 0.0
  %1988 = vmatpush1.msra.mxu0 0.0
  %1989 = vmatprep.subr.mxu0 0.0
  %1990 = vmatpush1.msra.mxu0 0.0
  %1991 = vmatprep.subr.mxu0 0.0
  %1992 = vmatpush1.msra.mxu0 0.0
  %1993 = vmatprep.subr.mxu0 0.0
  %1994 = vmatpush1.msra.mxu0 0.0
  %1995 = vmatprep.subr.mxu0 0.0
  %1996 = vmatpush1.msra.mxu0 0.0
  %1997 = vmatprep.subr.mxu0 0.0
  %1998 = vmatpush1.msra.mxu0 0.0
  %1999 = vmatprep.subr.mxu0 0.0
  %2000 = vmatpush1.msra.mxu0 0.0
  %2001 = vmatprep.subr.mxu0 0.0
  %2002 = vmatpush1.msra.mxu0 0.0
  %2003 = vmatprep.subr.mxu0 0.0
  %2004 = vmatpush1.msra.mxu0 0.0
  %2005 = vmatprep.subr.mxu0 0.0
  %2006 = vmatpush1.msra.mxu0 0.0
  %2007 = vmatprep.subr.mxu0 0.0
  %2008 = vmatpush1.msra.mxu0 %v1902
  %2009 = vmatprep.subr.mxu0 0.0
  %2010 = vmatpush1.msra.mxu0 %v1901
  %2011 = vmatprep.subr.mxu0 0.0
  %2012 = vmatpush1.msra.mxu0 %v1900
  %2013 = vmatprep.subr.mxu0 0.0
  %2014 = vmatpush1.msra.mxu0 %v1899
  %2015 = vmatprep.subr.mxu0 0.0
  %2016 = vmatpush2.msra.mxu0 0.0
  %2017 = vmatprep.subr.mxu0 0.0
  %2018 = vmatpush2.msra.mxu0 0.0
  %2019 = vmatprep.subr.mxu0 0.0
  %2020 = vmatpush2.msra.mxu0 0.0
  %2021 = vmatprep.subr.mxu0 0.0
  %2022 = vmatpush2.msra.mxu0 0.0
  %2023 = vmatprep.subr.mxu0 0.0
  %2024 = vmatpush2.msra.mxu0 0.0
  %2025 = vmatprep.subr.mxu0 0.0
  %2026 = vmatpush2.msra.mxu0 0.0
  %2027 = vmatprep.subr.mxu0 0.0
  %2028 = vmatpush2.msra.mxu0 0.0
  %2029 = vmatprep.subr.mxu0 0.0
  %2030 = vmatpush2.msra.mxu0 0.0
  %2031 = vmatprep.subr.mxu0 0.0
  %2032 = vmatpush2.msra.mxu0 0.0
  %2033 = vmatprep.subr.mxu0 0.0
  %2034 = vmatpush2.msra.mxu0 0.0
  %2035 = vmatprep.subr.mxu0 0.0
  %2036 = vmatpush2.msra.mxu0 0.0
  %2037 = vmatprep.subr.mxu0 0.0
  %2038 = vmatpush2.msra.mxu0 0.0
  %2039 = vmatprep.subr.mxu0 0.0
  %2040 = vmatpush2.msra.mxu0 0.0
  %2041 = vmatprep.subr.mxu0 0.0
  %2042 = vmatpush2.msra.mxu0 0.0
  %2043 = vmatprep.subr.mxu0 0.0
  %2044 = vmatpush2.msra.mxu0 0.0
  %2045 = vmatprep.subr.mxu0 0.0
  %2046 = vmatpush2.msra.mxu0 0.0
  %2047 = vmatprep.mubr.f32.mxu0 0.0
  %2048 = vmatmul.mubr.f32.gmra.mxu0 %v1981
  %v2049 = vpop.f32.mrf.mxu0
  %v2050 = vadd.f32 %v1977, %v2049
  %v2051 = vpop.f32.mrf.mxu0
  %2052 = vdwg.mxu0
  %v2053 = vld [vmem:[%s16] sm:$0x1]
  %v2054 = vadd.f32 %v2050, %v2053
  %v2055 = vld [vmem:[#allocation2] sm:$0x1]
  %2057 = vset.pattern.permute.xlu0 0
  %2058 = vperm.xlu0 %2057, %v2055
  %v2059 = vpop.permute.xlu0 %2058
  %v2061 = vlaneseq
  %v2062 = vshrl.u32 %v2061, 7
  %v2063 = vsub.s32 0, %v2062
  %v2064 = vrot.slane %v2059, %v2063
  %v2065 = vmul.f32 %v2054, %v2064
  %v2066 = vld [vmem:[#allocation3] sm:$0x1]
  %2068 = vset.pattern.permute.xlu0 0
  %2069 = vperm.xlu0 %2068, %v2066
  %v2070 = vpop.permute.xlu0 %2069
  %v2072 = vlaneseq
  %v2073 = vshrl.u32 %v2072, 7
  %v2074 = vsub.s32 0, %v2073
  %v2075 = vrot.slane %v2070, %v2074
  %v2076 = vadd.f32 %v2065, %v2075
  %v2078 = vrot.slane %v1812, 1
  %v2080 = vrot.slane %v1819, 2
  %v2082 = vrot.slane %v1826, 3
  %v2084 = vsel %vm1725, %v2078, %v2080
  %v2085 = vsel %vm889, %v2084, %v2082
  %v2086 = vlaneseq
  %v2087 = vshrl.u32 %v2086, 7
  %v2088 = vsub.s32 1, %v2087
  %v2089 = vrot.slane %v1805, %v2088
  %v2090 = vmul.f32 %v2085, %v2089
  %v2091 = vsel %vm1840, %v2090, 0.0
  %2092 = vadd.xlane.f32.xlu0 %v2091
  %v2093 = vpop.xlane.xlu0 %2092
  %2095 = vrot.lane.b32.xlu0 %v2089, 96
  %v2096 = vpop.permute.xlu0 %2095
  %v2098 = vmul.f32 %v2085, %v2096
  %v2099 = vsel %vm1840, %v2098, 0.0
  %2100 = vadd.xlane.f32.xlu0 %v2099
  %v2101 = vpop.xlane.xlu0 %2100
  %v2102 = vsel %vm1852, %v2093, %v2101
  %v2103 = vsel %vm1854, %v2102, -inf
  %v2104 = vrot.slane %v2103, 4
  %v2105 = vmax.f32 %v2103, %v2104
  %v2106 = vrot.slane %v2105, 2
  %v2107 = vmax.f32 %v2105, %v2106
  %v2108 = vrot.slane %v2107, 1
  %v2109 = vmax.f32 %v2107, %v2108
  %v2110 = vsub.f32 %v2102, %v2109
  %v2111 = vmul.f32 %v2110, 1.442695
  %v2112 = vpow.pop %v2111
  %v2113 = vsel %vm1854, %v2112, 0.0
  %v2114 = vrot.slane %v2113, 4
  %v2115 = vadd.f32 %v2113, %v2114
  %v2116 = vrot.slane %v2115, 2
  %v2117 = vadd.f32 %v2115, %v2116
  %v2118 = vrot.slane %v2117, 1
  %v2119 = vadd.f32 %v2117, %v2118
  %v2120 = vrcp.pop %v2119
  %v2121 = vmul.f32 %v2112, %v2120
  %2123 = vset.pattern.permute.xlu0 0
  %2124 = vperm.xlu0 %2123, %v2121
  %v2125 = vpop.permute.xlu0 %2124
  %v2127 = vmul.f32 %v2085, %v2125
  %v2128 = vsel %vm1840, %v2127, 0.0
  %v2129 = vrot.slane %v2128, 4
  %v2130 = vadd.f32 %v2128, %v2129
  %v2131 = vrot.slane %v2130, 2
  %v2132 = vadd.f32 %v2130, %v2131
  %v2133 = vrot.slane %v2132, 1
  %v2134 = vadd.f32 %v2132, %v2133
  %2135 = vset.pattern.permute.xlu0 1
  %2136 = vperm.xlu0 %2135, %v2121
  %v2137 = vpop.permute.xlu0 %2136
  %v2139 = vmul.f32 %v2085, %v2137
  %v2140 = vsel %vm1840, %v2139, 0.0
  %v2141 = vrot.slane %v2140, 4
  %v2142 = vadd.f32 %v2140, %v2141
  %v2143 = vrot.slane %v2142, 2
  %v2144 = vadd.f32 %v2142, %v2143
  %v2145 = vrot.slane %v2144, 1
  %v2146 = vadd.f32 %v2144, %v2145
  %v2148 = vsel %vm904, %v2146, 0
  %2150 = vmatprep.subr.mxu0 0.0
  %2151 = vmatpush1.msra.mxu0 0.0
  %2152 = vmatprep.subr.mxu0 0.0
  %2153 = vmatpush1.msra.mxu0 0.0
  %2154 = vmatprep.subr.mxu0 0.0
  %2155 = vmatpush1.msra.mxu0 0.0
  %2156 = vmatprep.subr.mxu0 0.0
  %2157 = vmatpush1.msra.mxu0 0.0
  %2158 = vmatprep.subr.mxu0 0.0
  %2159 = vmatpush1.msra.mxu0 0.0
  %2160 = vmatprep.subr.mxu0 0.0
  %2161 = vmatpush1.msra.mxu0 0.0
  %2162 = vmatprep.subr.mxu0 0.0
  %2163 = vmatpush1.msra.mxu0 0.0
  %2164 = vmatprep.subr.mxu0 0.0
  %2165 = vmatpush1.msra.mxu0 0.0
  %2166 = vmatprep.subr.mxu0 0.0
  %2167 = vmatpush1.msra.mxu0 0.0
  %2168 = vmatprep.subr.mxu0 0.0
  %2169 = vmatpush1.msra.mxu0 0.0
  %2170 = vmatprep.subr.mxu0 0.0
  %2171 = vmatpush1.msra.mxu0 0.0
  %2172 = vmatprep.subr.mxu0 0.0
  %2173 = vmatpush1.msra.mxu0 0.0
  %2174 = vmatprep.subr.mxu0 0.0
  %2175 = vmatpush1.msra.mxu0 %v1906
  %2176 = vmatprep.subr.mxu0 0.0
  %2177 = vmatpush1.msra.mxu0 %v1905
  %2178 = vmatprep.subr.mxu0 0.0
  %2179 = vmatpush1.msra.mxu0 %v1904
  %2180 = vmatprep.subr.mxu0 0.0
  %2181 = vmatpush1.msra.mxu0 %v1903
  %2182 = vmatprep.subr.mxu0 0.0
  %2183 = vmatpush2.msra.mxu0 0.0
  %2184 = vmatprep.subr.mxu0 0.0
  %2185 = vmatpush2.msra.mxu0 0.0
  %2186 = vmatprep.subr.mxu0 0.0
  %2187 = vmatpush2.msra.mxu0 0.0
  %2188 = vmatprep.subr.mxu0 0.0
  %2189 = vmatpush2.msra.mxu0 0.0
  %2190 = vmatprep.subr.mxu0 0.0
  %2191 = vmatpush2.msra.mxu0 0.0
  %2192 = vmatprep.subr.mxu0 0.0
  %2193 = vmatpush2.msra.mxu0 0.0
  %2194 = vmatprep.subr.mxu0 0.0
  %2195 = vmatpush2.msra.mxu0 0.0
  %2196 = vmatprep.subr.mxu0 0.0
  %2197 = vmatpush2.msra.mxu0 0.0
  %2198 = vmatprep.subr.mxu0 0.0
  %2199 = vmatpush2.msra.mxu0 0.0
  %2200 = vmatprep.subr.mxu0 0.0
  %2201 = vmatpush2.msra.mxu0 0.0
  %2202 = vmatprep.subr.mxu0 0.0
  %2203 = vmatpush2.msra.mxu0 0.0
  %2204 = vmatprep.subr.mxu0 0.0
  %2205 = vmatpush2.msra.mxu0 0.0
  %2206 = vmatprep.subr.mxu0 0.0
  %2207 = vmatpush2.msra.mxu0 0.0
  %2208 = vmatprep.subr.mxu0 0.0
  %2209 = vmatpush2.msra.mxu0 0.0
  %2210 = vmatprep.subr.mxu0 0.0
  %2211 = vmatpush2.msra.mxu0 0.0
  %2212 = vmatprep.subr.mxu0 0.0
  %2213 = vmatpush2.msra.mxu0 0.0
  %2214 = vmatprep.mubr.f32.mxu0 0.0
  %2215 = vmatmul.mubr.f32.gmra.mxu0 %v2148
  %v2216 = vpop.f32.mrf.mxu0
  %v2217 = vadd.f32 0.0, %v2216
  %v2218 = vpop.f32.mrf.mxu0
  %2219 = vdwg.mxu0
  %v2221 = vsel %vm904, %v2134, 0
  %2223 = vmatprep.subr.mxu0 0.0
  %2224 = vmatpush1.msra.mxu0 0.0
  %2225 = vmatprep.subr.mxu0 0.0
  %2226 = vmatpush1.msra.mxu0 0.0
  %2227 = vmatprep.subr.mxu0 0.0
  %2228 = vmatpush1.msra.mxu0 0.0
  %2229 = vmatprep.subr.mxu0 0.0
  %2230 = vmatpush1.msra.mxu0 0.0
  %2231 = vmatprep.subr.mxu0 0.0
  %2232 = vmatpush1.msra.mxu0 0.0
  %2233 = vmatprep.subr.mxu0 0.0
  %2234 = vmatpush1.msra.mxu0 0.0
  %2235 = vmatprep.subr.mxu0 0.0
  %2236 = vmatpush1.msra.mxu0 0.0
  %2237 = vmatprep.subr.mxu0 0.0
  %2238 = vmatpush1.msra.mxu0 0.0
  %2239 = vmatprep.subr.mxu0 0.0
  %2240 = vmatpush1.msra.mxu0 0.0
  %2241 = vmatprep.subr.mxu0 0.0
  %2242 = vmatpush1.msra.mxu0 0.0
  %2243 = vmatprep.subr.mxu0 0.0
  %2244 = vmatpush1.msra.mxu0 0.0
  %2245 = vmatprep.subr.mxu0 0.0
  %2246 = vmatpush1.msra.mxu0 0.0
  %2247 = vmatprep.subr.mxu0 0.0
  %2248 = vmatpush1.msra.mxu0 %v1902
  %2249 = vmatprep.subr.mxu0 0.0
  %2250 = vmatpush1.msra.mxu0 %v1901
  %2251 = vmatprep.subr.mxu0 0.0
  %2252 = vmatpush1.msra.mxu0 %v1900
  %2253 = vmatprep.subr.mxu0 0.0
  %2254 = vmatpush1.msra.mxu0 %v1899
  %2255 = vmatprep.subr.mxu0 0.0
  %2256 = vmatpush2.msra.mxu0 0.0
  %2257 = vmatprep.subr.mxu0 0.0
  %2258 = vmatpush2.msra.mxu0 0.0
  %2259 = vmatprep.subr.mxu0 0.0
  %2260 = vmatpush2.msra.mxu0 0.0
  %2261 = vmatprep.subr.mxu0 0.0
  %2262 = vmatpush2.msra.mxu0 0.0
  %2263 = vmatprep.subr.mxu0 0.0
  %2264 = vmatpush2.msra.mxu0 0.0
  %2265 = vmatprep.subr.mxu0 0.0
  %2266 = vmatpush2.msra.mxu0 0.0
  %2267 = vmatprep.subr.mxu0 0.0
  %2268 = vmatpush2.msra.mxu0 0.0
  %2269 = vmatprep.subr.mxu0 0.0
  %2270 = vmatpush2.msra.mxu0 0.0
  %2271 = vmatprep.subr.mxu0 0.0
  %2272 = vmatpush2.msra.mxu0 0.0
  %2273 = vmatprep.subr.mxu0 0.0
  %2274 = vmatpush2.msra.mxu0 0.0
  %2275 = vmatprep.subr.mxu0 0.0
  %2276 = vmatpush2.msra.mxu0 0.0
  %2277 = vmatprep.subr.mxu0 0.0
  %2278 = vmatpush2.msra.mxu0 0.0
  %2279 = vmatprep.subr.mxu0 0.0
  %2280 = vmatpush2.msra.mxu0 0.0
  %2281 = vmatprep.subr.mxu0 0.0
  %2282 = vmatpush2.msra.mxu0 0.0
  %2283 = vmatprep.subr.mxu0 0.0
  %2284 = vmatpush2.msra.mxu0 0.0
  %2285 = vmatprep.subr.mxu0 0.0
  %2286 = vmatpush2.msra.mxu0 0.0
  %2287 = vmatprep.mubr.f32.mxu0 0.0
  %2288 = vmatmul.mubr.f32.gmra.mxu0 %v2221
  %v2289 = vpop.f32.mrf.mxu0
  %v2290 = vadd.f32 %v2217, %v2289
  %v2291 = vpop.f32.mrf.mxu0
  %2292 = vdwg.mxu0
  %v2293 = vadd.f32 %v2290, %v2053
  %v2294 = vmul.f32 %v2293, %v2064
  %v2295 = vadd.f32 %v2294, %v2075
  %v2297 = vrot.slane %v2293, 7
  %v2299 = vsel %vm1725, %v2054, %v2297
  %vm2300 = vcmask 254976
  %2301 = vst.msk [vmem:[%s19] sm:$0x3] %vm2300, %v2299
  %v2303 = vrot.slane %v2295, 7
  %v2305 = vsel %vm1725, %v2076, %v2303
  %2306 = vst.msk [vmem:[%s20] sm:$0x3] %vm2300, %v2305
  // Predicated region
  $region78: #{metar_forward.4} parent=0 // pred_check
    _
  $region79: #{metar_forward.4} parent=0 // pred_check_branch
    %2308 = sbr.rel (0) target = $region81
  $region80: #{metar_forward.4} parent=0 // pred_region
    _
  $region81: #{metar_forward.4} parent=0 // pred_fallthru
    _
  // Predicated region
  $region82: #{metar_forward.4} parent=0 // pred_check
    _
  $region83: #{metar_forward.4} parent=0 // pred_check_branch
    %2310 = sbr.rel (0) target = $region85
  $region84: #{metar_forward.4} parent=0 // pred_region
    _
  $region85: #{metar_forward.4} parent=0 // pred_fallthru
    _
  // Predicated region
  $region86: #{metar_forward.4} parent=0 // pred_check
    _
  $region87: #{metar_forward.4} parent=0 // pred_check_branch
    %2312 = sbr.rel (0) target = $region89
  $region88: #{metar_forward.4} parent=0 // pred_region
    _
  $region89: #{metar_forward.4} parent=0 // pred_fallthru
    _
  // Predicated region
  $region90: #{metar_forward.4} parent=0 // pred_check
    _
  $region91: #{metar_forward.4} parent=0 // pred_check_branch
    %2314 = sbr.rel (0) target = $region93
  $region92: #{metar_forward.4} parent=0 // pred_region
    _
  $region93: #{metar_forward.4} parent=0 // pred_fallthru
    _

</llo_original>
